<compile_context>
chip_gen: v5e
topology: v5e:2x2
jax: 0.10.0
libtpu: 0.0.40
codegen_flags: <defaults>
</compile_context>

<pallas_src>
import jax
import jax.numpy as jnp
from jax.experimental import pallas as pl
from jax.experimental.pallas import tpu as pltpu

SEQ = 8                 # number of code lines
LINE_DIM = 19
FILE_DIM = 14
FUSION_DIM = 128
POS_DIM = 64
EMBED_DIM = FUSION_DIM + POS_DIM   # 192 (attention embed dim)
NUM_HEADS = 8
HEAD_DIM = EMBED_DIM // NUM_HEADS  # 24
CODEBERT_DIM = 768
HIDDEN_DIM = 256
LN_EPS = 1e-5

# ----------------------------------------------------------------------------
# Packed bias layout: one [1, total] f32 array, every field starts on a
# 128-lane boundary so in-kernel static slices are vreg-aligned (free).
# ----------------------------------------------------------------------------
_BIAS_FIELDS = [
    ('b_fuse', FUSION_DIM),        # 128
    ('ln1_g', FUSION_DIM),         # 128
    ('ln1_b', FUSION_DIM),         # 128
    ('b_fin', HIDDEN_DIM),         # 256
    ('ln2_g', HIDDEN_DIM),         # 256
    ('ln2_b', HIDDEN_DIM),         # 256
    ('b_c1', HIDDEN_DIM // 2),     # 128
    ('b_c2', HIDDEN_DIM // 4),     # 64
    ('b_c3', 1),                   # 1
]


def _bias_layout():
    offsets, cur = {}, 0
    for name, n in _BIAS_FIELDS:
        offsets[name] = (cur, n)
        cur += ((n + 127) // 128) * 128
    return offsets, cur


_BIAS_OFF, _BIAS_TOTAL = _bias_layout()


def _pack_bias(values):
    parts = []
    for name, n in _BIAS_FIELDS:
        v = values[name].reshape(1, n).astype(jnp.float32)
        pad = (-n) % 128
        if pad:
            v = jnp.pad(v, ((0, 0), (0, pad)))
        parts.append(v)
    return jnp.concatenate(parts, axis=1)          # [1, _BIAS_TOTAL]


# ----------------------------------------------------------------------------
# Pallas kernel: the full forward hot path in one VMEM-resident invocation.
# ----------------------------------------------------------------------------
def _detector_kernel(
    lff_ref,       # [S, 33]   cat([line_features, file_features])
    pe_ref,        # [S, 64]   gathered position embeddings
    cb_ref,        # [S, 768]  synthetic CodeBERT CLS embeddings
    w_fuse_ref,    # [33, 128] folded line/file -> fusion weights
    a_ref,         # [H, 192, 192]  A_h = Wq_h(scaled) @ Wk_h^T
    r_ref,         # [H, 1, 192]    R_h = Wk_h @ bq_h(scaled)
    bmat_ref,      # [H, 192, 256]  B_h = Wv_h @ (W_o W_op W_ff_a)[24h:24h+24]
    w_cbfin_ref,   # [768, 256]     W_cb @ W_ff_b
    w_c1_ref,      # [256, 128]
    w_c2_ref,      # [128, 64]
    w_c3_ref,      # [64, 1]
    bias_ref,      # [1, _BIAS_TOTAL]
    out_ref,       # [S, 1]
):
    f32 = jnp.float32

    def mm(a, b):
        return jnp.dot(a, b, preferred_element_type=f32)

    def bias(name):
        o, n = _BIAS_OFF[name]
        return bias_ref[:, o:o + n]

    def layernorm(x, g, b):
        mu = jnp.mean(x, axis=-1, keepdims=True)
        xc = x - mu
        var = jnp.mean(xc * xc, axis=-1, keepdims=True)
        return xc * jax.lax.rsqrt(var + LN_EPS) * g + b

    # ---- FeatureFusion (line/file projections folded into one matmul) ------
    fused = mm(lff_ref[...], w_fuse_ref[...]) + bias('b_fuse')        # [S,128]
    fused = jnp.maximum(fused, 0.0)                                   # ReLU
    fused = layernorm(fused, bias('ln1_g'), bias('ln1_b'))

    # enhanced = cat([fused, pos_emb])  (aligned lane concat at offset 128)
    enh = jnp.concatenate([fused, pe_ref[...]], axis=-1)              # [S,192]

    # ---- post-attention path fully folded -----------------------------------
    # fin_pre = attn_cat @ (W_o W_op W_ff_a) + cb @ (W_cb W_ff_b) + b_folded
    fin = mm(cb_ref[...], w_cbfin_ref[...]) + bias('b_fin')           # [S,256]

    # ---- InterLineRelationship: MHA via precomposed bilinear forms ----------
    for h in range(NUM_HEADS):
        # scores_h = (enh Wq_h + bq_h)(enh Wk_h + bk_h)^T with softmax-shift-
        # invariant terms dropped; scale already folded into A_h / R_h.
        g = mm(enh, a_ref[h]) + r_ref[h]                              # [S,192]
        scores = jax.lax.dot_general(
            g, enh, (((1,), (1,)), ((), ())),
            preferred_element_type=f32)                               # [S,S]
        scores = scores - jnp.max(scores, axis=-1, keepdims=True)
        p = jnp.exp(scores)
        p = p * pl.reciprocal(jnp.sum(p, axis=-1, keepdims=True), approx=True)
        t = mm(p, enh)                                                # [S,192]
        fin = fin + mm(t, bmat_ref[h])                                # [S,256]

    # ---- final_fusion: ReLU -> LayerNorm (dropout = identity) ---------------
    fin = jnp.maximum(fin, 0.0)
    fin = layernorm(fin, bias('ln2_g'), bias('ln2_b'))                # [S,256]

    # ---- line_classifier -----------------------------------------------------
    h1 = jnp.maximum(mm(fin, w_c1_ref[...]) + bias('b_c1'), 0.0)      # [S,128]
    h2 = jnp.maximum(mm(h1, w_c2_ref[...]) + bias('b_c2'), 0.0)       # [S,64]
    logits = mm(h2, w_c3_ref[...]) + bias('b_c3')                     # [S,1]
    out_ref[...] = jax.nn.sigmoid(logits)


# ----------------------------------------------------------------------------
# Parameter construction (deterministic, synthetic — no checkpoint load).
# ----------------------------------------------------------------------------
def init_params(key):
    keys = jax.random.split(key, 32)
    ki = iter(keys)

    def linear(in_d, out_d):
        k = next(ki)
        kw, kb = jax.random.split(k)
        bound = float(in_d) ** -0.5
        w = jax.random.uniform(kw, (in_d, out_d), jnp.float32, -bound, bound)
        b = jax.random.uniform(kb, (out_d,), jnp.float32, -bound, bound)
        return w, b

    p = {}
    p['w_line'], p['b_line'] = linear(LINE_DIM, FUSION_DIM // 2)
    p['w_file'], p['b_file'] = linear(FILE_DIM, FUSION_DIM // 2)
    p['w_fuse'], p['b_fuse'] = linear(FUSION_DIM, FUSION_DIM)
    p['ln1_g'] = jnp.ones((FUSION_DIM,), jnp.float32)
    p['ln1_b'] = jnp.zeros((FUSION_DIM,), jnp.float32)
    p['pos_table'] = 0.02 * jax.random.normal(next(ki), (1000, POS_DIM), jnp.float32)
    p['w_q'], p['b_q'] = linear(EMBED_DIM, EMBED_DIM)
    p['w_k'], p['b_k'] = linear(EMBED_DIM, EMBED_DIM)
    p['w_v'], p['b_v'] = linear(EMBED_DIM, EMBED_DIM)
    p['w_o'], p['b_o'] = linear(EMBED_DIM, EMBED_DIM)
    p['w_op'], p['b_op'] = linear(EMBED_DIM, FUSION_DIM)
    p['w_cb'], p['b_cb'] = linear(CODEBERT_DIM, FUSION_DIM)
    p['w_ff'], p['b_ff'] = linear(2 * FUSION_DIM, HIDDEN_DIM)
    p['ln2_g'] = jnp.ones((HIDDEN_DIM,), jnp.float32)
    p['ln2_b'] = jnp.zeros((HIDDEN_DIM,), jnp.float32)
    p['w_c1'], p['b_c1'] = linear(HIDDEN_DIM, HIDDEN_DIM // 2)
    p['w_c2'], p['b_c2'] = linear(HIDDEN_DIM // 2, HIDDEN_DIM // 4)
    p['w_c3'], p['b_c3'] = linear(HIDDEN_DIM // 4, 1)
    return p


# ----------------------------------------------------------------------------
# One-time weight folding (outside the per-call path).  All folds are exact:
# there is no nonlinearity between the composed linear maps.
# ----------------------------------------------------------------------------
def fold_params(p):
    P = jax.lax.Precision.HIGHEST

    def mmh(a, b):
        return jnp.dot(a, b, precision=P)

    scale = float(HEAD_DIM) ** -0.5

    # FeatureFusion: fold line/file projections into the fusion linear.
    w_fuse_a = p['w_fuse'][:FUSION_DIM // 2]                  # [64,128]
    w_fuse_b = p['w_fuse'][FUSION_DIM // 2:]                  # [64,128]
    w_fuse_lff = jnp.concatenate(
        [mmh(p['w_line'], w_fuse_a), mmh(p['w_file'], w_fuse_b)], axis=0)  # [33,128]
    b_fuse_f = mmh(p['b_line'], w_fuse_a) + mmh(p['b_file'], w_fuse_b) + p['b_fuse']

    # Attention: per-head precomposed bilinear forms (scale folded into Wq/bq).
    wq_sc = p['w_q'] * scale
    bq_sc = p['b_q'] * scale
    wq_h = wq_sc.reshape(EMBED_DIM, NUM_HEADS, HEAD_DIM).transpose(1, 0, 2)   # [H,192,24]
    wk_h = p['w_k'].reshape(EMBED_DIM, NUM_HEADS, HEAD_DIM).transpose(1, 0, 2)
    wv_h = p['w_v'].reshape(EMBED_DIM, NUM_HEADS, HEAD_DIM).transpose(1, 0, 2)
    bq_h = bq_sc.reshape(NUM_HEADS, HEAD_DIM)                                 # [H,24]

    a_stack = jnp.einsum('hij,hkj->hik', wq_h, wk_h, precision=P)             # [H,192,192]
    r_stack = jnp.einsum('hij,hj->hi', wk_h, bq_h, precision=P)[:, None, :]   # [H,1,192]

    # Fold out_proj -> output_projection -> final_fusion (ctx half) and
    # codebert_projection -> final_fusion (cb half).
    w_ff_a = p['w_ff'][:FUSION_DIM]                           # [128,256]
    w_ff_b = p['w_ff'][FUSION_DIM:]                           # [128,256]
    w_fin_attn = mmh(mmh(p['w_o'], p['w_op']), w_ff_a)        # [192,256]
    w_fin_h = w_fin_attn.reshape(NUM_HEADS, HEAD_DIM, HIDDEN_DIM)             # [H,24,256]
    b_stack = jnp.einsum('hij,hjk->hik', wv_h, w_fin_h, precision=P)          # [H,192,256]
    w_cb_fin = mmh(p['w_cb'], w_ff_b)                         # [768,256]
    b_fin = (mmh(mmh(p['b_o'], p['w_op']) + p['b_op'], w_ff_a)
             + mmh(p['b_v'], w_fin_attn)          # V bias passes softmax (rows sum to 1)
             + mmh(p['b_cb'], w_ff_b)
             + p['b_ff'])                                     # [256]

    bias_pack = _pack_bias({
        'b_fuse': b_fuse_f, 'ln1_g': p['ln1_g'], 'ln1_b': p['ln1_b'],
        'b_fin': b_fin, 'ln2_g': p['ln2_g'], 'ln2_b': p['ln2_b'],
        'b_c1': p['b_c1'], 'b_c2': p['b_c2'], 'b_c3': p['b_c3'],
    })

    return {
        'pos_table': p['pos_table'],
        'w_fuse_lff': w_fuse_lff.astype(jnp.float32),
        'a_stack': a_stack.astype(jnp.float32),
        'r_stack': r_stack.astype(jnp.float32),
        'b_stack': b_stack.astype(jnp.float32),
        'w_cb_fin': w_cb_fin.astype(jnp.float32),
        'w_c1': p['w_c1'].astype(jnp.float32),
        'w_c2': p['w_c2'].astype(jnp.float32),
        'w_c3': p['w_c3'].astype(jnp.float32),
        'bias_pack': bias_pack,
    }


# ----------------------------------------------------------------------------
# Wrapper: per-call glue (embedding gather, input concat) in plain JAX,
# all compute in the Pallas kernel.  12 VMEM inputs total.
# ----------------------------------------------------------------------------
def enhanced_ai_detector_forward(folded, line_features, file_features,
                                 line_positions, codebert_features):
    f32 = jnp.float32
    s_len = line_features.shape[0]

    pe = folded['pos_table'][line_positions].astype(f32)               # [S,64]
    lff = jnp.concatenate(
        [line_features.astype(f32), file_features.astype(f32)], axis=-1)  # [S,33]

    args = [
        lff, pe, codebert_features.astype(f32),
        folded['w_fuse_lff'],
        folded['a_stack'], folded['r_stack'], folded['b_stack'],
        folded['w_cb_fin'],
        folded['w_c1'], folded['w_c2'], folded['w_c3'],
        folded['bias_pack'],
    ]

    vmem = pl.BlockSpec(memory_space=pltpu.MemorySpace.VMEM)
    out = pl.pallas_call(
        _detector_kernel,
        out_shape=jax.ShapeDtypeStruct((s_len, 1), f32),
        in_specs=[vmem] * len(args),
        out_specs=vmem,
    )(*args)
    return out[:, 0]


# ----------------------------------------------------------------------------
# Pure-JAX reference (mirrors the PyTorch forward in inference mode).
# ----------------------------------------------------------------------------
def reference_forward(params, lf, ff, pos, cb):
    P = jax.lax.Precision.HIGHEST

    def mm(a, b):
        return jnp.dot(a, b, precision=P)

    def ln(x, g, b):
        mu = jnp.mean(x, -1, keepdims=True)
        var = jnp.mean((x - mu) ** 2, -1, keepdims=True)
        return (x - mu) / jnp.sqrt(var + LN_EPS) * g + b

    line_proj = mm(lf, params['w_line']) + params['b_line']
    file_proj = mm(ff, params['w_file']) + params['b_file']
    fused = jnp.concatenate([line_proj, file_proj], -1)
    fused = jnp.maximum(mm(fused, params['w_fuse']) + params['b_fuse'], 0.0)
    fused = ln(fused, params['ln1_g'], params['ln1_b'])

    pe = params['pos_table'][pos]
    enh = jnp.concatenate([fused, pe], -1)                     # [S, 192]
    q = mm(enh, params['w_q']) + params['b_q']
    k = mm(enh, params['w_k']) + params['b_k']
    v = mm(enh, params['w_v']) + params['b_v']
    s_len = enh.shape[0]
    qh = q.reshape(s_len, NUM_HEADS, HEAD_DIM).transpose(1, 0, 2)
    kh = k.reshape(s_len, NUM_HEADS, HEAD_DIM).transpose(1, 0, 2)
    vh = v.reshape(s_len, NUM_HEADS, HEAD_DIM).transpose(1, 0, 2)
    sc = jnp.einsum('hqd,hkd->hqk', qh, kh, precision=P) / jnp.sqrt(
        jnp.float32(HEAD_DIM))
    pr = jax.nn.softmax(sc, -1)
    oh = jnp.einsum('hqk,hkd->hqd', pr, vh, precision=P)
    attn = oh.transpose(1, 0, 2).reshape(s_len, EMBED_DIM)
    attn = mm(attn, params['w_o']) + params['b_o']
    ctx = mm(attn, params['w_op']) + params['b_op']
    cbp = mm(cb, params['w_cb']) + params['b_cb']
    fin = jnp.concatenate([ctx, cbp], -1)
    fin = jnp.maximum(mm(fin, params['w_ff']) + params['b_ff'], 0.0)
    fin = ln(fin, params['ln2_g'], params['ln2_b'])
    h1 = jnp.maximum(mm(fin, params['w_c1']) + params['b_c1'], 0.0)
    h2 = jnp.maximum(mm(h1, params['w_c2']) + params['b_c2'], 0.0)
    return jax.nn.sigmoid(mm(h2, params['w_c3']) + params['b_c3'])[:, 0]


if __name__ == "__main__":
    key = jax.random.PRNGKey(0)
    k_lf, k_ff, k_cb, k_par = jax.random.split(key, 4)

    line_features = jax.random.normal(k_lf, (SEQ, LINE_DIM), jnp.float32)
    file_features = jax.random.normal(k_ff, (SEQ, FILE_DIM), jnp.float32)
    codebert_features = jax.random.normal(k_cb, (SEQ, CODEBERT_DIM), jnp.float32)
    line_positions = jnp.arange(SEQ, dtype=jnp.int32)

    params = init_params(k_par)
    folded = fold_params(params)          # one-time weight folding (off hot path)

    out = enhanced_ai_detector_forward(
        folded, line_features, file_features, line_positions, codebert_features)
    out = jax.block_until_ready(out)

    ref = reference_forward(
        params, line_features, file_features, line_positions, codebert_features)
    ref = jax.block_until_ready(ref)

    assert out.shape == (SEQ,)
    assert bool(jnp.all(jnp.isfinite(out)))
    assert bool(jnp.allclose(out, ref, rtol=5e-3, atol=5e-3)), (out, ref)
    print("KERNEL_OK")
</pallas_src>

<mosaic_0001>
module attributes {stable_mosaic.version = 11 : i64} {
  func.func @_detector_kernel(%arg0: memref<8x33xf32, #tpu.memory_space<vmem>>, %arg1: memref<8x64xf32, #tpu.memory_space<vmem>>, %arg2: memref<8x768xf32, #tpu.memory_space<vmem>>, %arg3: memref<33x128xf32, #tpu.memory_space<vmem>>, %arg4: memref<8x192x192xf32, #tpu.memory_space<vmem>>, %arg5: memref<8x1x192xf32, #tpu.memory_space<vmem>>, %arg6: memref<8x192x256xf32, #tpu.memory_space<vmem>>, %arg7: memref<768x256xf32, #tpu.memory_space<vmem>>, %arg8: memref<256x128xf32, #tpu.memory_space<vmem>>, %arg9: memref<128x64xf32, #tpu.memory_space<vmem>>, %arg10: memref<64x1xf32, #tpu.memory_space<vmem>>, %arg11: memref<1x1536xf32, #tpu.memory_space<vmem>>, %arg12: memref<8x1xf32, #tpu.memory_space<vmem>>) attributes {dimension_semantics = [], scalar_prefetch = 0 : i64, scratch_operands = 0 : i64, tpu.core_type = #tpu.core_type<tc>} {
    %c0 = arith.constant 0 : index
    %c0_0 = arith.constant 0 : index
    %0 = vector.load %arg0[%c0, %c0_0] : memref<8x33xf32, #tpu.memory_space<vmem>>, vector<8x33xf32>
    %c0_1 = arith.constant 0 : index
    %c0_2 = arith.constant 0 : index
    %1 = vector.load %arg3[%c0_1, %c0_2] : memref<33x128xf32, #tpu.memory_space<vmem>>, vector<33x128xf32>
    %cst = arith.constant dense<0.000000e+00> : vector<8x128xf32>
    %2 = tpu.matmul %0, %1, %cst {dimension_numbers = #tpu.dot_dimension_numbers<[1], [0], [0], [1], [0, 0, 1, 1], [], []>} : vector<8x33xf32>, vector<33x128xf32>, vector<8x128xf32> -> vector<8x128xf32>
    %c0_3 = arith.constant 0 : index
    %c0_4 = arith.constant 0 : index
    %3 = vector.load %arg11[%c0_3, %c0_4] : memref<1x1536xf32, #tpu.memory_space<vmem>>, vector<1x128xf32>
    %4 = vector.broadcast %3 : vector<1x128xf32> to vector<8x128xf32>
    %5 = arith.addf %2, %4 : vector<8x128xf32>
    %cst_5 = arith.constant 0.000000e+00 : f32
    %6 = vector.broadcast %cst_5 : f32 to vector<8x128xf32>
    %7 = arith.maximumf %5, %6 : vector<8x128xf32>
    %c0_6 = arith.constant 0 : index
    %c128 = arith.constant 128 : index
    %8 = vector.load %arg11[%c0_6, %c128] : memref<1x1536xf32, #tpu.memory_space<vmem>>, vector<1x128xf32>
    %c0_7 = arith.constant 0 : index
    %c256 = arith.constant 256 : index
    %9 = vector.load %arg11[%c0_7, %c256] : memref<1x1536xf32, #tpu.memory_space<vmem>>, vector<1x128xf32>
    %cst_8 = arith.constant dense<0.000000e+00> : vector<8xf32>
    %10 = vector.multi_reduction <add>, %7, %cst_8 [1] : vector<8x128xf32> to vector<8xf32>
    %11 = vector.shape_cast %10 : vector<8xf32> to vector<8x1xf32>
    %cst_9 = arith.constant 1.280000e+02 : f32
    %12 = vector.broadcast %cst_9 : f32 to vector<8x1xf32>
    %13 = arith.divf %11, %12 : vector<8x1xf32>
    %14 = vector.broadcast %13 : vector<8x1xf32> to vector<8x128xf32>
    %15 = arith.subf %7, %14 : vector<8x128xf32>
    %16 = arith.mulf %15, %15 : vector<8x128xf32>
    %cst_10 = arith.constant dense<0.000000e+00> : vector<8xf32>
    %17 = vector.multi_reduction <add>, %16, %cst_10 [1] : vector<8x128xf32> to vector<8xf32>
    %18 = vector.shape_cast %17 : vector<8xf32> to vector<8x1xf32>
    %cst_11 = arith.constant 1.280000e+02 : f32
    %19 = vector.broadcast %cst_11 : f32 to vector<8x1xf32>
    %20 = arith.divf %18, %19 : vector<8x1xf32>
    %cst_12 = arith.constant 9.99999974E-6 : f32
    %21 = vector.broadcast %cst_12 : f32 to vector<8x1xf32>
    %22 = arith.addf %20, %21 : vector<8x1xf32>
    %23 = math.rsqrt %22 : vector<8x1xf32>
    %24 = vector.broadcast %23 : vector<8x1xf32> to vector<8x128xf32>
    %25 = arith.mulf %15, %24 : vector<8x128xf32>
    %26 = vector.broadcast %8 : vector<1x128xf32> to vector<8x128xf32>
    %27 = arith.mulf %25, %26 : vector<8x128xf32>
    %28 = vector.broadcast %9 : vector<1x128xf32> to vector<8x128xf32>
    %29 = arith.addf %27, %28 : vector<8x128xf32>
    %c0_13 = arith.constant 0 : index
    %c0_14 = arith.constant 0 : index
    %30 = vector.load %arg1[%c0_13, %c0_14] : memref<8x64xf32, #tpu.memory_space<vmem>>, vector<8x64xf32>
    %31 = tpu.concatenate %29, %30 in 1 : vector<8x128xf32>, vector<8x64xf32> -> vector<8x192xf32>
    %c0_15 = arith.constant 0 : index
    %c0_16 = arith.constant 0 : index
    %32 = vector.load %arg2[%c0_15, %c0_16] : memref<8x768xf32, #tpu.memory_space<vmem>>, vector<8x768xf32>
    %c0_17 = arith.constant 0 : index
    %c0_18 = arith.constant 0 : index
    %33 = vector.load %arg7[%c0_17, %c0_18] : memref<768x256xf32, #tpu.memory_space<vmem>>, vector<768x256xf32>
    %cst_19 = arith.constant dense<0.000000e+00> : vector<8x256xf32>
    %34 = tpu.matmul %32, %33, %cst_19 {dimension_numbers = #tpu.dot_dimension_numbers<[1], [0], [0], [1], [0, 0, 1, 1], [], []>} : vector<8x768xf32>, vector<768x256xf32>, vector<8x256xf32> -> vector<8x256xf32>
    %c0_20 = arith.constant 0 : index
    %c384 = arith.constant 384 : index
    %35 = vector.load %arg11[%c0_20, %c384] : memref<1x1536xf32, #tpu.memory_space<vmem>>, vector<1x256xf32>
    %36 = vector.broadcast %35 : vector<1x256xf32> to vector<8x256xf32>
    %37 = arith.addf %34, %36 : vector<8x256xf32>
    %c0_21 = arith.constant 0 : index
    %c0_22 = arith.constant 0 : index
    %c0_23 = arith.constant 0 : index
    %38 = vector.load %arg4[%c0_21, %c0_22, %c0_23] : memref<8x192x192xf32, #tpu.memory_space<vmem>>, vector<1x192x192xf32>
    %39 = vector.shape_cast %38 : vector<1x192x192xf32> to vector<192x192xf32>
    %cst_24 = arith.constant dense<0.000000e+00> : vector<8x192xf32>
    %40 = tpu.matmul %31, %39, %cst_24 {dimension_numbers = #tpu.dot_dimension_numbers<[1], [0], [0], [1], [0, 0, 1, 1], [], []>} : vector<8x192xf32>, vector<192x192xf32>, vector<8x192xf32> -> vector<8x192xf32>
    %c0_25 = arith.constant 0 : index
    %c0_26 = arith.constant 0 : index
    %c0_27 = arith.constant 0 : index
    %41 = vector.load %arg5[%c0_25, %c0_26, %c0_27] : memref<8x1x192xf32, #tpu.memory_space<vmem>>, vector<1x1x192xf32>
    %42 = vector.shape_cast %41 : vector<1x1x192xf32> to vector<1x192xf32>
    %43 = vector.broadcast %42 : vector<1x192xf32> to vector<8x192xf32>
    %44 = arith.addf %40, %43 : vector<8x192xf32>
    %cst_28 = arith.constant dense<0.000000e+00> : vector<8x8xf32>
    %45 = tpu.matmul %44, %31, %cst_28 {dimension_numbers = #tpu.dot_dimension_numbers<[1], [1], [0], [0], [0, 0, 1, 0], [], []>} : vector<8x192xf32>, vector<8x192xf32>, vector<8x8xf32> -> vector<8x8xf32>
    %cst_29 = arith.constant dense<0xFF800000> : vector<8xf32>
    %46 = vector.multi_reduction <maximumf>, %45, %cst_29 [1] : vector<8x8xf32> to vector<8xf32>
    %47 = vector.shape_cast %46 : vector<8xf32> to vector<8x1xf32>
    %48 = vector.broadcast %47 : vector<8x1xf32> to vector<8x8xf32>
    %49 = arith.subf %45, %48 : vector<8x8xf32>
    %50 = math.exp %49 : vector<8x8xf32>
    %cst_30 = arith.constant dense<0.000000e+00> : vector<8xf32>
    %51 = vector.multi_reduction <add>, %50, %cst_30 [1] : vector<8x8xf32> to vector<8xf32>
    %52 = vector.shape_cast %51 : vector<8xf32> to vector<8x1xf32>
    %53 = tpu.reciprocal %52 {approx = true} : vector<8x1xf32> -> vector<8x1xf32>
    %54 = vector.broadcast %53 : vector<8x1xf32> to vector<8x8xf32>
    %55 = arith.mulf %50, %54 : vector<8x8xf32>
    %cst_31 = arith.constant dense<0.000000e+00> : vector<8x192xf32>
    %56 = tpu.matmul %55, %31, %cst_31 {dimension_numbers = #tpu.dot_dimension_numbers<[1], [0], [0], [1], [0, 0, 1, 1], [], []>} : vector<8x8xf32>, vector<8x192xf32>, vector<8x192xf32> -> vector<8x192xf32>
    %c0_32 = arith.constant 0 : index
    %c0_33 = arith.constant 0 : index
    %c0_34 = arith.constant 0 : index
    %57 = vector.load %arg6[%c0_32, %c0_33, %c0_34] : memref<8x192x256xf32, #tpu.memory_space<vmem>>, vector<1x192x256xf32>
    %58 = vector.shape_cast %57 : vector<1x192x256xf32> to vector<192x256xf32>
    %cst_35 = arith.constant dense<0.000000e+00> : vector<8x256xf32>
    %59 = tpu.matmul %56, %58, %cst_35 {dimension_numbers = #tpu.dot_dimension_numbers<[1], [0], [0], [1], [0, 0, 1, 1], [], []>} : vector<8x192xf32>, vector<192x256xf32>, vector<8x256xf32> -> vector<8x256xf32>
    %60 = arith.addf %37, %59 : vector<8x256xf32>
    %c1 = arith.constant 1 : index
    %c0_36 = arith.constant 0 : index
    %c0_37 = arith.constant 0 : index
    %61 = vector.load %arg4[%c1, %c0_36, %c0_37] : memref<8x192x192xf32, #tpu.memory_space<vmem>>, vector<1x192x192xf32>
    %62 = vector.shape_cast %61 : vector<1x192x192xf32> to vector<192x192xf32>
    %cst_38 = arith.constant dense<0.000000e+00> : vector<8x192xf32>
    %63 = tpu.matmul %31, %62, %cst_38 {dimension_numbers = #tpu.dot_dimension_numbers<[1], [0], [0], [1], [0, 0, 1, 1], [], []>} : vector<8x192xf32>, vector<192x192xf32>, vector<8x192xf32> -> vector<8x192xf32>
    %c1_39 = arith.constant 1 : index
    %c0_40 = arith.constant 0 : index
    %c0_41 = arith.constant 0 : index
    %64 = vector.load %arg5[%c1_39, %c0_40, %c0_41] : memref<8x1x192xf32, #tpu.memory_space<vmem>>, vector<1x1x192xf32>
    %65 = vector.shape_cast %64 : vector<1x1x192xf32> to vector<1x192xf32>
    %66 = vector.broadcast %65 : vector<1x192xf32> to vector<8x192xf32>
    %67 = arith.addf %63, %66 : vector<8x192xf32>
    %cst_42 = arith.constant dense<0.000000e+00> : vector<8x8xf32>
    %68 = tpu.matmul %67, %31, %cst_42 {dimension_numbers = #tpu.dot_dimension_numbers<[1], [1], [0], [0], [0, 0, 1, 0], [], []>} : vector<8x192xf32>, vector<8x192xf32>, vector<8x8xf32> -> vector<8x8xf32>
    %cst_43 = arith.constant dense<0xFF800000> : vector<8xf32>
    %69 = vector.multi_reduction <maximumf>, %68, %cst_43 [1] : vector<8x8xf32> to vector<8xf32>
    %70 = vector.shape_cast %69 : vector<8xf32> to vector<8x1xf32>
    %71 = vector.broadcast %70 : vector<8x1xf32> to vector<8x8xf32>
    %72 = arith.subf %68, %71 : vector<8x8xf32>
    %73 = math.exp %72 : vector<8x8xf32>
    %cst_44 = arith.constant dense<0.000000e+00> : vector<8xf32>
    %74 = vector.multi_reduction <add>, %73, %cst_44 [1] : vector<8x8xf32> to vector<8xf32>
    %75 = vector.shape_cast %74 : vector<8xf32> to vector<8x1xf32>
    %76 = tpu.reciprocal %75 {approx = true} : vector<8x1xf32> -> vector<8x1xf32>
    %77 = vector.broadcast %76 : vector<8x1xf32> to vector<8x8xf32>
    %78 = arith.mulf %73, %77 : vector<8x8xf32>
    %cst_45 = arith.constant dense<0.000000e+00> : vector<8x192xf32>
    %79 = tpu.matmul %78, %31, %cst_45 {dimension_numbers = #tpu.dot_dimension_numbers<[1], [0], [0], [1], [0, 0, 1, 1], [], []>} : vector<8x8xf32>, vector<8x192xf32>, vector<8x192xf32> -> vector<8x192xf32>
    %c1_46 = arith.constant 1 : index
    %c0_47 = arith.constant 0 : index
    %c0_48 = arith.constant 0 : index
    %80 = vector.load %arg6[%c1_46, %c0_47, %c0_48] : memref<8x192x256xf32, #tpu.memory_space<vmem>>, vector<1x192x256xf32>
    %81 = vector.shape_cast %80 : vector<1x192x256xf32> to vector<192x256xf32>
    %cst_49 = arith.constant dense<0.000000e+00> : vector<8x256xf32>
    %82 = tpu.matmul %79, %81, %cst_49 {dimension_numbers = #tpu.dot_dimension_numbers<[1], [0], [0], [1], [0, 0, 1, 1], [], []>} : vector<8x192xf32>, vector<192x256xf32>, vector<8x256xf32> -> vector<8x256xf32>
    %83 = arith.addf %60, %82 : vector<8x256xf32>
    %c2 = arith.constant 2 : index
    %c0_50 = arith.constant 0 : index
    %c0_51 = arith.constant 0 : index
    %84 = vector.load %arg4[%c2, %c0_50, %c0_51] : memref<8x192x192xf32, #tpu.memory_space<vmem>>, vector<1x192x192xf32>
    %85 = vector.shape_cast %84 : vector<1x192x192xf32> to vector<192x192xf32>
    %cst_52 = arith.constant dense<0.000000e+00> : vector<8x192xf32>
    %86 = tpu.matmul %31, %85, %cst_52 {dimension_numbers = #tpu.dot_dimension_numbers<[1], [0], [0], [1], [0, 0, 1, 1], [], []>} : vector<8x192xf32>, vector<192x192xf32>, vector<8x192xf32> -> vector<8x192xf32>
    %c2_53 = arith.constant 2 : index
    %c0_54 = arith.constant 0 : index
    %c0_55 = arith.constant 0 : index
    %87 = vector.load %arg5[%c2_53, %c0_54, %c0_55] : memref<8x1x192xf32, #tpu.memory_space<vmem>>, vector<1x1x192xf32>
    %88 = vector.shape_cast %87 : vector<1x1x192xf32> to vector<1x192xf32>
    %89 = vector.broadcast %88 : vector<1x192xf32> to vector<8x192xf32>
    %90 = arith.addf %86, %89 : vector<8x192xf32>
    %cst_56 = arith.constant dense<0.000000e+00> : vector<8x8xf32>
    %91 = tpu.matmul %90, %31, %cst_56 {dimension_numbers = #tpu.dot_dimension_numbers<[1], [1], [0], [0], [0, 0, 1, 0], [], []>} : vector<8x192xf32>, vector<8x192xf32>, vector<8x8xf32> -> vector<8x8xf32>
    %cst_57 = arith.constant dense<0xFF800000> : vector<8xf32>
    %92 = vector.multi_reduction <maximumf>, %91, %cst_57 [1] : vector<8x8xf32> to vector<8xf32>
    %93 = vector.shape_cast %92 : vector<8xf32> to vector<8x1xf32>
    %94 = vector.broadcast %93 : vector<8x1xf32> to vector<8x8xf32>
    %95 = arith.subf %91, %94 : vector<8x8xf32>
    %96 = math.exp %95 : vector<8x8xf32>
    %cst_58 = arith.constant dense<0.000000e+00> : vector<8xf32>
    %97 = vector.multi_reduction <add>, %96, %cst_58 [1] : vector<8x8xf32> to vector<8xf32>
    %98 = vector.shape_cast %97 : vector<8xf32> to vector<8x1xf32>
    %99 = tpu.reciprocal %98 {approx = true} : vector<8x1xf32> -> vector<8x1xf32>
    %100 = vector.broadcast %99 : vector<8x1xf32> to vector<8x8xf32>
    %101 = arith.mulf %96, %100 : vector<8x8xf32>
    %cst_59 = arith.constant dense<0.000000e+00> : vector<8x192xf32>
    %102 = tpu.matmul %101, %31, %cst_59 {dimension_numbers = #tpu.dot_dimension_numbers<[1], [0], [0], [1], [0, 0, 1, 1], [], []>} : vector<8x8xf32>, vector<8x192xf32>, vector<8x192xf32> -> vector<8x192xf32>
    %c2_60 = arith.constant 2 : index
    %c0_61 = arith.constant 0 : index
    %c0_62 = arith.constant 0 : index
    %103 = vector.load %arg6[%c2_60, %c0_61, %c0_62] : memref<8x192x256xf32, #tpu.memory_space<vmem>>, vector<1x192x256xf32>
    %104 = vector.shape_cast %103 : vector<1x192x256xf32> to vector<192x256xf32>
    %cst_63 = arith.constant dense<0.000000e+00> : vector<8x256xf32>
    %105 = tpu.matmul %102, %104, %cst_63 {dimension_numbers = #tpu.dot_dimension_numbers<[1], [0], [0], [1], [0, 0, 1, 1], [], []>} : vector<8x192xf32>, vector<192x256xf32>, vector<8x256xf32> -> vector<8x256xf32>
    %106 = arith.addf %83, %105 : vector<8x256xf32>
    %c3 = arith.constant 3 : index
    %c0_64 = arith.constant 0 : index
    %c0_65 = arith.constant 0 : index
    %107 = vector.load %arg4[%c3, %c0_64, %c0_65] : memref<8x192x192xf32, #tpu.memory_space<vmem>>, vector<1x192x192xf32>
    %108 = vector.shape_cast %107 : vector<1x192x192xf32> to vector<192x192xf32>
    %cst_66 = arith.constant dense<0.000000e+00> : vector<8x192xf32>
    %109 = tpu.matmul %31, %108, %cst_66 {dimension_numbers = #tpu.dot_dimension_numbers<[1], [0], [0], [1], [0, 0, 1, 1], [], []>} : vector<8x192xf32>, vector<192x192xf32>, vector<8x192xf32> -> vector<8x192xf32>
    %c3_67 = arith.constant 3 : index
    %c0_68 = arith.constant 0 : index
    %c0_69 = arith.constant 0 : index
    %110 = vector.load %arg5[%c3_67, %c0_68, %c0_69] : memref<8x1x192xf32, #tpu.memory_space<vmem>>, vector<1x1x192xf32>
    %111 = vector.shape_cast %110 : vector<1x1x192xf32> to vector<1x192xf32>
    %112 = vector.broadcast %111 : vector<1x192xf32> to vector<8x192xf32>
    %113 = arith.addf %109, %112 : vector<8x192xf32>
    %cst_70 = arith.constant dense<0.000000e+00> : vector<8x8xf32>
    %114 = tpu.matmul %113, %31, %cst_70 {dimension_numbers = #tpu.dot_dimension_numbers<[1], [1], [0], [0], [0, 0, 1, 0], [], []>} : vector<8x192xf32>, vector<8x192xf32>, vector<8x8xf32> -> vector<8x8xf32>
    %cst_71 = arith.constant dense<0xFF800000> : vector<8xf32>
    %115 = vector.multi_reduction <maximumf>, %114, %cst_71 [1] : vector<8x8xf32> to vector<8xf32>
    %116 = vector.shape_cast %115 : vector<8xf32> to vector<8x1xf32>
    %117 = vector.broadcast %116 : vector<8x1xf32> to vector<8x8xf32>
    %118 = arith.subf %114, %117 : vector<8x8xf32>
    %119 = math.exp %118 : vector<8x8xf32>
    %cst_72 = arith.constant dense<0.000000e+00> : vector<8xf32>
    %120 = vector.multi_reduction <add>, %119, %cst_72 [1] : vector<8x8xf32> to vector<8xf32>
    %121 = vector.shape_cast %120 : vector<8xf32> to vector<8x1xf32>
    %122 = tpu.reciprocal %121 {approx = true} : vector<8x1xf32> -> vector<8x1xf32>
    %123 = vector.broadcast %122 : vector<8x1xf32> to vector<8x8xf32>
    %124 = arith.mulf %119, %123 : vector<8x8xf32>
    %cst_73 = arith.constant dense<0.000000e+00> : vector<8x192xf32>
    %125 = tpu.matmul %124, %31, %cst_73 {dimension_numbers = #tpu.dot_dimension_numbers<[1], [0], [0], [1], [0, 0, 1, 1], [], []>} : vector<8x8xf32>, vector<8x192xf32>, vector<8x192xf32> -> vector<8x192xf32>
    %c3_74 = arith.constant 3 : index
    %c0_75 = arith.constant 0 : index
    %c0_76 = arith.constant 0 : index
    %126 = vector.load %arg6[%c3_74, %c0_75, %c0_76] : memref<8x192x256xf32, #tpu.memory_space<vmem>>, vector<1x192x256xf32>
    %127 = vector.shape_cast %126 : vector<1x192x256xf32> to vector<192x256xf32>
    %cst_77 = arith.constant dense<0.000000e+00> : vector<8x256xf32>
    %128 = tpu.matmul %125, %127, %cst_77 {dimension_numbers = #tpu.dot_dimension_numbers<[1], [0], [0], [1], [0, 0, 1, 1], [], []>} : vector<8x192xf32>, vector<192x256xf32>, vector<8x256xf32> -> vector<8x256xf32>
    %129 = arith.addf %106, %128 : vector<8x256xf32>
    %c4 = arith.constant 4 : index
    %c0_78 = arith.constant 0 : index
    %c0_79 = arith.constant 0 : index
    %130 = vector.load %arg4[%c4, %c0_78, %c0_79] : memref<8x192x192xf32, #tpu.memory_space<vmem>>, vector<1x192x192xf32>
    %131 = vector.shape_cast %130 : vector<1x192x192xf32> to vector<192x192xf32>
    %cst_80 = arith.constant dense<0.000000e+00> : vector<8x192xf32>
    %132 = tpu.matmul %31, %131, %cst_80 {dimension_numbers = #tpu.dot_dimension_numbers<[1], [0], [0], [1], [0, 0, 1, 1], [], []>} : vector<8x192xf32>, vector<192x192xf32>, vector<8x192xf32> -> vector<8x192xf32>
    %c4_81 = arith.constant 4 : index
    %c0_82 = arith.constant 0 : index
    %c0_83 = arith.constant 0 : index
    %133 = vector.load %arg5[%c4_81, %c0_82, %c0_83] : memref<8x1x192xf32, #tpu.memory_space<vmem>>, vector<1x1x192xf32>
    %134 = vector.shape_cast %133 : vector<1x1x192xf32> to vector<1x192xf32>
    %135 = vector.broadcast %134 : vector<1x192xf32> to vector<8x192xf32>
    %136 = arith.addf %132, %135 : vector<8x192xf32>
    %cst_84 = arith.constant dense<0.000000e+00> : vector<8x8xf32>
    %137 = tpu.matmul %136, %31, %cst_84 {dimension_numbers = #tpu.dot_dimension_numbers<[1], [1], [0], [0], [0, 0, 1, 0], [], []>} : vector<8x192xf32>, vector<8x192xf32>, vector<8x8xf32> -> vector<8x8xf32>
    %cst_85 = arith.constant dense<0xFF800000> : vector<8xf32>
    %138 = vector.multi_reduction <maximumf>, %137, %cst_85 [1] : vector<8x8xf32> to vector<8xf32>
    %139 = vector.shape_cast %138 : vector<8xf32> to vector<8x1xf32>
    %140 = vector.broadcast %139 : vector<8x1xf32> to vector<8x8xf32>
    %141 = arith.subf %137, %140 : vector<8x8xf32>
    %142 = math.exp %141 : vector<8x8xf32>
    %cst_86 = arith.constant dense<0.000000e+00> : vector<8xf32>
    %143 = vector.multi_reduction <add>, %142, %cst_86 [1] : vector<8x8xf32> to vector<8xf32>
    %144 = vector.shape_cast %143 : vector<8xf32> to vector<8x1xf32>
    %145 = tpu.reciprocal %144 {approx = true} : vector<8x1xf32> -> vector<8x1xf32>
    %146 = vector.broadcast %145 : vector<8x1xf32> to vector<8x8xf32>
    %147 = arith.mulf %142, %146 : vector<8x8xf32>
    %cst_87 = arith.constant dense<0.000000e+00> : vector<8x192xf32>
    %148 = tpu.matmul %147, %31, %cst_87 {dimension_numbers = #tpu.dot_dimension_numbers<[1], [0], [0], [1], [0, 0, 1, 1], [], []>} : vector<8x8xf32>, vector<8x192xf32>, vector<8x192xf32> -> vector<8x192xf32>
    %c4_88 = arith.constant 4 : index
    %c0_89 = arith.constant 0 : index
    %c0_90 = arith.constant 0 : index
    %149 = vector.load %arg6[%c4_88, %c0_89, %c0_90] : memref<8x192x256xf32, #tpu.memory_space<vmem>>, vector<1x192x256xf32>
    %150 = vector.shape_cast %149 : vector<1x192x256xf32> to vector<192x256xf32>
    %cst_91 = arith.constant dense<0.000000e+00> : vector<8x256xf32>
    %151 = tpu.matmul %148, %150, %cst_91 {dimension_numbers = #tpu.dot_dimension_numbers<[1], [0], [0], [1], [0, 0, 1, 1], [], []>} : vector<8x192xf32>, vector<192x256xf32>, vector<8x256xf32> -> vector<8x256xf32>
    %152 = arith.addf %129, %151 : vector<8x256xf32>
    %c5 = arith.constant 5 : index
    %c0_92 = arith.constant 0 : index
    %c0_93 = arith.constant 0 : index
    %153 = vector.load %arg4[%c5, %c0_92, %c0_93] : memref<8x192x192xf32, #tpu.memory_space<vmem>>, vector<1x192x192xf32>
    %154 = vector.shape_cast %153 : vector<1x192x192xf32> to vector<192x192xf32>
    %cst_94 = arith.constant dense<0.000000e+00> : vector<8x192xf32>
    %155 = tpu.matmul %31, %154, %cst_94 {dimension_numbers = #tpu.dot_dimension_numbers<[1], [0], [0], [1], [0, 0, 1, 1], [], []>} : vector<8x192xf32>, vector<192x192xf32>, vector<8x192xf32> -> vector<8x192xf32>
    %c5_95 = arith.constant 5 : index
    %c0_96 = arith.constant 0 : index
    %c0_97 = arith.constant 0 : index
    %156 = vector.load %arg5[%c5_95, %c0_96, %c0_97] : memref<8x1x192xf32, #tpu.memory_space<vmem>>, vector<1x1x192xf32>
    %157 = vector.shape_cast %156 : vector<1x1x192xf32> to vector<1x192xf32>
    %158 = vector.broadcast %157 : vector<1x192xf32> to vector<8x192xf32>
    %159 = arith.addf %155, %158 : vector<8x192xf32>
    %cst_98 = arith.constant dense<0.000000e+00> : vector<8x8xf32>
    %160 = tpu.matmul %159, %31, %cst_98 {dimension_numbers = #tpu.dot_dimension_numbers<[1], [1], [0], [0], [0, 0, 1, 0], [], []>} : vector<8x192xf32>, vector<8x192xf32>, vector<8x8xf32> -> vector<8x8xf32>
    %cst_99 = arith.constant dense<0xFF800000> : vector<8xf32>
    %161 = vector.multi_reduction <maximumf>, %160, %cst_99 [1] : vector<8x8xf32> to vector<8xf32>
    %162 = vector.shape_cast %161 : vector<8xf32> to vector<8x1xf32>
    %163 = vector.broadcast %162 : vector<8x1xf32> to vector<8x8xf32>
    %164 = arith.subf %160, %163 : vector<8x8xf32>
    %165 = math.exp %164 : vector<8x8xf32>
    %cst_100 = arith.constant dense<0.000000e+00> : vector<8xf32>
    %166 = vector.multi_reduction <add>, %165, %cst_100 [1] : vector<8x8xf32> to vector<8xf32>
    %167 = vector.shape_cast %166 : vector<8xf32> to vector<8x1xf32>
    %168 = tpu.reciprocal %167 {approx = true} : vector<8x1xf32> -> vector<8x1xf32>
    %169 = vector.broadcast %168 : vector<8x1xf32> to vector<8x8xf32>
    %170 = arith.mulf %165, %169 : vector<8x8xf32>
    %cst_101 = arith.constant dense<0.000000e+00> : vector<8x192xf32>
    %171 = tpu.matmul %170, %31, %cst_101 {dimension_numbers = #tpu.dot_dimension_numbers<[1], [0], [0], [1], [0, 0, 1, 1], [], []>} : vector<8x8xf32>, vector<8x192xf32>, vector<8x192xf32> -> vector<8x192xf32>
    %c5_102 = arith.constant 5 : index
    %c0_103 = arith.constant 0 : index
    %c0_104 = arith.constant 0 : index
    %172 = vector.load %arg6[%c5_102, %c0_103, %c0_104] : memref<8x192x256xf32, #tpu.memory_space<vmem>>, vector<1x192x256xf32>
    %173 = vector.shape_cast %172 : vector<1x192x256xf32> to vector<192x256xf32>
    %cst_105 = arith.constant dense<0.000000e+00> : vector<8x256xf32>
    %174 = tpu.matmul %171, %173, %cst_105 {dimension_numbers = #tpu.dot_dimension_numbers<[1], [0], [0], [1], [0, 0, 1, 1], [], []>} : vector<8x192xf32>, vector<192x256xf32>, vector<8x256xf32> -> vector<8x256xf32>
    %175 = arith.addf %152, %174 : vector<8x256xf32>
    %c6 = arith.constant 6 : index
    %c0_106 = arith.constant 0 : index
    %c0_107 = arith.constant 0 : index
    %176 = vector.load %arg4[%c6, %c0_106, %c0_107] : memref<8x192x192xf32, #tpu.memory_space<vmem>>, vector<1x192x192xf32>
    %177 = vector.shape_cast %176 : vector<1x192x192xf32> to vector<192x192xf32>
    %cst_108 = arith.constant dense<0.000000e+00> : vector<8x192xf32>
    %178 = tpu.matmul %31, %177, %cst_108 {dimension_numbers = #tpu.dot_dimension_numbers<[1], [0], [0], [1], [0, 0, 1, 1], [], []>} : vector<8x192xf32>, vector<192x192xf32>, vector<8x192xf32> -> vector<8x192xf32>
    %c6_109 = arith.constant 6 : index
    %c0_110 = arith.constant 0 : index
    %c0_111 = arith.constant 0 : index
    %179 = vector.load %arg5[%c6_109, %c0_110, %c0_111] : memref<8x1x192xf32, #tpu.memory_space<vmem>>, vector<1x1x192xf32>
    %180 = vector.shape_cast %179 : vector<1x1x192xf32> to vector<1x192xf32>
    %181 = vector.broadcast %180 : vector<1x192xf32> to vector<8x192xf32>
    %182 = arith.addf %178, %181 : vector<8x192xf32>
    %cst_112 = arith.constant dense<0.000000e+00> : vector<8x8xf32>
    %183 = tpu.matmul %182, %31, %cst_112 {dimension_numbers = #tpu.dot_dimension_numbers<[1], [1], [0], [0], [0, 0, 1, 0], [], []>} : vector<8x192xf32>, vector<8x192xf32>, vector<8x8xf32> -> vector<8x8xf32>
    %cst_113 = arith.constant dense<0xFF800000> : vector<8xf32>
    %184 = vector.multi_reduction <maximumf>, %183, %cst_113 [1] : vector<8x8xf32> to vector<8xf32>
    %185 = vector.shape_cast %184 : vector<8xf32> to vector<8x1xf32>
    %186 = vector.broadcast %185 : vector<8x1xf32> to vector<8x8xf32>
    %187 = arith.subf %183, %186 : vector<8x8xf32>
    %188 = math.exp %187 : vector<8x8xf32>
    %cst_114 = arith.constant dense<0.000000e+00> : vector<8xf32>
    %189 = vector.multi_reduction <add>, %188, %cst_114 [1] : vector<8x8xf32> to vector<8xf32>
    %190 = vector.shape_cast %189 : vector<8xf32> to vector<8x1xf32>
    %191 = tpu.reciprocal %190 {approx = true} : vector<8x1xf32> -> vector<8x1xf32>
    %192 = vector.broadcast %191 : vector<8x1xf32> to vector<8x8xf32>
    %193 = arith.mulf %188, %192 : vector<8x8xf32>
    %cst_115 = arith.constant dense<0.000000e+00> : vector<8x192xf32>
    %194 = tpu.matmul %193, %31, %cst_115 {dimension_numbers = #tpu.dot_dimension_numbers<[1], [0], [0], [1], [0, 0, 1, 1], [], []>} : vector<8x8xf32>, vector<8x192xf32>, vector<8x192xf32> -> vector<8x192xf32>
    %c6_116 = arith.constant 6 : index
    %c0_117 = arith.constant 0 : index
    %c0_118 = arith.constant 0 : index
    %195 = vector.load %arg6[%c6_116, %c0_117, %c0_118] : memref<8x192x256xf32, #tpu.memory_space<vmem>>, vector<1x192x256xf32>
    %196 = vector.shape_cast %195 : vector<1x192x256xf32> to vector<192x256xf32>
    %cst_119 = arith.constant dense<0.000000e+00> : vector<8x256xf32>
    %197 = tpu.matmul %194, %196, %cst_119 {dimension_numbers = #tpu.dot_dimension_numbers<[1], [0], [0], [1], [0, 0, 1, 1], [], []>} : vector<8x192xf32>, vector<192x256xf32>, vector<8x256xf32> -> vector<8x256xf32>
    %198 = arith.addf %175, %197 : vector<8x256xf32>
    %c7 = arith.constant 7 : index
    %c0_120 = arith.constant 0 : index
    %c0_121 = arith.constant 0 : index
    %199 = vector.load %arg4[%c7, %c0_120, %c0_121] : memref<8x192x192xf32, #tpu.memory_space<vmem>>, vector<1x192x192xf32>
    %200 = vector.shape_cast %199 : vector<1x192x192xf32> to vector<192x192xf32>
    %cst_122 = arith.constant dense<0.000000e+00> : vector<8x192xf32>
    %201 = tpu.matmul %31, %200, %cst_122 {dimension_numbers = #tpu.dot_dimension_numbers<[1], [0], [0], [1], [0, 0, 1, 1], [], []>} : vector<8x192xf32>, vector<192x192xf32>, vector<8x192xf32> -> vector<8x192xf32>
    %c7_123 = arith.constant 7 : index
    %c0_124 = arith.constant 0 : index
    %c0_125 = arith.constant 0 : index
    %202 = vector.load %arg5[%c7_123, %c0_124, %c0_125] : memref<8x1x192xf32, #tpu.memory_space<vmem>>, vector<1x1x192xf32>
    %203 = vector.shape_cast %202 : vector<1x1x192xf32> to vector<1x192xf32>
    %204 = vector.broadcast %203 : vector<1x192xf32> to vector<8x192xf32>
    %205 = arith.addf %201, %204 : vector<8x192xf32>
    %cst_126 = arith.constant dense<0.000000e+00> : vector<8x8xf32>
    %206 = tpu.matmul %205, %31, %cst_126 {dimension_numbers = #tpu.dot_dimension_numbers<[1], [1], [0], [0], [0, 0, 1, 0], [], []>} : vector<8x192xf32>, vector<8x192xf32>, vector<8x8xf32> -> vector<8x8xf32>
    %cst_127 = arith.constant dense<0xFF800000> : vector<8xf32>
    %207 = vector.multi_reduction <maximumf>, %206, %cst_127 [1] : vector<8x8xf32> to vector<8xf32>
    %208 = vector.shape_cast %207 : vector<8xf32> to vector<8x1xf32>
    %209 = vector.broadcast %208 : vector<8x1xf32> to vector<8x8xf32>
    %210 = arith.subf %206, %209 : vector<8x8xf32>
    %211 = math.exp %210 : vector<8x8xf32>
    %cst_128 = arith.constant dense<0.000000e+00> : vector<8xf32>
    %212 = vector.multi_reduction <add>, %211, %cst_128 [1] : vector<8x8xf32> to vector<8xf32>
    %213 = vector.shape_cast %212 : vector<8xf32> to vector<8x1xf32>
    %214 = tpu.reciprocal %213 {approx = true} : vector<8x1xf32> -> vector<8x1xf32>
    %215 = vector.broadcast %214 : vector<8x1xf32> to vector<8x8xf32>
    %216 = arith.mulf %211, %215 : vector<8x8xf32>
    %cst_129 = arith.constant dense<0.000000e+00> : vector<8x192xf32>
    %217 = tpu.matmul %216, %31, %cst_129 {dimension_numbers = #tpu.dot_dimension_numbers<[1], [0], [0], [1], [0, 0, 1, 1], [], []>} : vector<8x8xf32>, vector<8x192xf32>, vector<8x192xf32> -> vector<8x192xf32>
    %c7_130 = arith.constant 7 : index
    %c0_131 = arith.constant 0 : index
    %c0_132 = arith.constant 0 : index
    %218 = vector.load %arg6[%c7_130, %c0_131, %c0_132] : memref<8x192x256xf32, #tpu.memory_space<vmem>>, vector<1x192x256xf32>
    %219 = vector.shape_cast %218 : vector<1x192x256xf32> to vector<192x256xf32>
    %cst_133 = arith.constant dense<0.000000e+00> : vector<8x256xf32>
    %220 = tpu.matmul %217, %219, %cst_133 {dimension_numbers = #tpu.dot_dimension_numbers<[1], [0], [0], [1], [0, 0, 1, 1], [], []>} : vector<8x192xf32>, vector<192x256xf32>, vector<8x256xf32> -> vector<8x256xf32>
    %221 = arith.addf %198, %220 : vector<8x256xf32>
    %cst_134 = arith.constant 0.000000e+00 : f32
    %222 = vector.broadcast %cst_134 : f32 to vector<8x256xf32>
    %223 = arith.maximumf %221, %222 : vector<8x256xf32>
    %c0_135 = arith.constant 0 : index
    %c640 = arith.constant 640 : index
    %224 = vector.load %arg11[%c0_135, %c640] : memref<1x1536xf32, #tpu.memory_space<vmem>>, vector<1x256xf32>
    %c0_136 = arith.constant 0 : index
    %c896 = arith.constant 896 : index
    %225 = vector.load %arg11[%c0_136, %c896] : memref<1x1536xf32, #tpu.memory_space<vmem>>, vector<1x256xf32>
    %cst_137 = arith.constant dense<0.000000e+00> : vector<8xf32>
    %226 = vector.multi_reduction <add>, %223, %cst_137 [1] : vector<8x256xf32> to vector<8xf32>
    %227 = vector.shape_cast %226 : vector<8xf32> to vector<8x1xf32>
    %cst_138 = arith.constant 2.560000e+02 : f32
    %228 = vector.broadcast %cst_138 : f32 to vector<8x1xf32>
    %229 = arith.divf %227, %228 : vector<8x1xf32>
    %230 = vector.broadcast %229 : vector<8x1xf32> to vector<8x256xf32>
    %231 = arith.subf %223, %230 : vector<8x256xf32>
    %232 = arith.mulf %231, %231 : vector<8x256xf32>
    %cst_139 = arith.constant dense<0.000000e+00> : vector<8xf32>
    %233 = vector.multi_reduction <add>, %232, %cst_139 [1] : vector<8x256xf32> to vector<8xf32>
    %234 = vector.shape_cast %233 : vector<8xf32> to vector<8x1xf32>
    %cst_140 = arith.constant 2.560000e+02 : f32
    %235 = vector.broadcast %cst_140 : f32 to vector<8x1xf32>
    %236 = arith.divf %234, %235 : vector<8x1xf32>
    %cst_141 = arith.constant 9.99999974E-6 : f32
    %237 = vector.broadcast %cst_141 : f32 to vector<8x1xf32>
    %238 = arith.addf %236, %237 : vector<8x1xf32>
    %239 = math.rsqrt %238 : vector<8x1xf32>
    %240 = vector.broadcast %239 : vector<8x1xf32> to vector<8x256xf32>
    %241 = arith.mulf %231, %240 : vector<8x256xf32>
    %242 = vector.broadcast %224 : vector<1x256xf32> to vector<8x256xf32>
    %243 = arith.mulf %241, %242 : vector<8x256xf32>
    %244 = vector.broadcast %225 : vector<1x256xf32> to vector<8x256xf32>
    %245 = arith.addf %243, %244 : vector<8x256xf32>
    %c0_142 = arith.constant 0 : index
    %c0_143 = arith.constant 0 : index
    %246 = vector.load %arg8[%c0_142, %c0_143] : memref<256x128xf32, #tpu.memory_space<vmem>>, vector<256x128xf32>
    %cst_144 = arith.constant dense<0.000000e+00> : vector<8x128xf32>
    %247 = tpu.matmul %245, %246, %cst_144 {dimension_numbers = #tpu.dot_dimension_numbers<[1], [0], [0], [1], [0, 0, 1, 1], [], []>} : vector<8x256xf32>, vector<256x128xf32>, vector<8x128xf32> -> vector<8x128xf32>
    %c0_145 = arith.constant 0 : index
    %c1152 = arith.constant 1152 : index
    %248 = vector.load %arg11[%c0_145, %c1152] : memref<1x1536xf32, #tpu.memory_space<vmem>>, vector<1x128xf32>
    %249 = vector.broadcast %248 : vector<1x128xf32> to vector<8x128xf32>
    %250 = arith.addf %247, %249 : vector<8x128xf32>
    %cst_146 = arith.constant 0.000000e+00 : f32
    %251 = vector.broadcast %cst_146 : f32 to vector<8x128xf32>
    %252 = arith.maximumf %250, %251 : vector<8x128xf32>
    %c0_147 = arith.constant 0 : index
    %c0_148 = arith.constant 0 : index
    %253 = vector.load %arg9[%c0_147, %c0_148] : memref<128x64xf32, #tpu.memory_space<vmem>>, vector<128x64xf32>
    %cst_149 = arith.constant dense<0.000000e+00> : vector<8x64xf32>
    %254 = tpu.matmul %252, %253, %cst_149 {dimension_numbers = #tpu.dot_dimension_numbers<[1], [0], [0], [1], [0, 0, 1, 1], [], []>} : vector<8x128xf32>, vector<128x64xf32>, vector<8x64xf32> -> vector<8x64xf32>
    %c0_150 = arith.constant 0 : index
    %c1280 = arith.constant 1280 : index
    %255 = vector.load %arg11[%c0_150, %c1280] : memref<1x1536xf32, #tpu.memory_space<vmem>>, vector<1x64xf32>
    %256 = vector.broadcast %255 : vector<1x64xf32> to vector<8x64xf32>
    %257 = arith.addf %254, %256 : vector<8x64xf32>
    %cst_151 = arith.constant 0.000000e+00 : f32
    %258 = vector.broadcast %cst_151 : f32 to vector<8x64xf32>
    %259 = arith.maximumf %257, %258 : vector<8x64xf32>
    %c0_152 = arith.constant 0 : index
    %c0_153 = arith.constant 0 : index
    %260 = vector.load %arg10[%c0_152, %c0_153] : memref<64x1xf32, #tpu.memory_space<vmem>>, vector<64x1xf32>
    %cst_154 = arith.constant dense<0.000000e+00> : vector<8x1xf32>
    %261 = tpu.matmul %259, %260, %cst_154 {dimension_numbers = #tpu.dot_dimension_numbers<[1], [0], [0], [1], [0, 0, 1, 1], [], []>} : vector<8x64xf32>, vector<64x1xf32>, vector<8x1xf32> -> vector<8x1xf32>
    %c0_155 = arith.constant 0 : index
    %c1408 = arith.constant 1408 : index
    %262 = vector.load %arg11[%c0_155, %c1408] : memref<1x1536xf32, #tpu.memory_space<vmem>>, vector<1x1xf32>
    %263 = vector.broadcast %262 : vector<1x1xf32> to vector<8x1xf32>
    %264 = arith.addf %261, %263 : vector<8x1xf32>
    %265 = arith.negf %264 : vector<8x1xf32>
    %266 = math.exp %265 : vector<8x1xf32>
    %cst_156 = arith.constant 1.000000e+00 : f32
    %267 = vector.broadcast %cst_156 : f32 to vector<8x1xf32>
    %268 = arith.addf %267, %266 : vector<8x1xf32>
    %269 = arith.divf %267, %268 : vector<8x1xf32>
    %c0_157 = arith.constant 0 : index
    %c0_158 = arith.constant 0 : index
    %270 = vector.load %arg12[%c0_157, %c0_158] : memref<8x1xf32, #tpu.memory_space<vmem>>, vector<8x1xf32>
    tpu.vector_store %arg12[%c0_157, %c0_158], %269 {strides = array<i32>} : memref<8x1xf32, #tpu.memory_space<vmem>>, vector<8x1xf32>,
    return
  }
}

</mosaic_0001>

<llo_original>
// kernel: tpu_custom_call.1
$region0: #{tpu_custom_call.1}
  #allocation0 [shape = 'u32[]', space=smem, size = 0x4, offset = 0x4, fixed_abs, tag = 'smem constant byte address 0x4 - core index']
  #allocation1 [shape = 'u32[72,128]{1,0:T(1,128)}', space=vmem, size = 0x9000, scoped, tag = 'internal scratch']
  %s0 = inlined_call_operand.hbm [shape: f32[8,33], index: 0, kind: input, shape index: {}]
  %s1 = inlined_call_operand.hbm [shape: f32[8,64], index: 1, kind: input, shape index: {}]
  %s2 = inlined_call_operand.hbm [shape: f32[8,768], index: 2, kind: input, shape index: {}]
  %s3 = inlined_call_operand.hbm [shape: f32[33,128], index: 3, kind: input, shape index: {}]
  %s4 = inlined_call_operand.hbm [shape: f32[8,192,192], index: 4, kind: input, shape index: {}]
  %s5 = inlined_call_operand.hbm [shape: f32[8,1,192], index: 5, kind: input, shape index: {}]
  %s6 = inlined_call_operand.hbm [shape: f32[8,192,256], index: 6, kind: input, shape index: {}]
  %s7 = inlined_call_operand.hbm [shape: f32[768,256], index: 7, kind: input, shape index: {}]
  %s8 = inlined_call_operand.hbm [shape: f32[256,128], index: 8, kind: input, shape index: {}]
  %s9 = inlined_call_operand.vmem [shape: f32[128,64], index: 9, kind: input, shape index: {}]
  %s10 = inlined_call_operand.vmem [shape: f32[64,1], index: 10, kind: input, shape index: {}]
  %s11 = inlined_call_operand.hbm [shape: f32[1,1536], index: 11, kind: input, shape index: {}]
  %s12 = inlined_call_operand.vmem [shape: f32[8,1], index: 12, kind: output, shape index: {}]
  %s13 = sld [smem:[#allocation0]]
  $region98: #{tpu_custom_call.1} parent=0
    _
  %s15 = ssub.s32 1, %s13
  %s16 = scalar_select 0, %s15, %s13
  $region1: #{tpu_custom_call.1} parent=0
    #allocation2 [shape = 'u8[4096]{0}', space=vmem, size = 0x1000, scoped, tag = 'input window, operand 0, single buffered']
    #allocation3 [shape = 's32[1]{0}', space=sflag, size = 0x4, scoped, tag = 'scoped memory for tpu_custom_call.1']
    #allocation4 [shape = 'u8[4096]{0}', space=vmem, size = 0x1000, scoped, tag = 'input window, operand 1, single buffered']
    #allocation5 [shape = 's32[1]{0}', space=sflag, size = 0x4, scoped, tag = 'scoped memory for tpu_custom_call.1']
    #allocation6 [shape = 'u8[24576]{0}', space=vmem, size = 0x6000, scoped, tag = 'input window, operand 2, single buffered']
    #allocation7 [shape = 'u8[20480]{0}', space=vmem, size = 0x5000, scoped, tag = 'input window, operand 3, single buffered']
    #allocation8 [shape = 's32[1]{0}', space=sflag, size = 0x4, scoped, tag = 'scoped memory for tpu_custom_call.1']
    #allocation9 [shape = 'u8[1572864]{0}', space=vmem, size = 0x180000, scoped, tag = 'input window, operand 4, single buffered']
    #allocation10 [shape = 'u8[8192]{0}', space=vmem, size = 0x2000, scoped, tag = 'input window, operand 5, single buffered']
    #allocation11 [shape = 's32[1]{0}', space=sflag, size = 0x4, scoped, tag = 'scoped memory for tpu_custom_call.1']
    #allocation12 [shape = 'u8[1572864]{0}', space=vmem, size = 0x180000, scoped, tag = 'input window, operand 6, single buffered']
    #allocation13 [shape = 'u8[786432]{0}', space=vmem, size = 0xc0000, scoped, tag = 'input window, operand 7, single buffered']
    #allocation14 [shape = 's32[1]{0}', space=sflag, size = 0x4, scoped, tag = 'scoped memory for tpu_custom_call.1']
    #allocation15 [shape = 'u8[131072]{0}', space=vmem, size = 0x20000, scoped, tag = 'input window, operand 8, single buffered']
    #allocation16 [shape = 'u8[6144]{0}', space=vmem, size = 0x1800, scoped, tag = 'input window, operand 11, single buffered']
    #allocation17 [shape = 's32[1]{0}', space=sflag, size = 0x4, scoped, tag = 'scoped memory for tpu_custom_call.1']
    %17 = vsyncpa [#allocation3], 0
    %18 = vsyncpa [#allocation5], 0
    %19 = vsyncpa [#allocation8], 0
    %20 = vsyncpa [#allocation11], 0
    %21 = vsyncpa [#allocation14], 0
    %22 = vsyncpa [#allocation17], 0
    // Predicated region
    $region2: #{tpu_custom_call.1} parent=1 // pred_check
      _
    $region3: #{tpu_custom_call.1} parent=1 // pred_check_branch
      %24 = sbr.rel (0) target = $region5
    $region4: #{tpu_custom_call.1} parent=1 // pred_region
      %26 = vsyncadd [#allocation3], 0
      %s28 = sshll.u32 %s0, 4
      %s29 = int_to_ptr.hbm [resolvable:$true] %s28
      %s30 = sshll.u32 [#allocation2], 4
      %s31 = int_to_ptr.vmem [resolvable:$true] %s30
      %33 = dma.hbm_to_vmem [thread:$0]  %s29, 128, %s31, [#allocation3]
    $region5: #{tpu_custom_call.1} parent=1 // pred_fallthru
      _
    // Predicated region
    $region6: #{tpu_custom_call.1} parent=1 // pred_check
      _
    $region7: #{tpu_custom_call.1} parent=1 // pred_check_branch
      %35 = sbr.rel (0) target = $region9
    $region8: #{tpu_custom_call.1} parent=1 // pred_region
      %37 = vsyncadd [#allocation5], 0
      %s39 = sshll.u32 %s1, 4
      %s40 = int_to_ptr.hbm [resolvable:$true] %s39
      %s41 = sshll.u32 [#allocation4], 4
      %s42 = int_to_ptr.vmem [resolvable:$true] %s41
      %44 = dma.hbm_to_vmem [thread:$0]  %s40, 128, %s42, [#allocation5]
    $region9: #{tpu_custom_call.1} parent=1 // pred_fallthru
      _
    // Predicated region
    $region10: #{tpu_custom_call.1} parent=1 // pred_check
      _
    $region11: #{tpu_custom_call.1} parent=1 // pred_check_branch
      %46 = sbr.rel (0) target = $region13
    $region12: #{tpu_custom_call.1} parent=1 // pred_region
      %48 = vsyncadd [#allocation5], 0
      %s50 = sshll.u32 %s2, 4
      %s51 = int_to_ptr.hbm [resolvable:$true] %s50
      %s52 = sshll.u32 [#allocation6], 4
      %s53 = int_to_ptr.vmem [resolvable:$true] %s52
      %55 = dma.hbm_to_vmem [thread:$0]  %s51, 768, %s53, [#allocation5]
    $region13: #{tpu_custom_call.1} parent=1 // pred_fallthru
      _
    // Predicated region
    $region14: #{tpu_custom_call.1} parent=1 // pred_check
      _
    $region15: #{tpu_custom_call.1} parent=1 // pred_check_branch
      %57 = sbr.rel (0) target = $region17
    $region16: #{tpu_custom_call.1} parent=1 // pred_region
      %59 = vsyncadd [#allocation8], 0
      %s60 = sshll.u32 %s3, 4
      %s61 = int_to_ptr.hbm [resolvable:$true] %s60
      %s62 = sshll.u32 [#allocation7], 4
      %s63 = int_to_ptr.vmem [resolvable:$true] %s62
      %68 = dma.hbm_to_vmem [thread:$0]  %s61, 640, %s63, [#allocation8], 128, 128, 8
    $region17: #{tpu_custom_call.1} parent=1 // pred_fallthru
      _
    // Predicated region
    $region18: #{tpu_custom_call.1} parent=1 // pred_check
      _
    $region19: #{tpu_custom_call.1} parent=1 // pred_check_branch
      %70 = sbr.rel (0) target = $region21
    $region20: #{tpu_custom_call.1} parent=1 // pred_region
      %72 = vsyncadd [#allocation8], 0
      %s73 = sshll.u32 %s4, 4
      %s74 = int_to_ptr.hbm [resolvable:$true] %s73
      %s75 = sshll.u32 [#allocation9], 4
      %s76 = int_to_ptr.vmem [resolvable:$true] %s75
      %81 = dma.hbm_to_vmem [thread:$0]  %s74, 49152, %s76, [#allocation8], 256, 256, 16
    $region21: #{tpu_custom_call.1} parent=1 // pred_fallthru
      _
    // Predicated region
    $region22: #{tpu_custom_call.1} parent=1 // pred_check
      _
    $region23: #{tpu_custom_call.1} parent=1 // pred_check_branch
      %83 = sbr.rel (0) target = $region25
    $region24: #{tpu_custom_call.1} parent=1 // pred_region
      %85 = vsyncadd [#allocation11], 0
      %s86 = sshll.u32 %s5, 4
      %s87 = int_to_ptr.hbm [resolvable:$true] %s86
      %s88 = sshll.u32 [#allocation10], 4
      %s89 = int_to_ptr.vmem [resolvable:$true] %s88
      %94 = dma.hbm_to_vmem [thread:$0]  %s87, 256, %s89, [#allocation11], 32, 32, 2
    $region25: #{tpu_custom_call.1} parent=1 // pred_fallthru
      _
    // Predicated region
    $region26: #{tpu_custom_call.1} parent=1 // pred_check
      _
    $region27: #{tpu_custom_call.1} parent=1 // pred_check_branch
      %96 = sbr.rel (0) target = $region29
    $region28: #{tpu_custom_call.1} parent=1 // pred_region
      %98 = vsyncadd [#allocation11], 0
      %s99 = sshll.u32 %s6, 4
      %s100 = int_to_ptr.hbm [resolvable:$true] %s99
      %s101 = sshll.u32 [#allocation12], 4
      %s102 = int_to_ptr.vmem [resolvable:$true] %s101
      %107 = dma.hbm_to_vmem [thread:$0]  %s100, 49152, %s102, [#allocation11], 256, 256, 16
    $region29: #{tpu_custom_call.1} parent=1 // pred_fallthru
      _
    // Predicated region
    $region30: #{tpu_custom_call.1} parent=1 // pred_check
      _
    $region31: #{tpu_custom_call.1} parent=1 // pred_check_branch
      %109 = sbr.rel (0) target = $region33
    $region32: #{tpu_custom_call.1} parent=1 // pred_region
      %111 = vsyncadd [#allocation14], 0
      %s112 = sshll.u32 %s7, 4
      %s113 = int_to_ptr.hbm [resolvable:$true] %s112
      %s114 = sshll.u32 [#allocation13], 4
      %s115 = int_to_ptr.vmem [resolvable:$true] %s114
      %120 = dma.hbm_to_vmem [thread:$0]  %s113, 24576, %s115, [#allocation14], 256, 256, 16
    $region33: #{tpu_custom_call.1} parent=1 // pred_fallthru
      _
    // Predicated region
    $region34: #{tpu_custom_call.1} parent=1 // pred_check
      _
    $region35: #{tpu_custom_call.1} parent=1 // pred_check_branch
      %122 = sbr.rel (0) target = $region37
    $region36: #{tpu_custom_call.1} parent=1 // pred_region
      %124 = vsyncadd [#allocation14], 0
      %s125 = sshll.u32 %s8, 4
      %s126 = int_to_ptr.hbm [resolvable:$true] %s125
      %s127 = sshll.u32 [#allocation15], 4
      %s128 = int_to_ptr.vmem [resolvable:$true] %s127
      %133 = dma.hbm_to_vmem [thread:$0]  %s126, 4096, %s128, [#allocation14], 128, 128, 8
    $region37: #{tpu_custom_call.1} parent=1 // pred_fallthru
      _
    // Predicated region
    $region38: #{tpu_custom_call.1} parent=1 // pred_check
      _
    $region39: #{tpu_custom_call.1} parent=1 // pred_check_branch
      %135 = sbr.rel (0) target = $region41
    $region40: #{tpu_custom_call.1} parent=1 // pred_region
      _
    $region41: #{tpu_custom_call.1} parent=1 // pred_fallthru
      _
    // Predicated region
    $region42: #{tpu_custom_call.1} parent=1 // pred_check
      _
    $region43: #{tpu_custom_call.1} parent=1 // pred_check_branch
      %137 = sbr.rel (0) target = $region45
    $region44: #{tpu_custom_call.1} parent=1 // pred_region
      _
    $region45: #{tpu_custom_call.1} parent=1 // pred_fallthru
      _
    // Predicated region
    $region46: #{tpu_custom_call.1} parent=1 // pred_check
      _
    $region47: #{tpu_custom_call.1} parent=1 // pred_check_branch
      %139 = sbr.rel (0) target = $region49
    $region48: #{tpu_custom_call.1} parent=1 // pred_region
      %141 = vsyncadd [#allocation17], 0
      %s143 = sshll.u32 %s11, 4
      %s144 = int_to_ptr.hbm [resolvable:$true] %s143
      %s145 = sshll.u32 [#allocation16], 4
      %s146 = int_to_ptr.vmem [resolvable:$true] %s145
      %148 = dma.hbm_to_vmem [thread:$0]  %s144, 192, %s146, [#allocation17]
    $region49: #{tpu_custom_call.1} parent=1 // pred_fallthru
      _
    // Predicated region
    $region50: #{tpu_custom_call.1} parent=1 // pred_check
      _
    $region51: #{tpu_custom_call.1} parent=1 // pred_check_branch
      %150 = sbr.rel (0) target = $region53
    $region52: #{tpu_custom_call.1} parent=1 // pred_region
      %152 = dma.done [#allocation3], 128
    $region53: #{tpu_custom_call.1} parent=1 // pred_fallthru
      _
    // Predicated region
    $region54: #{tpu_custom_call.1} parent=1 // pred_check
      _
    $region55: #{tpu_custom_call.1} parent=1 // pred_check_branch
      %154 = sbr.rel (0) target = $region57
    $region56: #{tpu_custom_call.1} parent=1 // pred_region
      %156 = dma.done [#allocation5], 128
    $region57: #{tpu_custom_call.1} parent=1 // pred_fallthru
      _
    // Predicated region
    $region58: #{tpu_custom_call.1} parent=1 // pred_check
      _
    $region59: #{tpu_custom_call.1} parent=1 // pred_check_branch
      %158 = sbr.rel (0) target = $region61
    $region60: #{tpu_custom_call.1} parent=1 // pred_region
      %160 = dma.done [#allocation5], 768
    $region61: #{tpu_custom_call.1} parent=1 // pred_fallthru
      _
    // Predicated region
    $region62: #{tpu_custom_call.1} parent=1 // pred_check
      _
    $region63: #{tpu_custom_call.1} parent=1 // pred_check_branch
      %162 = sbr.rel (0) target = $region65
    $region64: #{tpu_custom_call.1} parent=1 // pred_region
      %164 = dma.done [#allocation8], 640
    $region65: #{tpu_custom_call.1} parent=1 // pred_fallthru
      _
    // Predicated region
    $region66: #{tpu_custom_call.1} parent=1 // pred_check
      _
    $region67: #{tpu_custom_call.1} parent=1 // pred_check_branch
      %166 = sbr.rel (0) target = $region69
    $region68: #{tpu_custom_call.1} parent=1 // pred_region
      %168 = dma.done [#allocation8], 49152
    $region69: #{tpu_custom_call.1} parent=1 // pred_fallthru
      _
    // Predicated region
    $region70: #{tpu_custom_call.1} parent=1 // pred_check
      _
    $region71: #{tpu_custom_call.1} parent=1 // pred_check_branch
      %170 = sbr.rel (0) target = $region73
    $region72: #{tpu_custom_call.1} parent=1 // pred_region
      %172 = dma.done [#allocation11], 256
    $region73: #{tpu_custom_call.1} parent=1 // pred_fallthru
      _
    // Predicated region
    $region74: #{tpu_custom_call.1} parent=1 // pred_check
      _
    $region75: #{tpu_custom_call.1} parent=1 // pred_check_branch
      %174 = sbr.rel (0) target = $region77
    $region76: #{tpu_custom_call.1} parent=1 // pred_region
      %176 = dma.done [#allocation11], 49152
    $region77: #{tpu_custom_call.1} parent=1 // pred_fallthru
      _
    // Predicated region
    $region78: #{tpu_custom_call.1} parent=1 // pred_check
      _
    $region79: #{tpu_custom_call.1} parent=1 // pred_check_branch
      %178 = sbr.rel (0) target = $region81
    $region80: #{tpu_custom_call.1} parent=1 // pred_region
      %180 = dma.done [#allocation14], 24576
    $region81: #{tpu_custom_call.1} parent=1 // pred_fallthru
      _
    // Predicated region
    $region82: #{tpu_custom_call.1} parent=1 // pred_check
      _
    $region83: #{tpu_custom_call.1} parent=1 // pred_check_branch
      %182 = sbr.rel (0) target = $region85
    $region84: #{tpu_custom_call.1} parent=1 // pred_region
      %184 = dma.done [#allocation14], 4096
    $region85: #{tpu_custom_call.1} parent=1 // pred_fallthru
      _
    // Predicated region
    $region86: #{tpu_custom_call.1} parent=1 // pred_check
      _
    $region87: #{tpu_custom_call.1} parent=1 // pred_check_branch
      %186 = sbr.rel (0) target = $region89
    $region88: #{tpu_custom_call.1} parent=1 // pred_region
      %188 = dma.done [#allocation17], 192
    $region89: #{tpu_custom_call.1} parent=1 // pred_fallthru
      _
    %v189 = vld [vmem:[#allocation2] sm:$0xff]
    %v190 = vld [vmem:[#allocation7] sm:$0xff]
    %v191 = vld [vmem:[#allocation7 + $0x8] sm:$0xff]
    %v192 = vld [vmem:[#allocation7 + $0x10] sm:$0xff]
    %v193 = vld [vmem:[#allocation7 + $0x18] sm:$0xff]
    %v194 = vld [vmem:[#allocation7 + $0x20] sm:$0x1]
    %v195 = vld [vmem:[#allocation16] sm:$0x1]
    %v197 = vperm.slane %v195, 0
    %vm199 = vcmask 269312
    %v201 = vsel %vm199, %v189, 0
    %vm203 = vcmask 1040384
    %v205 = vsel %vm203, %v194, 0
    %207 = vmatpush.msra.mxu0 0.0
    %208 = vmatpush.msra.mxu0 0.0
    %209 = vmatpush.msra.mxu0 0.0
    %210 = vmatpush.msra.mxu0 0.0
    %211 = vmatpush.msra.mxu0 0.0
    %212 = vmatpush.msra.mxu0 0.0
    %213 = vmatpush.msra.mxu0 0.0
    %214 = vmatpush.msra.mxu0 0.0
    %215 = vmatpush.msra.mxu0 0.0
    %216 = vmatpush.msra.mxu0 0.0
    %217 = vmatpush.msra.mxu0 0.0
    %218 = vmatpush.msra.mxu0 %v205
    %219 = vmatpush.msra.mxu0 %v193
    %220 = vmatpush.msra.mxu0 %v192
    %221 = vmatpush.msra.mxu0 %v191
    %222 = vmatpush.msra.mxu0 %v190
    %223 = vmatmul.f32.gmra.mxu0 %v201
    %v224 = vpop.f32.mrf.mxu0
    %v225 = vadd.f32 %v197, %v224
    %226 = vdwg.mxu0
    %v227 = vmax.f32 %v225, 0.0
    %v228 = vld [vmem:[#allocation16 + $0x1] sm:$0x1]
    %v229 = vld [vmem:[#allocation16 + $0x2] sm:$0x1]
    %230 = vadd.xlane.f32.xlu0 %v227
    %v231 = vpop.xlane.xlu0 %230
    %v232 = vrcp.pop 128.0
    %v233 = vmul.f32 128.0, %v232
    %v234 = vsub.f32 1.0, %v233
    %v235 = vmul.f32 %v232, %v234
    %v236 = vadd.f32 %v232, %v235
    %vm237 = vweird.f32 %v232
    %v238 = vsel %vm237, %v232, %v236
    %v239 = vmul.f32 %v231, %v238
    %v240 = vsub.f32 %v227, %v239
    %v241 = vmul.f32 %v240, %v240
    %242 = vadd.xlane.f32.xlu0 %v241
    %v243 = vpop.xlane.xlu0 %242
    %v244 = vmul.f32 %v243, %v238
    %v245 = vadd.f32 %v244, 1e-05
    %v246 = vrsqrt.pop %v245
    %v247 = vmul.f32 %v246, %v245
    %v248 = vmul.f32 %v247, %v246
    %v249 = vmul.f32 0.5, %v248
    %v250 = vsub.f32 1.5, %v249
    %v251 = vmul.f32 %v246, %v250
    %vm252 = vweird.f32 %v245
    %vm253 = vweird.f32 %v246
    %vm254 = vmor %vm252, %vm253
    %v255 = vsel %vm254, %v246, %v251
    %v256 = vmul.f32 %v240, %v255
    %v258 = vperm.slane %v228, 0
    %v260 = vmul.f32 %v256, %v258
    %v262 = vperm.slane %v229, 0
    %v264 = vadd.f32 %v260, %v262
    %v265 = vld [vmem:[#allocation4] sm:$0xff]
    %v266 = vld [vmem:[#allocation6] sm:$0xff]
    %v267 = vld [vmem:[#allocation6 + $0x8] sm:$0xff]
    %v268 = vld [vmem:[#allocation6 + $0x10] sm:$0xff]
    %v269 = vld [vmem:[#allocation6 + $0x18] sm:$0xff]
    %v270 = vld [vmem:[#allocation6 + $0x20] sm:$0xff]
    %v271 = vld [vmem:[#allocation6 + $0x28] sm:$0xff]
    %v272 = vld [vmem:[#allocation13] sm:$0xff]
    %v273 = vld [vmem:[#allocation13 + $0x8] sm:$0xff]
    %v274 = vld [vmem:[#allocation13 + $0x10] sm:$0xff]
    %v275 = vld [vmem:[#allocation13 + $0x18] sm:$0xff]
    %v276 = vld [vmem:[#allocation13 + $0x20] sm:$0xff]
    %v277 = vld [vmem:[#allocation13 + $0x28] sm:$0xff]
    %v278 = vld [vmem:[#allocation13 + $0x30] sm:$0xff]
    %v279 = vld [vmem:[#allocation13 + $0x38] sm:$0xff]
    %v280 = vld [vmem:[#allocation13 + $0x40] sm:$0xff]
    %v281 = vld [vmem:[#allocation13 + $0x48] sm:$0xff]
    %v282 = vld [vmem:[#allocation13 + $0x50] sm:$0xff]
    %v283 = vld [vmem:[#allocation13 + $0x58] sm:$0xff]
    %v284 = vld [vmem:[#allocation13 + $0x60] sm:$0xff]
    %v285 = vld [vmem:[#allocation13 + $0x68] sm:$0xff]
    %v286 = vld [vmem:[#allocation13 + $0x70] sm:$0xff]
    %v287 = vld [vmem:[#allocation13 + $0x78] sm:$0xff]
    %v288 = vld [vmem:[#allocation13 + $0x80] sm:$0xff]
    %v289 = vld [vmem:[#allocation13 + $0x88] sm:$0xff]
    %v290 = vld [vmem:[#allocation13 + $0x90] sm:$0xff]
    %v291 = vld [vmem:[#allocation13 + $0x98] sm:$0xff]
    %v292 = vld [vmem:[#allocation13 + $0xa0] sm:$0xff]
    %v293 = vld [vmem:[#allocation13 + $0xa8] sm:$0xff]
    %v294 = vld [vmem:[#allocation13 + $0xb0] sm:$0xff]
    %v295 = vld [vmem:[#allocation13 + $0xb8] sm:$0xff]
    %v296 = vld [vmem:[#allocation13 + $0xc0] sm:$0xff]
    %v297 = vld [vmem:[#allocation13 + $0xc8] sm:$0xff]
    %v298 = vld [vmem:[#allocation13 + $0xd0] sm:$0xff]
    %v299 = vld [vmem:[#allocation13 + $0xd8] sm:$0xff]
    %v300 = vld [vmem:[#allocation13 + $0xe0] sm:$0xff]
    %v301 = vld [vmem:[#allocation13 + $0xe8] sm:$0xff]
    %v302 = vld [vmem:[#allocation13 + $0xf0] sm:$0xff]
    %v303 = vld [vmem:[#allocation13 + $0xf8] sm:$0xff]
    %v304 = vld [vmem:[#allocation13 + $0x100] sm:$0xff]
    %v305 = vld [vmem:[#allocation13 + $0x108] sm:$0xff]
    %v306 = vld [vmem:[#allocation13 + $0x110] sm:$0xff]
    %v307 = vld [vmem:[#allocation13 + $0x118] sm:$0xff]
    %v308 = vld [vmem:[#allocation13 + $0x120] sm:$0xff]
    %v309 = vld [vmem:[#allocation13 + $0x128] sm:$0xff]
    %v310 = vld [vmem:[#allocation13 + $0x130] sm:$0xff]
    %v311 = vld [vmem:[#allocation13 + $0x138] sm:$0xff]
    %v312 = vld [vmem:[#allocation13 + $0x140] sm:$0xff]
    %v313 = vld [vmem:[#allocation13 + $0x148] sm:$0xff]
    %v314 = vld [vmem:[#allocation13 + $0x150] sm:$0xff]
    %v315 = vld [vmem:[#allocation13 + $0x158] sm:$0xff]
    %v316 = vld [vmem:[#allocation13 + $0x160] sm:$0xff]
    %v317 = vld [vmem:[#allocation13 + $0x168] sm:$0xff]
    %v318 = vld [vmem:[#allocation13 + $0x170] sm:$0xff]
    %v319 = vld [vmem:[#allocation13 + $0x178] sm:$0xff]
    %v320 = vld [vmem:[#allocation13 + $0x180] sm:$0xff]
    %v321 = vld [vmem:[#allocation13 + $0x188] sm:$0xff]
    %v322 = vld [vmem:[#allocation13 + $0x190] sm:$0xff]
    %v323 = vld [vmem:[#allocation13 + $0x198] sm:$0xff]
    %v324 = vld [vmem:[#allocation13 + $0x1a0] sm:$0xff]
    %v325 = vld [vmem:[#allocation13 + $0x1a8] sm:$0xff]
    %v326 = vld [vmem:[#allocation13 + $0x1b0] sm:$0xff]
    %v327 = vld [vmem:[#allocation13 + $0x1b8] sm:$0xff]
    %v328 = vld [vmem:[#allocation13 + $0x1c0] sm:$0xff]
    %v329 = vld [vmem:[#allocation13 + $0x1c8] sm:$0xff]
    %v330 = vld [vmem:[#allocation13 + $0x1d0] sm:$0xff]
    %v331 = vld [vmem:[#allocation13 + $0x1d8] sm:$0xff]
    %v332 = vld [vmem:[#allocation13 + $0x1e0] sm:$0xff]
    %v333 = vld [vmem:[#allocation13 + $0x1e8] sm:$0xff]
    %v334 = vld [vmem:[#allocation13 + $0x1f0] sm:$0xff]
    %v335 = vld [vmem:[#allocation13 + $0x1f8] sm:$0xff]
    %v336 = vld [vmem:[#allocation13 + $0x200] sm:$0xff]
    %v337 = vld [vmem:[#allocation13 + $0x208] sm:$0xff]
    %v338 = vld [vmem:[#allocation13 + $0x210] sm:$0xff]
    %v339 = vld [vmem:[#allocation13 + $0x218] sm:$0xff]
    %v340 = vld [vmem:[#allocation13 + $0x220] sm:$0xff]
    %v341 = vld [vmem:[#allocation13 + $0x228] sm:$0xff]
    %v342 = vld [vmem:[#allocation13 + $0x230] sm:$0xff]
    %v343 = vld [vmem:[#allocation13 + $0x238] sm:$0xff]
    %v344 = vld [vmem:[#allocation13 + $0x240] sm:$0xff]
    %v345 = vld [vmem:[#allocation13 + $0x248] sm:$0xff]
    %v346 = vld [vmem:[#allocation13 + $0x250] sm:$0xff]
    %v347 = vld [vmem:[#allocation13 + $0x258] sm:$0xff]
    %v348 = vld [vmem:[#allocation13 + $0x260] sm:$0xff]
    %v349 = vld [vmem:[#allocation13 + $0x268] sm:$0xff]
    %v350 = vld [vmem:[#allocation13 + $0x270] sm:$0xff]
    %v351 = vld [vmem:[#allocation13 + $0x278] sm:$0xff]
    %v352 = vld [vmem:[#allocation13 + $0x280] sm:$0xff]
    %v353 = vld [vmem:[#allocation13 + $0x288] sm:$0xff]
    %v354 = vld [vmem:[#allocation13 + $0x290] sm:$0xff]
    %v355 = vld [vmem:[#allocation13 + $0x298] sm:$0xff]
    %v356 = vld [vmem:[#allocation13 + $0x2a0] sm:$0xff]
    %v357 = vld [vmem:[#allocation13 + $0x2a8] sm:$0xff]
    %v358 = vld [vmem:[#allocation13 + $0x2b0] sm:$0xff]
    %v359 = vld [vmem:[#allocation13 + $0x2b8] sm:$0xff]
    %v360 = vld [vmem:[#allocation13 + $0x2c0] sm:$0xff]
    %v361 = vld [vmem:[#allocation13 + $0x2c8] sm:$0xff]
    %v362 = vld [vmem:[#allocation13 + $0x2d0] sm:$0xff]
    %v363 = vld [vmem:[#allocation13 + $0x2d8] sm:$0xff]
    %v364 = vld [vmem:[#allocation13 + $0x2e0] sm:$0xff]
    %v365 = vld [vmem:[#allocation13 + $0x2e8] sm:$0xff]
    %v366 = vld [vmem:[#allocation13 + $0x2f0] sm:$0xff]
    %v367 = vld [vmem:[#allocation13 + $0x2f8] sm:$0xff]
    %v368 = vld [vmem:[#allocation13 + $0x300] sm:$0xff]
    %v369 = vld [vmem:[#allocation13 + $0x308] sm:$0xff]
    %v370 = vld [vmem:[#allocation13 + $0x310] sm:$0xff]
    %v371 = vld [vmem:[#allocation13 + $0x318] sm:$0xff]
    %v372 = vld [vmem:[#allocation13 + $0x320] sm:$0xff]
    %v373 = vld [vmem:[#allocation13 + $0x328] sm:$0xff]
    %v374 = vld [vmem:[#allocation13 + $0x330] sm:$0xff]
    %v375 = vld [vmem:[#allocation13 + $0x338] sm:$0xff]
    %v376 = vld [vmem:[#allocation13 + $0x340] sm:$0xff]
    %v377 = vld [vmem:[#allocation13 + $0x348] sm:$0xff]
    %v378 = vld [vmem:[#allocation13 + $0x350] sm:$0xff]
    %v379 = vld [vmem:[#allocation13 + $0x358] sm:$0xff]
    %v380 = vld [vmem:[#allocation13 + $0x360] sm:$0xff]
    %v381 = vld [vmem:[#allocation13 + $0x368] sm:$0xff]
    %v382 = vld [vmem:[#allocation13 + $0x370] sm:$0xff]
    %v383 = vld [vmem:[#allocation13 + $0x378] sm:$0xff]
    %v384 = vld [vmem:[#allocation13 + $0x380] sm:$0xff]
    %v385 = vld [vmem:[#allocation13 + $0x388] sm:$0xff]
    %v386 = vld [vmem:[#allocation13 + $0x390] sm:$0xff]
    %v387 = vld [vmem:[#allocation13 + $0x398] sm:$0xff]
    %v388 = vld [vmem:[#allocation13 + $0x3a0] sm:$0xff]
    %v389 = vld [vmem:[#allocation13 + $0x3a8] sm:$0xff]
    %v390 = vld [vmem:[#allocation13 + $0x3b0] sm:$0xff]
    %v391 = vld [vmem:[#allocation13 + $0x3b8] sm:$0xff]
    %v392 = vld [vmem:[#allocation13 + $0x3c0] sm:$0xff]
    %v393 = vld [vmem:[#allocation13 + $0x3c8] sm:$0xff]
    %v394 = vld [vmem:[#allocation13 + $0x3d0] sm:$0xff]
    %v395 = vld [vmem:[#allocation13 + $0x3d8] sm:$0xff]
    %v396 = vld [vmem:[#allocation13 + $0x3e0] sm:$0xff]
    %v397 = vld [vmem:[#allocation13 + $0x3e8] sm:$0xff]
    %v398 = vld [vmem:[#allocation13 + $0x3f0] sm:$0xff]
    %v399 = vld [vmem:[#allocation13 + $0x3f8] sm:$0xff]
    %v400 = vld [vmem:[#allocation13 + $0x400] sm:$0xff]
    %v401 = vld [vmem:[#allocation13 + $0x408] sm:$0xff]
    %v402 = vld [vmem:[#allocation13 + $0x410] sm:$0xff]
    %v403 = vld [vmem:[#allocation13 + $0x418] sm:$0xff]
    %v404 = vld [vmem:[#allocation13 + $0x420] sm:$0xff]
    %v405 = vld [vmem:[#allocation13 + $0x428] sm:$0xff]
    %v406 = vld [vmem:[#allocation13 + $0x430] sm:$0xff]
    %v407 = vld [vmem:[#allocation13 + $0x438] sm:$0xff]
    %v408 = vld [vmem:[#allocation13 + $0x440] sm:$0xff]
    %v409 = vld [vmem:[#allocation13 + $0x448] sm:$0xff]
    %v410 = vld [vmem:[#allocation13 + $0x450] sm:$0xff]
    %v411 = vld [vmem:[#allocation13 + $0x458] sm:$0xff]
    %v412 = vld [vmem:[#allocation13 + $0x460] sm:$0xff]
    %v413 = vld [vmem:[#allocation13 + $0x468] sm:$0xff]
    %v414 = vld [vmem:[#allocation13 + $0x470] sm:$0xff]
    %v415 = vld [vmem:[#allocation13 + $0x478] sm:$0xff]
    %v416 = vld [vmem:[#allocation13 + $0x480] sm:$0xff]
    %v417 = vld [vmem:[#allocation13 + $0x488] sm:$0xff]
    %v418 = vld [vmem:[#allocation13 + $0x490] sm:$0xff]
    %v419 = vld [vmem:[#allocation13 + $0x498] sm:$0xff]
    %v420 = vld [vmem:[#allocation13 + $0x4a0] sm:$0xff]
    %v421 = vld [vmem:[#allocation13 + $0x4a8] sm:$0xff]
    %v422 = vld [vmem:[#allocation13 + $0x4b0] sm:$0xff]
    %v423 = vld [vmem:[#allocation13 + $0x4b8] sm:$0xff]
    %v424 = vld [vmem:[#allocation13 + $0x4c0] sm:$0xff]
    %v425 = vld [vmem:[#allocation13 + $0x4c8] sm:$0xff]
    %v426 = vld [vmem:[#allocation13 + $0x4d0] sm:$0xff]
    %v427 = vld [vmem:[#allocation13 + $0x4d8] sm:$0xff]
    %v428 = vld [vmem:[#allocation13 + $0x4e0] sm:$0xff]
    %v429 = vld [vmem:[#allocation13 + $0x4e8] sm:$0xff]
    %v430 = vld [vmem:[#allocation13 + $0x4f0] sm:$0xff]
    %v431 = vld [vmem:[#allocation13 + $0x4f8] sm:$0xff]
    %v432 = vld [vmem:[#allocation13 + $0x500] sm:$0xff]
    %v433 = vld [vmem:[#allocation13 + $0x508] sm:$0xff]
    %v434 = vld [vmem:[#allocation13 + $0x510] sm:$0xff]
    %v435 = vld [vmem:[#allocation13 + $0x518] sm:$0xff]
    %v436 = vld [vmem:[#allocation13 + $0x520] sm:$0xff]
    %v437 = vld [vmem:[#allocation13 + $0x528] sm:$0xff]
    %v438 = vld [vmem:[#allocation13 + $0x530] sm:$0xff]
    %v439 = vld [vmem:[#allocation13 + $0x538] sm:$0xff]
    %v440 = vld [vmem:[#allocation13 + $0x540] sm:$0xff]
    %v441 = vld [vmem:[#allocation13 + $0x548] sm:$0xff]
    %v442 = vld [vmem:[#allocation13 + $0x550] sm:$0xff]
    %v443 = vld [vmem:[#allocation13 + $0x558] sm:$0xff]
    %v444 = vld [vmem:[#allocation13 + $0x560] sm:$0xff]
    %v445 = vld [vmem:[#allocation13 + $0x568] sm:$0xff]
    %v446 = vld [vmem:[#allocation13 + $0x570] sm:$0xff]
    %v447 = vld [vmem:[#allocation13 + $0x578] sm:$0xff]
    %v448 = vld [vmem:[#allocation13 + $0x580] sm:$0xff]
    %v449 = vld [vmem:[#allocation13 + $0x588] sm:$0xff]
    %v450 = vld [vmem:[#allocation13 + $0x590] sm:$0xff]
    %v451 = vld [vmem:[#allocation13 + $0x598] sm:$0xff]
    %v452 = vld [vmem:[#allocation13 + $0x5a0] sm:$0xff]
    %v453 = vld [vmem:[#allocation13 + $0x5a8] sm:$0xff]
    %v454 = vld [vmem:[#allocation13 + $0x5b0] sm:$0xff]
    %v455 = vld [vmem:[#allocation13 + $0x5b8] sm:$0xff]
    %v456 = vld [vmem:[#allocation13 + $0x5c0] sm:$0xff]
    %v457 = vld [vmem:[#allocation13 + $0x5c8] sm:$0xff]
    %v458 = vld [vmem:[#allocation13 + $0x5d0] sm:$0xff]
    %v459 = vld [vmem:[#allocation13 + $0x5d8] sm:$0xff]
    %v460 = vld [vmem:[#allocation13 + $0x5e0] sm:$0xff]
    %v461 = vld [vmem:[#allocation13 + $0x5e8] sm:$0xff]
    %v462 = vld [vmem:[#allocation13 + $0x5f0] sm:$0xff]
    %v463 = vld [vmem:[#allocation13 + $0x5f8] sm:$0xff]
    %v464 = vld [vmem:[#allocation16 + $0x3] sm:$0x3]
    %v466 = vperm.slane %v464, 0
    %v467 = vperm.slane %v464, 1
    %470 = vmatpush.msra.mxu0 %v302
    %471 = vmatpush.msra.mxu0 %v300
    %472 = vmatpush.msra.mxu0 %v298
    %473 = vmatpush.msra.mxu0 %v296
    %474 = vmatpush.msra.mxu0 %v294
    %475 = vmatpush.msra.mxu0 %v292
    %476 = vmatpush.msra.mxu0 %v290
    %477 = vmatpush.msra.mxu0 %v288
    %478 = vmatpush.msra.mxu0 %v286
    %479 = vmatpush.msra.mxu0 %v284
    %480 = vmatpush.msra.mxu0 %v282
    %481 = vmatpush.msra.mxu0 %v280
    %482 = vmatpush.msra.mxu0 %v278
    %483 = vmatpush.msra.mxu0 %v276
    %484 = vmatpush.msra.mxu0 %v274
    %485 = vmatpush.msra.mxu0 %v272
    %486 = vmatmul.f32.gmra.mxu0 %v266
    %v487 = vpop.f32.mrf.mxu0
    %v488 = vadd.f32 %v466, %v487
    %489 = vdwg.mxu0
    %490 = vmatpush.msra.mxu0 %v334
    %491 = vmatpush.msra.mxu0 %v332
    %492 = vmatpush.msra.mxu0 %v330
    %493 = vmatpush.msra.mxu0 %v328
    %494 = vmatpush.msra.mxu0 %v326
    %495 = vmatpush.msra.mxu0 %v324
    %496 = vmatpush.msra.mxu0 %v322
    %497 = vmatpush.msra.mxu0 %v320
    %498 = vmatpush.msra.mxu0 %v318
    %499 = vmatpush.msra.mxu0 %v316
    %500 = vmatpush.msra.mxu0 %v314
    %501 = vmatpush.msra.mxu0 %v312
    %502 = vmatpush.msra.mxu0 %v310
    %503 = vmatpush.msra.mxu0 %v308
    %504 = vmatpush.msra.mxu0 %v306
    %505 = vmatpush.msra.mxu0 %v304
    %506 = vmatmul.f32.gmra.mxu0 %v267
    %v507 = vpop.f32.mrf.mxu0
    %v508 = vadd.f32 %v488, %v507
    %509 = vdwg.mxu0
    %510 = vmatpush.msra.mxu0 %v366
    %511 = vmatpush.msra.mxu0 %v364
    %512 = vmatpush.msra.mxu0 %v362
    %513 = vmatpush.msra.mxu0 %v360
    %514 = vmatpush.msra.mxu0 %v358
    %515 = vmatpush.msra.mxu0 %v356
    %516 = vmatpush.msra.mxu0 %v354
    %517 = vmatpush.msra.mxu0 %v352
    %518 = vmatpush.msra.mxu0 %v350
    %519 = vmatpush.msra.mxu0 %v348
    %520 = vmatpush.msra.mxu0 %v346
    %521 = vmatpush.msra.mxu0 %v344
    %522 = vmatpush.msra.mxu0 %v342
    %523 = vmatpush.msra.mxu0 %v340
    %524 = vmatpush.msra.mxu0 %v338
    %525 = vmatpush.msra.mxu0 %v336
    %526 = vmatmul.f32.gmra.mxu0 %v268
    %v527 = vpop.f32.mrf.mxu0
    %v528 = vadd.f32 %v508, %v527
    %529 = vdwg.mxu0
    %530 = vmatpush.msra.mxu0 %v398
    %531 = vmatpush.msra.mxu0 %v396
    %532 = vmatpush.msra.mxu0 %v394
    %533 = vmatpush.msra.mxu0 %v392
    %534 = vmatpush.msra.mxu0 %v390
    %535 = vmatpush.msra.mxu0 %v388
    %536 = vmatpush.msra.mxu0 %v386
    %537 = vmatpush.msra.mxu0 %v384
    %538 = vmatpush.msra.mxu0 %v382
    %539 = vmatpush.msra.mxu0 %v380
    %540 = vmatpush.msra.mxu0 %v378
    %541 = vmatpush.msra.mxu0 %v376
    %542 = vmatpush.msra.mxu0 %v374
    %543 = vmatpush.msra.mxu0 %v372
    %544 = vmatpush.msra.mxu0 %v370
    %545 = vmatpush.msra.mxu0 %v368
    %546 = vmatmul.f32.gmra.mxu0 %v269
    %v547 = vpop.f32.mrf.mxu0
    %v548 = vadd.f32 %v528, %v547
    %549 = vdwg.mxu0
    %550 = vmatpush.msra.mxu0 %v430
    %551 = vmatpush.msra.mxu0 %v428
    %552 = vmatpush.msra.mxu0 %v426
    %553 = vmatpush.msra.mxu0 %v424
    %554 = vmatpush.msra.mxu0 %v422
    %555 = vmatpush.msra.mxu0 %v420
    %556 = vmatpush.msra.mxu0 %v418
    %557 = vmatpush.msra.mxu0 %v416
    %558 = vmatpush.msra.mxu0 %v414
    %559 = vmatpush.msra.mxu0 %v412
    %560 = vmatpush.msra.mxu0 %v410
    %561 = vmatpush.msra.mxu0 %v408
    %562 = vmatpush.msra.mxu0 %v406
    %563 = vmatpush.msra.mxu0 %v404
    %564 = vmatpush.msra.mxu0 %v402
    %565 = vmatpush.msra.mxu0 %v400
    %566 = vmatmul.f32.gmra.mxu0 %v270
    %v567 = vpop.f32.mrf.mxu0
    %v568 = vadd.f32 %v548, %v567
    %569 = vdwg.mxu0
    %570 = vmatpush.msra.mxu0 %v462
    %571 = vmatpush.msra.mxu0 %v460
    %572 = vmatpush.msra.mxu0 %v458
    %573 = vmatpush.msra.mxu0 %v456
    %574 = vmatpush.msra.mxu0 %v454
    %575 = vmatpush.msra.mxu0 %v452
    %576 = vmatpush.msra.mxu0 %v450
    %577 = vmatpush.msra.mxu0 %v448
    %578 = vmatpush.msra.mxu0 %v446
    %579 = vmatpush.msra.mxu0 %v444
    %580 = vmatpush.msra.mxu0 %v442
    %581 = vmatpush.msra.mxu0 %v440
    %582 = vmatpush.msra.mxu0 %v438
    %583 = vmatpush.msra.mxu0 %v436
    %584 = vmatpush.msra.mxu0 %v434
    %585 = vmatpush.msra.mxu0 %v432
    %586 = vmatmul.f32.gmra.mxu0 %v271
    %v587 = vpop.f32.mrf.mxu0
    %v588 = vadd.f32 %v568, %v587
    %589 = vdwg.mxu0
    %590 = vmatpush.msra.mxu0 %v303
    %591 = vmatpush.msra.mxu0 %v301
    %592 = vmatpush.msra.mxu0 %v299
    %593 = vmatpush.msra.mxu0 %v297
    %594 = vmatpush.msra.mxu0 %v295
    %595 = vmatpush.msra.mxu0 %v293
    %596 = vmatpush.msra.mxu0 %v291
    %597 = vmatpush.msra.mxu0 %v289
    %598 = vmatpush.msra.mxu0 %v287
    %599 = vmatpush.msra.mxu0 %v285
    %600 = vmatpush.msra.mxu0 %v283
    %601 = vmatpush.msra.mxu0 %v281
    %602 = vmatpush.msra.mxu0 %v279
    %603 = vmatpush.msra.mxu0 %v277
    %604 = vmatpush.msra.mxu0 %v275
    %605 = vmatpush.msra.mxu0 %v273
    %606 = vmatmul.f32.gmra.mxu0 %v266
    %v607 = vpop.f32.mrf.mxu0
    %v608 = vadd.f32 %v467, %v607
    %609 = vdwg.mxu0
    %610 = vmatpush.msra.mxu0 %v335
    %611 = vmatpush.msra.mxu0 %v333
    %612 = vmatpush.msra.mxu0 %v331
    %613 = vmatpush.msra.mxu0 %v329
    %614 = vmatpush.msra.mxu0 %v327
    %615 = vmatpush.msra.mxu0 %v325
    %616 = vmatpush.msra.mxu0 %v323
    %617 = vmatpush.msra.mxu0 %v321
    %618 = vmatpush.msra.mxu0 %v319
    %619 = vmatpush.msra.mxu0 %v317
    %620 = vmatpush.msra.mxu0 %v315
    %621 = vmatpush.msra.mxu0 %v313
    %622 = vmatpush.msra.mxu0 %v311
    %623 = vmatpush.msra.mxu0 %v309
    %624 = vmatpush.msra.mxu0 %v307
    %625 = vmatpush.msra.mxu0 %v305
    %626 = vmatmul.f32.gmra.mxu0 %v267
    %v627 = vpop.f32.mrf.mxu0
    %v628 = vadd.f32 %v608, %v627
    %629 = vdwg.mxu0
    %630 = vmatpush.msra.mxu0 %v367
    %631 = vmatpush.msra.mxu0 %v365
    %632 = vmatpush.msra.mxu0 %v363
    %633 = vmatpush.msra.mxu0 %v361
    %634 = vmatpush.msra.mxu0 %v359
    %635 = vmatpush.msra.mxu0 %v357
    %636 = vmatpush.msra.mxu0 %v355
    %637 = vmatpush.msra.mxu0 %v353
    %638 = vmatpush.msra.mxu0 %v351
    %639 = vmatpush.msra.mxu0 %v349
    %640 = vmatpush.msra.mxu0 %v347
    %641 = vmatpush.msra.mxu0 %v345
    %642 = vmatpush.msra.mxu0 %v343
    %643 = vmatpush.msra.mxu0 %v341
    %644 = vmatpush.msra.mxu0 %v339
    %645 = vmatpush.msra.mxu0 %v337
    %646 = vmatmul.f32.gmra.mxu0 %v268
    %v647 = vpop.f32.mrf.mxu0
    %v648 = vadd.f32 %v628, %v647
    %649 = vdwg.mxu0
    %650 = vmatpush.msra.mxu0 %v399
    %651 = vmatpush.msra.mxu0 %v397
    %652 = vmatpush.msra.mxu0 %v395
    %653 = vmatpush.msra.mxu0 %v393
    %654 = vmatpush.msra.mxu0 %v391
    %655 = vmatpush.msra.mxu0 %v389
    %656 = vmatpush.msra.mxu0 %v387
    %657 = vmatpush.msra.mxu0 %v385
    %658 = vmatpush.msra.mxu0 %v383
    %659 = vmatpush.msra.mxu0 %v381
    %660 = vmatpush.msra.mxu0 %v379
    %661 = vmatpush.msra.mxu0 %v377
    %662 = vmatpush.msra.mxu0 %v375
    %663 = vmatpush.msra.mxu0 %v373
    %664 = vmatpush.msra.mxu0 %v371
    %665 = vmatpush.msra.mxu0 %v369
    %666 = vmatmul.f32.gmra.mxu0 %v269
    %v667 = vpop.f32.mrf.mxu0
    %v668 = vadd.f32 %v648, %v667
    %669 = vdwg.mxu0
    %670 = vmatpush.msra.mxu0 %v431
    %671 = vmatpush.msra.mxu0 %v429
    %672 = vmatpush.msra.mxu0 %v427
    %673 = vmatpush.msra.mxu0 %v425
    %674 = vmatpush.msra.mxu0 %v423
    %675 = vmatpush.msra.mxu0 %v421
    %676 = vmatpush.msra.mxu0 %v419
    %677 = vmatpush.msra.mxu0 %v417
    %678 = vmatpush.msra.mxu0 %v415
    %679 = vmatpush.msra.mxu0 %v413
    %680 = vmatpush.msra.mxu0 %v411
    %681 = vmatpush.msra.mxu0 %v409
    %682 = vmatpush.msra.mxu0 %v407
    %683 = vmatpush.msra.mxu0 %v405
    %684 = vmatpush.msra.mxu0 %v403
    %685 = vmatpush.msra.mxu0 %v401
    %686 = vmatmul.f32.gmra.mxu0 %v270
    %v687 = vpop.f32.mrf.mxu0
    %v688 = vadd.f32 %v668, %v687
    %689 = vdwg.mxu0
    %690 = vmatpush.msra.mxu0 %v463
    %691 = vmatpush.msra.mxu0 %v461
    %692 = vmatpush.msra.mxu0 %v459
    %693 = vmatpush.msra.mxu0 %v457
    %694 = vmatpush.msra.mxu0 %v455
    %695 = vmatpush.msra.mxu0 %v453
    %696 = vmatpush.msra.mxu0 %v451
    %697 = vmatpush.msra.mxu0 %v449
    %698 = vmatpush.msra.mxu0 %v447
    %699 = vmatpush.msra.mxu0 %v445
    %700 = vmatpush.msra.mxu0 %v443
    %701 = vmatpush.msra.mxu0 %v441
    %702 = vmatpush.msra.mxu0 %v439
    %703 = vmatpush.msra.mxu0 %v437
    %704 = vmatpush.msra.mxu0 %v435
    %705 = vmatpush.msra.mxu0 %v433
    %706 = vmatmul.f32.gmra.mxu0 %v271
    %v707 = vpop.f32.mrf.mxu0
    %v708 = vadd.f32 %v688, %v707
    %709 = vdwg.mxu0
    %v710 = vld [vmem:[#allocation9] sm:$0xff]
    %v711 = vld [vmem:[#allocation9 + $0x8] sm:$0xff]
    %v712 = vld [vmem:[#allocation9 + $0x10] sm:$0xff]
    %v713 = vld [vmem:[#allocation9 + $0x18] sm:$0xff]
    %v714 = vld [vmem:[#allocation9 + $0x20] sm:$0xff]
    %v715 = vld [vmem:[#allocation9 + $0x28] sm:$0xff]
    %v716 = vld [vmem:[#allocation9 + $0x30] sm:$0xff]
    %v717 = vld [vmem:[#allocation9 + $0x38] sm:$0xff]
    %v718 = vld [vmem:[#allocation9 + $0x40] sm:$0xff]
    %v719 = vld [vmem:[#allocation9 + $0x48] sm:$0xff]
    %v720 = vld [vmem:[#allocation9 + $0x50] sm:$0xff]
    %v721 = vld [vmem:[#allocation9 + $0x58] sm:$0xff]
    %v722 = vld [vmem:[#allocation9 + $0x60] sm:$0xff]
    %v723 = vld [vmem:[#allocation9 + $0x68] sm:$0xff]
    %v724 = vld [vmem:[#allocation9 + $0x70] sm:$0xff]
    %v725 = vld [vmem:[#allocation9 + $0x78] sm:$0xff]
    %v726 = vld [vmem:[#allocation9 + $0x80] sm:$0xff]
    %v727 = vld [vmem:[#allocation9 + $0x88] sm:$0xff]
    %v728 = vld [vmem:[#allocation9 + $0x90] sm:$0xff]
    %v729 = vld [vmem:[#allocation9 + $0x98] sm:$0xff]
    %v730 = vld [vmem:[#allocation9 + $0xa0] sm:$0xff]
    %v731 = vld [vmem:[#allocation9 + $0xa8] sm:$0xff]
    %v732 = vld [vmem:[#allocation9 + $0xb0] sm:$0xff]
    %v733 = vld [vmem:[#allocation9 + $0xb8] sm:$0xff]
    %v734 = vld [vmem:[#allocation9 + $0xc0] sm:$0xff]
    %v735 = vld [vmem:[#allocation9 + $0xc8] sm:$0xff]
    %v736 = vld [vmem:[#allocation9 + $0xd0] sm:$0xff]
    %v737 = vld [vmem:[#allocation9 + $0xd8] sm:$0xff]
    %v738 = vld [vmem:[#allocation9 + $0xe0] sm:$0xff]
    %v739 = vld [vmem:[#allocation9 + $0xe8] sm:$0xff]
    %v740 = vld [vmem:[#allocation9 + $0xf0] sm:$0xff]
    %v741 = vld [vmem:[#allocation9 + $0xf8] sm:$0xff]
    %v742 = vld [vmem:[#allocation9 + $0x100] sm:$0xff]
    %v743 = vld [vmem:[#allocation9 + $0x108] sm:$0xff]
    %v744 = vld [vmem:[#allocation9 + $0x110] sm:$0xff]
    %v745 = vld [vmem:[#allocation9 + $0x118] sm:$0xff]
    %v746 = vld [vmem:[#allocation9 + $0x120] sm:$0xff]
    %v747 = vld [vmem:[#allocation9 + $0x128] sm:$0xff]
    %v748 = vld [vmem:[#allocation9 + $0x130] sm:$0xff]
    %v749 = vld [vmem:[#allocation9 + $0x138] sm:$0xff]
    %v750 = vld [vmem:[#allocation9 + $0x140] sm:$0xff]
    %v751 = vld [vmem:[#allocation9 + $0x148] sm:$0xff]
    %v752 = vld [vmem:[#allocation9 + $0x150] sm:$0xff]
    %v753 = vld [vmem:[#allocation9 + $0x158] sm:$0xff]
    %v754 = vld [vmem:[#allocation9 + $0x160] sm:$0xff]
    %v755 = vld [vmem:[#allocation9 + $0x168] sm:$0xff]
    %v756 = vld [vmem:[#allocation9 + $0x170] sm:$0xff]
    %v757 = vld [vmem:[#allocation9 + $0x178] sm:$0xff]
    %v758 = vld [vmem:[#allocation10] sm:$0x3]
    %v760 = vperm.slane %v758, 0
    %v761 = vperm.slane %v758, 1
    %vm764 = vcmask 523264
    %v766 = vsel %vm764, %v265, 0
    %768 = vmatpush.msra.mxu0 %v740
    %769 = vmatpush.msra.mxu0 %v738
    %770 = vmatpush.msra.mxu0 %v736
    %771 = vmatpush.msra.mxu0 %v734
    %772 = vmatpush.msra.mxu0 %v732
    %773 = vmatpush.msra.mxu0 %v730
    %774 = vmatpush.msra.mxu0 %v728
    %775 = vmatpush.msra.mxu0 %v726
    %776 = vmatpush.msra.mxu0 %v724
    %777 = vmatpush.msra.mxu0 %v722
    %778 = vmatpush.msra.mxu0 %v720
    %779 = vmatpush.msra.mxu0 %v718
    %780 = vmatpush.msra.mxu0 %v716
    %781 = vmatpush.msra.mxu0 %v714
    %782 = vmatpush.msra.mxu0 %v712
    %783 = vmatpush.msra.mxu0 %v710
    %784 = vmatmul.f32.gmra.mxu0 %v264
    %v785 = vpop.f32.mrf.mxu0
    %v786 = vadd.f32 %v760, %v785
    %787 = vdwg.mxu0
    %788 = vmatpush.msra.mxu0 0.0
    %789 = vmatpush.msra.mxu0 0.0
    %790 = vmatpush.msra.mxu0 0.0
    %791 = vmatpush.msra.mxu0 0.0
    %792 = vmatpush.msra.mxu0 0.0
    %793 = vmatpush.msra.mxu0 0.0
    %794 = vmatpush.msra.mxu0 0.0
    %795 = vmatpush.msra.mxu0 0.0
    %796 = vmatpush.msra.mxu0 %v756
    %797 = vmatpush.msra.mxu0 %v754
    %798 = vmatpush.msra.mxu0 %v752
    %799 = vmatpush.msra.mxu0 %v750
    %800 = vmatpush.msra.mxu0 %v748
    %801 = vmatpush.msra.mxu0 %v746
    %802 = vmatpush.msra.mxu0 %v744
    %803 = vmatpush.msra.mxu0 %v742
    %804 = vmatmul.f32.gmra.mxu0 %v766
    %v805 = vpop.f32.mrf.mxu0
    %v806 = vadd.f32 %v786, %v805
    %807 = vdwg.mxu0
    %808 = vmatpush.msra.mxu0 %v741
    %809 = vmatpush.msra.mxu0 %v739
    %810 = vmatpush.msra.mxu0 %v737
    %811 = vmatpush.msra.mxu0 %v735
    %812 = vmatpush.msra.mxu0 %v733
    %813 = vmatpush.msra.mxu0 %v731
    %814 = vmatpush.msra.mxu0 %v729
    %815 = vmatpush.msra.mxu0 %v727
    %816 = vmatpush.msra.mxu0 %v725
    %817 = vmatpush.msra.mxu0 %v723
    %818 = vmatpush.msra.mxu0 %v721
    %819 = vmatpush.msra.mxu0 %v719
    %820 = vmatpush.msra.mxu0 %v717
    %821 = vmatpush.msra.mxu0 %v715
    %822 = vmatpush.msra.mxu0 %v713
    %823 = vmatpush.msra.mxu0 %v711
    %824 = vmatmul.f32.gmra.mxu0 %v264
    %v825 = vpop.f32.mrf.mxu0
    %v826 = vadd.f32 %v761, %v825
    %827 = vdwg.mxu0
    %828 = vmatpush.msra.mxu0 0.0
    %829 = vmatpush.msra.mxu0 0.0
    %830 = vmatpush.msra.mxu0 0.0
    %831 = vmatpush.msra.mxu0 0.0
    %832 = vmatpush.msra.mxu0 0.0
    %833 = vmatpush.msra.mxu0 0.0
    %834 = vmatpush.msra.mxu0 0.0
    %835 = vmatpush.msra.mxu0 0.0
    %836 = vmatpush.msra.mxu0 %v757
    %837 = vmatpush.msra.mxu0 %v755
    %838 = vmatpush.msra.mxu0 %v753
    %839 = vmatpush.msra.mxu0 %v751
    %840 = vmatpush.msra.mxu0 %v749
    %841 = vmatpush.msra.mxu0 %v747
    %842 = vmatpush.msra.mxu0 %v745
    %843 = vmatpush.msra.mxu0 %v743
    %844 = vmatmul.f32.gmra.mxu0 %v766
    %v845 = vpop.f32.mrf.mxu0
    %v846 = vadd.f32 %v826, %v845
    %847 = vdwg.mxu0
    %v849 = vsel %vm764, %v846, 0
    %851 = vmatpush.xpose.msra.mxu0 0.0
    %852 = vmatpush.xpose.msra.mxu0 0.0
    %853 = vmatpush.xpose.msra.mxu0 0.0
    %854 = vmatpush.xpose.msra.mxu0 0.0
    %855 = vmatpush.xpose.msra.mxu0 0.0
    %856 = vmatpush.xpose.msra.mxu0 0.0
    %857 = vmatpush.xpose.msra.mxu0 0.0
    %858 = vmatpush.xpose.msra.mxu0 0.0
    %859 = vmatpush.xpose.msra.mxu0 0.0
    %860 = vmatpush.xpose.msra.mxu0 0.0
    %861 = vmatpush.xpose.msra.mxu0 0.0
    %862 = vmatpush.xpose.msra.mxu0 0.0
    %863 = vmatpush.xpose.msra.mxu0 0.0
    %864 = vmatpush.xpose.msra.mxu0 0.0
    %865 = vmatpush.xpose.msra.mxu0 0.0
    %866 = vmatpush.xpose.msra.mxu0 %v264
    %867 = vmatmul.f32.gmra.mxu0 %v806
    %v868 = vpop.f32.mrf.mxu0
    %v869 = vadd.f32 0.0, %v868
    %870 = vdwg.mxu0
    %871 = vmatpush.xpose.msra.mxu0 0.0
    %872 = vmatpush.xpose.msra.mxu0 0.0
    %873 = vmatpush.xpose.msra.mxu0 0.0
    %874 = vmatpush.xpose.msra.mxu0 0.0
    %875 = vmatpush.xpose.msra.mxu0 0.0
    %876 = vmatpush.xpose.msra.mxu0 0.0
    %877 = vmatpush.xpose.msra.mxu0 0.0
    %878 = vmatpush.xpose.msra.mxu0 0.0
    %879 = vmatpush.xpose.msra.mxu0 0.0
    %880 = vmatpush.xpose.msra.mxu0 0.0
    %881 = vmatpush.xpose.msra.mxu0 0.0
    %882 = vmatpush.xpose.msra.mxu0 0.0
    %883 = vmatpush.xpose.msra.mxu0 0.0
    %884 = vmatpush.xpose.msra.mxu0 0.0
    %885 = vmatpush.xpose.msra.mxu0 0.0
    %886 = vmatpush.xpose.msra.mxu0 %v766
    %887 = vmatmul.f32.gmra.mxu0 %v849
    %v888 = vpop.f32.mrf.mxu0
    %v889 = vadd.f32 %v869, %v888
    %890 = vdwg.mxu0
    %vm891 = vcmask 64512
    %v892 = vsel %vm891, %v889, -inf
    %893 = vmax.xlane.f32.xlu0 %v892
    %v894 = vpop.xlane.xlu0 %893
    %v895 = vsub.f32 %v889, %v894
    %v896 = vmul.f32 %v895, 1.442695
    %v897 = vpow.pop %v896
    %v898 = vsel %vm891, %v897, 0.0
    %899 = vadd.xlane.f32.xlu0 %v898
    %v900 = vpop.xlane.xlu0 %899
    %v901 = vrcp.pop %v900
    %v902 = vmul.f32 %v897, %v901
    %v904 = vsel %vm891, %v902, 0
    %906 = vmatpush.msra.mxu0 0.0
    %907 = vmatpush.msra.mxu0 0.0
    %908 = vmatpush.msra.mxu0 0.0
    %909 = vmatpush.msra.mxu0 0.0
    %910 = vmatpush.msra.mxu0 0.0
    %911 = vmatpush.msra.mxu0 0.0
    %912 = vmatpush.msra.mxu0 0.0
    %913 = vmatpush.msra.mxu0 0.0
    %914 = vmatpush.msra.mxu0 0.0
    %915 = vmatpush.msra.mxu0 0.0
    %916 = vmatpush.msra.mxu0 0.0
    %917 = vmatpush.msra.mxu0 0.0
    %918 = vmatpush.msra.mxu0 0.0
    %919 = vmatpush.msra.mxu0 0.0
    %920 = vmatpush.msra.mxu0 0.0
    %921 = vmatpush.msra.mxu0 %v264
    %922 = vmatmul.f32.gmra.mxu0 %v904
    %v923 = vpop.f32.mrf.mxu0
    %v924 = vadd.f32 0.0, %v923
    %925 = vdwg.mxu0
    %926 = vmatpush.msra.mxu0 0.0
    %927 = vmatpush.msra.mxu0 0.0
    %928 = vmatpush.msra.mxu0 0.0
    %929 = vmatpush.msra.mxu0 0.0
    %930 = vmatpush.msra.mxu0 0.0
    %931 = vmatpush.msra.mxu0 0.0
    %932 = vmatpush.msra.mxu0 0.0
    %933 = vmatpush.msra.mxu0 0.0
    %934 = vmatpush.msra.mxu0 0.0
    %935 = vmatpush.msra.mxu0 0.0
    %936 = vmatpush.msra.mxu0 0.0
    %937 = vmatpush.msra.mxu0 0.0
    %938 = vmatpush.msra.mxu0 0.0
    %939 = vmatpush.msra.mxu0 0.0
    %940 = vmatpush.msra.mxu0 0.0
    %941 = vmatpush.msra.mxu0 %v265
    %942 = vmatmul.f32.gmra.mxu0 %v904
    %v943 = vpop.f32.mrf.mxu0
    %v944 = vadd.f32 0.0, %v943
    %945 = vdwg.mxu0
    %v946 = vld [vmem:[#allocation12] sm:$0xff]
    %v947 = vld [vmem:[#allocation12 + $0x8] sm:$0xff]
    %v948 = vld [vmem:[#allocation12 + $0x10] sm:$0xff]
    %v949 = vld [vmem:[#allocation12 + $0x18] sm:$0xff]
    %v950 = vld [vmem:[#allocation12 + $0x20] sm:$0xff]
    %v951 = vld [vmem:[#allocation12 + $0x28] sm:$0xff]
    %v952 = vld [vmem:[#allocation12 + $0x30] sm:$0xff]
    %v953 = vld [vmem:[#allocation12 + $0x38] sm:$0xff]
    %v954 = vld [vmem:[#allocation12 + $0x40] sm:$0xff]
    %v955 = vld [vmem:[#allocation12 + $0x48] sm:$0xff]
    %v956 = vld [vmem:[#allocation12 + $0x50] sm:$0xff]
    %v957 = vld [vmem:[#allocation12 + $0x58] sm:$0xff]
    %v958 = vld [vmem:[#allocation12 + $0x60] sm:$0xff]
    %v959 = vld [vmem:[#allocation12 + $0x68] sm:$0xff]
    %v960 = vld [vmem:[#allocation12 + $0x70] sm:$0xff]
    %v961 = vld [vmem:[#allocation12 + $0x78] sm:$0xff]
    %v962 = vld [vmem:[#allocation12 + $0x80] sm:$0xff]
    %v963 = vld [vmem:[#allocation12 + $0x88] sm:$0xff]
    %v964 = vld [vmem:[#allocation12 + $0x90] sm:$0xff]
    %v965 = vld [vmem:[#allocation12 + $0x98] sm:$0xff]
    %v966 = vld [vmem:[#allocation12 + $0xa0] sm:$0xff]
    %v967 = vld [vmem:[#allocation12 + $0xa8] sm:$0xff]
    %v968 = vld [vmem:[#allocation12 + $0xb0] sm:$0xff]
    %v969 = vld [vmem:[#allocation12 + $0xb8] sm:$0xff]
    %v970 = vld [vmem:[#allocation12 + $0xc0] sm:$0xff]
    %v971 = vld [vmem:[#allocation12 + $0xc8] sm:$0xff]
    %v972 = vld [vmem:[#allocation12 + $0xd0] sm:$0xff]
    %v973 = vld [vmem:[#allocation12 + $0xd8] sm:$0xff]
    %v974 = vld [vmem:[#allocation12 + $0xe0] sm:$0xff]
    %v975 = vld [vmem:[#allocation12 + $0xe8] sm:$0xff]
    %v976 = vld [vmem:[#allocation12 + $0xf0] sm:$0xff]
    %v977 = vld [vmem:[#allocation12 + $0xf8] sm:$0xff]
    %v978 = vld [vmem:[#allocation12 + $0x100] sm:$0xff]
    %v979 = vld [vmem:[#allocation12 + $0x108] sm:$0xff]
    %v980 = vld [vmem:[#allocation12 + $0x110] sm:$0xff]
    %v981 = vld [vmem:[#allocation12 + $0x118] sm:$0xff]
    %v982 = vld [vmem:[#allocation12 + $0x120] sm:$0xff]
    %v983 = vld [vmem:[#allocation12 + $0x128] sm:$0xff]
    %v984 = vld [vmem:[#allocation12 + $0x130] sm:$0xff]
    %v985 = vld [vmem:[#allocation12 + $0x138] sm:$0xff]
    %v986 = vld [vmem:[#allocation12 + $0x140] sm:$0xff]
    %v987 = vld [vmem:[#allocation12 + $0x148] sm:$0xff]
    %v988 = vld [vmem:[#allocation12 + $0x150] sm:$0xff]
    %v989 = vld [vmem:[#allocation12 + $0x158] sm:$0xff]
    %v990 = vld [vmem:[#allocation12 + $0x160] sm:$0xff]
    %v991 = vld [vmem:[#allocation12 + $0x168] sm:$0xff]
    %v992 = vld [vmem:[#allocation12 + $0x170] sm:$0xff]
    %v993 = vld [vmem:[#allocation12 + $0x178] sm:$0xff]
    %v995 = vsel %vm764, %v944, 0
    %997 = vmatpush.msra.mxu0 %v976
    %998 = vmatpush.msra.mxu0 %v974
    %999 = vmatpush.msra.mxu0 %v972
    %1000 = vmatpush.msra.mxu0 %v970
    %1001 = vmatpush.msra.mxu0 %v968
    %1002 = vmatpush.msra.mxu0 %v966
    %1003 = vmatpush.msra.mxu0 %v964
    %1004 = vmatpush.msra.mxu0 %v962
    %1005 = vmatpush.msra.mxu0 %v960
    %1006 = vmatpush.msra.mxu0 %v958
    %1007 = vmatpush.msra.mxu0 %v956
    %1008 = vmatpush.msra.mxu0 %v954
    %1009 = vmatpush.msra.mxu0 %v952
    %1010 = vmatpush.msra.mxu0 %v950
    %1011 = vmatpush.msra.mxu0 %v948
    %1012 = vmatpush.msra.mxu0 %v946
    %1013 = vmatmul.f32.gmra.mxu0 %v924
    %v1014 = vpop.f32.mrf.mxu0
    %v1015 = vadd.f32 0.0, %v1014
    %1016 = vdwg.mxu0
    %1017 = vmatpush.msra.mxu0 0.0
    %1018 = vmatpush.msra.mxu0 0.0
    %1019 = vmatpush.msra.mxu0 0.0
    %1020 = vmatpush.msra.mxu0 0.0
    %1021 = vmatpush.msra.mxu0 0.0
    %1022 = vmatpush.msra.mxu0 0.0
    %1023 = vmatpush.msra.mxu0 0.0
    %1024 = vmatpush.msra.mxu0 0.0
    %1025 = vmatpush.msra.mxu0 %v992
    %1026 = vmatpush.msra.mxu0 %v990
    %1027 = vmatpush.msra.mxu0 %v988
    %1028 = vmatpush.msra.mxu0 %v986
    %1029 = vmatpush.msra.mxu0 %v984
    %1030 = vmatpush.msra.mxu0 %v982
    %1031 = vmatpush.msra.mxu0 %v980
    %1032 = vmatpush.msra.mxu0 %v978
    %1033 = vmatmul.f32.gmra.mxu0 %v995
    %v1034 = vpop.f32.mrf.mxu0
    %v1035 = vadd.f32 %v1015, %v1034
    %1036 = vdwg.mxu0
    %1037 = vmatpush.msra.mxu0 %v977
    %1038 = vmatpush.msra.mxu0 %v975
    %1039 = vmatpush.msra.mxu0 %v973
    %1040 = vmatpush.msra.mxu0 %v971
    %1041 = vmatpush.msra.mxu0 %v969
    %1042 = vmatpush.msra.mxu0 %v967
    %1043 = vmatpush.msra.mxu0 %v965
    %1044 = vmatpush.msra.mxu0 %v963
    %1045 = vmatpush.msra.mxu0 %v961
    %1046 = vmatpush.msra.mxu0 %v959
    %1047 = vmatpush.msra.mxu0 %v957
    %1048 = vmatpush.msra.mxu0 %v955
    %1049 = vmatpush.msra.mxu0 %v953
    %1050 = vmatpush.msra.mxu0 %v951
    %1051 = vmatpush.msra.mxu0 %v949
    %1052 = vmatpush.msra.mxu0 %v947
    %1053 = vmatmul.f32.gmra.mxu0 %v924
    %v1054 = vpop.f32.mrf.mxu0
    %v1055 = vadd.f32 0.0, %v1054
    %1056 = vdwg.mxu0
    %1057 = vmatpush.msra.mxu0 0.0
    %1058 = vmatpush.msra.mxu0 0.0
    %1059 = vmatpush.msra.mxu0 0.0
    %1060 = vmatpush.msra.mxu0 0.0
    %1061 = vmatpush.msra.mxu0 0.0
    %1062 = vmatpush.msra.mxu0 0.0
    %1063 = vmatpush.msra.mxu0 0.0
    %1064 = vmatpush.msra.mxu0 0.0
    %1065 = vmatpush.msra.mxu0 %v993
    %1066 = vmatpush.msra.mxu0 %v991
    %1067 = vmatpush.msra.mxu0 %v989
    %1068 = vmatpush.msra.mxu0 %v987
    %1069 = vmatpush.msra.mxu0 %v985
    %1070 = vmatpush.msra.mxu0 %v983
    %1071 = vmatpush.msra.mxu0 %v981
    %1072 = vmatpush.msra.mxu0 %v979
    %1073 = vmatmul.f32.gmra.mxu0 %v995
    %v1074 = vpop.f32.mrf.mxu0
    %v1075 = vadd.f32 %v1055, %v1074
    %1076 = vdwg.mxu0
    %v1077 = vadd.f32 %v588, %v1035
    %v1078 = vadd.f32 %v708, %v1075
    %s1079 = scalar_lea.vmem [#allocation9], 384
    %v1080 = vld [vmem:[%s1079] sm:$0xff]
    %v1081 = vld [vmem:[%s1079 + $0x8] sm:$0xff]
    %v1082 = vld [vmem:[%s1079 + $0x10] sm:$0xff]
    %v1083 = vld [vmem:[%s1079 + $0x18] sm:$0xff]
    %v1084 = vld [vmem:[%s1079 + $0x20] sm:$0xff]
    %v1085 = vld [vmem:[%s1079 + $0x28] sm:$0xff]
    %v1086 = vld [vmem:[%s1079 + $0x30] sm:$0xff]
    %v1087 = vld [vmem:[%s1079 + $0x38] sm:$0xff]
    %v1088 = vld [vmem:[%s1079 + $0x40] sm:$0xff]
    %v1089 = vld [vmem:[%s1079 + $0x48] sm:$0xff]
    %v1090 = vld [vmem:[%s1079 + $0x50] sm:$0xff]
    %v1091 = vld [vmem:[%s1079 + $0x58] sm:$0xff]
    %v1092 = vld [vmem:[%s1079 + $0x60] sm:$0xff]
    %v1093 = vld [vmem:[%s1079 + $0x68] sm:$0xff]
    %v1094 = vld [vmem:[%s1079 + $0x70] sm:$0xff]
    %v1095 = vld [vmem:[%s1079 + $0x78] sm:$0xff]
    %v1096 = vld [vmem:[%s1079 + $0x80] sm:$0xff]
    %v1097 = vld [vmem:[%s1079 + $0x88] sm:$0xff]
    %v1098 = vld [vmem:[%s1079 + $0x90] sm:$0xff]
    %v1099 = vld [vmem:[%s1079 + $0x98] sm:$0xff]
    %v1100 = vld [vmem:[%s1079 + $0xa0] sm:$0xff]
    %v1101 = vld [vmem:[%s1079 + $0xa8] sm:$0xff]
    %v1102 = vld [vmem:[%s1079 + $0xb0] sm:$0xff]
    %v1103 = vld [vmem:[%s1079 + $0xb8] sm:$0xff]
    %v1104 = vld [vmem:[%s1079 + $0xc0] sm:$0xff]
    %v1105 = vld [vmem:[%s1079 + $0xc8] sm:$0xff]
    %v1106 = vld [vmem:[%s1079 + $0xd0] sm:$0xff]
    %v1107 = vld [vmem:[%s1079 + $0xd8] sm:$0xff]
    %v1108 = vld [vmem:[%s1079 + $0xe0] sm:$0xff]
    %v1109 = vld [vmem:[%s1079 + $0xe8] sm:$0xff]
    %v1110 = vld [vmem:[%s1079 + $0xf0] sm:$0xff]
    %v1111 = vld [vmem:[%s1079 + $0xf8] sm:$0xff]
    %v1112 = vld [vmem:[%s1079 + $0x100] sm:$0xff]
    %v1113 = vld [vmem:[%s1079 + $0x108] sm:$0xff]
    %v1114 = vld [vmem:[%s1079 + $0x110] sm:$0xff]
    %v1115 = vld [vmem:[%s1079 + $0x118] sm:$0xff]
    %v1116 = vld [vmem:[%s1079 + $0x120] sm:$0xff]
    %v1117 = vld [vmem:[%s1079 + $0x128] sm:$0xff]
    %v1118 = vld [vmem:[%s1079 + $0x130] sm:$0xff]
    %v1119 = vld [vmem:[%s1079 + $0x138] sm:$0xff]
    %v1120 = vld [vmem:[%s1079 + $0x140] sm:$0xff]
    %v1121 = vld [vmem:[%s1079 + $0x148] sm:$0xff]
    %v1122 = vld [vmem:[%s1079 + $0x150] sm:$0xff]
    %v1123 = vld [vmem:[%s1079 + $0x158] sm:$0xff]
    %v1124 = vld [vmem:[%s1079 + $0x160] sm:$0xff]
    %v1125 = vld [vmem:[%s1079 + $0x168] sm:$0xff]
    %v1126 = vld [vmem:[%s1079 + $0x170] sm:$0xff]
    %v1127 = vld [vmem:[%s1079 + $0x178] sm:$0xff]
    %s1128 = scalar_lea.vmem [#allocation10], 2
    %v1129 = vld [vmem:[%s1128] sm:$0x3]
    %v1131 = vperm.slane %v1129, 0
    %v1132 = vperm.slane %v1129, 1
    %1135 = vmatpush.msra.mxu0 %v1110
    %1136 = vmatpush.msra.mxu0 %v1108
    %1137 = vmatpush.msra.mxu0 %v1106
    %1138 = vmatpush.msra.mxu0 %v1104
    %1139 = vmatpush.msra.mxu0 %v1102
    %1140 = vmatpush.msra.mxu0 %v1100
    %1141 = vmatpush.msra.mxu0 %v1098
    %1142 = vmatpush.msra.mxu0 %v1096
    %1143 = vmatpush.msra.mxu0 %v1094
    %1144 = vmatpush.msra.mxu0 %v1092
    %1145 = vmatpush.msra.mxu0 %v1090
    %1146 = vmatpush.msra.mxu0 %v1088
    %1147 = vmatpush.msra.mxu0 %v1086
    %1148 = vmatpush.msra.mxu0 %v1084
    %1149 = vmatpush.msra.mxu0 %v1082
    %1150 = vmatpush.msra.mxu0 %v1080
    %1151 = vmatmul.f32.gmra.mxu0 %v264
    %v1152 = vpop.f32.mrf.mxu0
    %v1153 = vadd.f32 %v1131, %v1152
    %1154 = vdwg.mxu0
    %1155 = vmatpush.msra.mxu0 0.0
    %1156 = vmatpush.msra.mxu0 0.0
    %1157 = vmatpush.msra.mxu0 0.0
    %1158 = vmatpush.msra.mxu0 0.0
    %1159 = vmatpush.msra.mxu0 0.0
    %1160 = vmatpush.msra.mxu0 0.0
    %1161 = vmatpush.msra.mxu0 0.0
    %1162 = vmatpush.msra.mxu0 0.0
    %1163 = vmatpush.msra.mxu0 %v1126
    %1164 = vmatpush.msra.mxu0 %v1124
    %1165 = vmatpush.msra.mxu0 %v1122
    %1166 = vmatpush.msra.mxu0 %v1120
    %1167 = vmatpush.msra.mxu0 %v1118
    %1168 = vmatpush.msra.mxu0 %v1116
    %1169 = vmatpush.msra.mxu0 %v1114
    %1170 = vmatpush.msra.mxu0 %v1112
    %1171 = vmatmul.f32.gmra.mxu0 %v766
    %v1172 = vpop.f32.mrf.mxu0
    %v1173 = vadd.f32 %v1153, %v1172
    %1174 = vdwg.mxu0
    %1175 = vmatpush.msra.mxu0 %v1111
    %1176 = vmatpush.msra.mxu0 %v1109
    %1177 = vmatpush.msra.mxu0 %v1107
    %1178 = vmatpush.msra.mxu0 %v1105
    %1179 = vmatpush.msra.mxu0 %v1103
    %1180 = vmatpush.msra.mxu0 %v1101
    %1181 = vmatpush.msra.mxu0 %v1099
    %1182 = vmatpush.msra.mxu0 %v1097
    %1183 = vmatpush.msra.mxu0 %v1095
    %1184 = vmatpush.msra.mxu0 %v1093
    %1185 = vmatpush.msra.mxu0 %v1091
    %1186 = vmatpush.msra.mxu0 %v1089
    %1187 = vmatpush.msra.mxu0 %v1087
    %1188 = vmatpush.msra.mxu0 %v1085
    %1189 = vmatpush.msra.mxu0 %v1083
    %1190 = vmatpush.msra.mxu0 %v1081
    %1191 = vmatmul.f32.gmra.mxu0 %v264
    %v1192 = vpop.f32.mrf.mxu0
    %v1193 = vadd.f32 %v1132, %v1192
    %1194 = vdwg.mxu0
    %1195 = vmatpush.msra.mxu0 0.0
    %1196 = vmatpush.msra.mxu0 0.0
    %1197 = vmatpush.msra.mxu0 0.0
    %1198 = vmatpush.msra.mxu0 0.0
    %1199 = vmatpush.msra.mxu0 0.0
    %1200 = vmatpush.msra.mxu0 0.0
    %1201 = vmatpush.msra.mxu0 0.0
    %1202 = vmatpush.msra.mxu0 0.0
    %1203 = vmatpush.msra.mxu0 %v1127
    %1204 = vmatpush.msra.mxu0 %v1125
    %1205 = vmatpush.msra.mxu0 %v1123
    %1206 = vmatpush.msra.mxu0 %v1121
    %1207 = vmatpush.msra.mxu0 %v1119
    %1208 = vmatpush.msra.mxu0 %v1117
    %1209 = vmatpush.msra.mxu0 %v1115
    %1210 = vmatpush.msra.mxu0 %v1113
    %1211 = vmatmul.f32.gmra.mxu0 %v766
    %v1212 = vpop.f32.mrf.mxu0
    %v1213 = vadd.f32 %v1193, %v1212
    %1214 = vdwg.mxu0
    %v1216 = vsel %vm764, %v1213, 0
    %1218 = vmatpush.xpose.msra.mxu0 0.0
    %1219 = vmatpush.xpose.msra.mxu0 0.0
    %1220 = vmatpush.xpose.msra.mxu0 0.0
    %1221 = vmatpush.xpose.msra.mxu0 0.0
    %1222 = vmatpush.xpose.msra.mxu0 0.0
    %1223 = vmatpush.xpose.msra.mxu0 0.0
    %1224 = vmatpush.xpose.msra.mxu0 0.0
    %1225 = vmatpush.xpose.msra.mxu0 0.0
    %1226 = vmatpush.xpose.msra.mxu0 0.0
    %1227 = vmatpush.xpose.msra.mxu0 0.0
    %1228 = vmatpush.xpose.msra.mxu0 0.0
    %1229 = vmatpush.xpose.msra.mxu0 0.0
    %1230 = vmatpush.xpose.msra.mxu0 0.0
    %1231 = vmatpush.xpose.msra.mxu0 0.0
    %1232 = vmatpush.xpose.msra.mxu0 0.0
    %1233 = vmatpush.xpose.msra.mxu0 %v264
    %1234 = vmatmul.f32.gmra.mxu0 %v1173
    %v1235 = vpop.f32.mrf.mxu0
    %v1236 = vadd.f32 0.0, %v1235
    %1237 = vdwg.mxu0
    %1238 = vmatpush.xpose.msra.mxu0 0.0
    %1239 = vmatpush.xpose.msra.mxu0 0.0
    %1240 = vmatpush.xpose.msra.mxu0 0.0
    %1241 = vmatpush.xpose.msra.mxu0 0.0
    %1242 = vmatpush.xpose.msra.mxu0 0.0
    %1243 = vmatpush.xpose.msra.mxu0 0.0
    %1244 = vmatpush.xpose.msra.mxu0 0.0
    %1245 = vmatpush.xpose.msra.mxu0 0.0
    %1246 = vmatpush.xpose.msra.mxu0 0.0
    %1247 = vmatpush.xpose.msra.mxu0 0.0
    %1248 = vmatpush.xpose.msra.mxu0 0.0
    %1249 = vmatpush.xpose.msra.mxu0 0.0
    %1250 = vmatpush.xpose.msra.mxu0 0.0
    %1251 = vmatpush.xpose.msra.mxu0 0.0
    %1252 = vmatpush.xpose.msra.mxu0 0.0
    %1253 = vmatpush.xpose.msra.mxu0 %v766
    %1254 = vmatmul.f32.gmra.mxu0 %v1216
    %v1255 = vpop.f32.mrf.mxu0
    %v1256 = vadd.f32 %v1236, %v1255
    %1257 = vdwg.mxu0
    %v1258 = vsel %vm891, %v1256, -inf
    %1259 = vmax.xlane.f32.xlu0 %v1258
    %v1260 = vpop.xlane.xlu0 %1259
    %v1261 = vsub.f32 %v1256, %v1260
    %v1262 = vmul.f32 %v1261, 1.442695
    %v1263 = vpow.pop %v1262
    %v1264 = vsel %vm891, %v1263, 0.0
    %1265 = vadd.xlane.f32.xlu0 %v1264
    %v1266 = vpop.xlane.xlu0 %1265
    %v1267 = vrcp.pop %v1266
    %v1268 = vmul.f32 %v1263, %v1267
    %v1270 = vsel %vm891, %v1268, 0
    %1272 = vmatpush.msra.mxu0 0.0
    %1273 = vmatpush.msra.mxu0 0.0
    %1274 = vmatpush.msra.mxu0 0.0
    %1275 = vmatpush.msra.mxu0 0.0
    %1276 = vmatpush.msra.mxu0 0.0
    %1277 = vmatpush.msra.mxu0 0.0
    %1278 = vmatpush.msra.mxu0 0.0
    %1279 = vmatpush.msra.mxu0 0.0
    %1280 = vmatpush.msra.mxu0 0.0
    %1281 = vmatpush.msra.mxu0 0.0
    %1282 = vmatpush.msra.mxu0 0.0
    %1283 = vmatpush.msra.mxu0 0.0
    %1284 = vmatpush.msra.mxu0 0.0
    %1285 = vmatpush.msra.mxu0 0.0
    %1286 = vmatpush.msra.mxu0 0.0
    %1287 = vmatpush.msra.mxu0 %v264
    %1288 = vmatmul.f32.gmra.mxu0 %v1270
    %v1289 = vpop.f32.mrf.mxu0
    %v1290 = vadd.f32 0.0, %v1289
    %1291 = vdwg.mxu0
    %1292 = vmatpush.msra.mxu0 0.0
    %1293 = vmatpush.msra.mxu0 0.0
    %1294 = vmatpush.msra.mxu0 0.0
    %1295 = vmatpush.msra.mxu0 0.0
    %1296 = vmatpush.msra.mxu0 0.0
    %1297 = vmatpush.msra.mxu0 0.0
    %1298 = vmatpush.msra.mxu0 0.0
    %1299 = vmatpush.msra.mxu0 0.0
    %1300 = vmatpush.msra.mxu0 0.0
    %1301 = vmatpush.msra.mxu0 0.0
    %1302 = vmatpush.msra.mxu0 0.0
    %1303 = vmatpush.msra.mxu0 0.0
    %1304 = vmatpush.msra.mxu0 0.0
    %1305 = vmatpush.msra.mxu0 0.0
    %1306 = vmatpush.msra.mxu0 0.0
    %1307 = vmatpush.msra.mxu0 %v265
    %1308 = vmatmul.f32.gmra.mxu0 %v1270
    %v1309 = vpop.f32.mrf.mxu0
    %v1310 = vadd.f32 0.0, %v1309
    %1311 = vdwg.mxu0
    %s1312 = scalar_lea.vmem [#allocation12], 384
    %v1313 = vld [vmem:[%s1312] sm:$0xff]
    %v1314 = vld [vmem:[%s1312 + $0x8] sm:$0xff]
    %v1315 = vld [vmem:[%s1312 + $0x10] sm:$0xff]
    %v1316 = vld [vmem:[%s1312 + $0x18] sm:$0xff]
    %v1317 = vld [vmem:[%s1312 + $0x20] sm:$0xff]
    %v1318 = vld [vmem:[%s1312 + $0x28] sm:$0xff]
    %v1319 = vld [vmem:[%s1312 + $0x30] sm:$0xff]
    %v1320 = vld [vmem:[%s1312 + $0x38] sm:$0xff]
    %v1321 = vld [vmem:[%s1312 + $0x40] sm:$0xff]
    %v1322 = vld [vmem:[%s1312 + $0x48] sm:$0xff]
    %v1323 = vld [vmem:[%s1312 + $0x50] sm:$0xff]
    %v1324 = vld [vmem:[%s1312 + $0x58] sm:$0xff]
    %v1325 = vld [vmem:[%s1312 + $0x60] sm:$0xff]
    %v1326 = vld [vmem:[%s1312 + $0x68] sm:$0xff]
    %v1327 = vld [vmem:[%s1312 + $0x70] sm:$0xff]
    %v1328 = vld [vmem:[%s1312 + $0x78] sm:$0xff]
    %v1329 = vld [vmem:[%s1312 + $0x80] sm:$0xff]
    %v1330 = vld [vmem:[%s1312 + $0x88] sm:$0xff]
    %v1331 = vld [vmem:[%s1312 + $0x90] sm:$0xff]
    %v1332 = vld [vmem:[%s1312 + $0x98] sm:$0xff]
    %v1333 = vld [vmem:[%s1312 + $0xa0] sm:$0xff]
    %v1334 = vld [vmem:[%s1312 + $0xa8] sm:$0xff]
    %v1335 = vld [vmem:[%s1312 + $0xb0] sm:$0xff]
    %v1336 = vld [vmem:[%s1312 + $0xb8] sm:$0xff]
    %v1337 = vld [vmem:[%s1312 + $0xc0] sm:$0xff]
    %v1338 = vld [vmem:[%s1312 + $0xc8] sm:$0xff]
    %v1339 = vld [vmem:[%s1312 + $0xd0] sm:$0xff]
    %v1340 = vld [vmem:[%s1312 + $0xd8] sm:$0xff]
    %v1341 = vld [vmem:[%s1312 + $0xe0] sm:$0xff]
    %v1342 = vld [vmem:[%s1312 + $0xe8] sm:$0xff]
    %v1343 = vld [vmem:[%s1312 + $0xf0] sm:$0xff]
    %v1344 = vld [vmem:[%s1312 + $0xf8] sm:$0xff]
    %v1345 = vld [vmem:[%s1312 + $0x100] sm:$0xff]
    %v1346 = vld [vmem:[%s1312 + $0x108] sm:$0xff]
    %v1347 = vld [vmem:[%s1312 + $0x110] sm:$0xff]
    %v1348 = vld [vmem:[%s1312 + $0x118] sm:$0xff]
    %v1349 = vld [vmem:[%s1312 + $0x120] sm:$0xff]
    %v1350 = vld [vmem:[%s1312 + $0x128] sm:$0xff]
    %v1351 = vld [vmem:[%s1312 + $0x130] sm:$0xff]
    %v1352 = vld [vmem:[%s1312 + $0x138] sm:$0xff]
    %v1353 = vld [vmem:[%s1312 + $0x140] sm:$0xff]
    %v1354 = vld [vmem:[%s1312 + $0x148] sm:$0xff]
    %v1355 = vld [vmem:[%s1312 + $0x150] sm:$0xff]
    %v1356 = vld [vmem:[%s1312 + $0x158] sm:$0xff]
    %v1357 = vld [vmem:[%s1312 + $0x160] sm:$0xff]
    %v1358 = vld [vmem:[%s1312 + $0x168] sm:$0xff]
    %v1359 = vld [vmem:[%s1312 + $0x170] sm:$0xff]
    %v1360 = vld [vmem:[%s1312 + $0x178] sm:$0xff]
    %v1362 = vsel %vm764, %v1310, 0
    %1364 = vmatpush.msra.mxu0 %v1343
    %1365 = vmatpush.msra.mxu0 %v1341
    %1366 = vmatpush.msra.mxu0 %v1339
    %1367 = vmatpush.msra.mxu0 %v1337
    %1368 = vmatpush.msra.mxu0 %v1335
    %1369 = vmatpush.msra.mxu0 %v1333
    %1370 = vmatpush.msra.mxu0 %v1331
    %1371 = vmatpush.msra.mxu0 %v1329
    %1372 = vmatpush.msra.mxu0 %v1327
    %1373 = vmatpush.msra.mxu0 %v1325
    %1374 = vmatpush.msra.mxu0 %v1323
    %1375 = vmatpush.msra.mxu0 %v1321
    %1376 = vmatpush.msra.mxu0 %v1319
    %1377 = vmatpush.msra.mxu0 %v1317
    %1378 = vmatpush.msra.mxu0 %v1315
    %1379 = vmatpush.msra.mxu0 %v1313
    %1380 = vmatmul.f32.gmra.mxu0 %v1290
    %v1381 = vpop.f32.mrf.mxu0
    %v1382 = vadd.f32 0.0, %v1381
    %1383 = vdwg.mxu0
    %1384 = vmatpush.msra.mxu0 0.0
    %1385 = vmatpush.msra.mxu0 0.0
    %1386 = vmatpush.msra.mxu0 0.0
    %1387 = vmatpush.msra.mxu0 0.0
    %1388 = vmatpush.msra.mxu0 0.0
    %1389 = vmatpush.msra.mxu0 0.0
    %1390 = vmatpush.msra.mxu0 0.0
    %1391 = vmatpush.msra.mxu0 0.0
    %1392 = vmatpush.msra.mxu0 %v1359
    %1393 = vmatpush.msra.mxu0 %v1357
    %1394 = vmatpush.msra.mxu0 %v1355
    %1395 = vmatpush.msra.mxu0 %v1353
    %1396 = vmatpush.msra.mxu0 %v1351
    %1397 = vmatpush.msra.mxu0 %v1349
    %1398 = vmatpush.msra.mxu0 %v1347
    %1399 = vmatpush.msra.mxu0 %v1345
    %1400 = vmatmul.f32.gmra.mxu0 %v1362
    %v1401 = vpop.f32.mrf.mxu0
    %v1402 = vadd.f32 %v1382, %v1401
    %1403 = vdwg.mxu0
    %1404 = vmatpush.msra.mxu0 %v1344
    %1405 = vmatpush.msra.mxu0 %v1342
    %1406 = vmatpush.msra.mxu0 %v1340
    %1407 = vmatpush.msra.mxu0 %v1338
    %1408 = vmatpush.msra.mxu0 %v1336
    %1409 = vmatpush.msra.mxu0 %v1334
    %1410 = vmatpush.msra.mxu0 %v1332
    %1411 = vmatpush.msra.mxu0 %v1330
    %1412 = vmatpush.msra.mxu0 %v1328
    %1413 = vmatpush.msra.mxu0 %v1326
    %1414 = vmatpush.msra.mxu0 %v1324
    %1415 = vmatpush.msra.mxu0 %v1322
    %1416 = vmatpush.msra.mxu0 %v1320
    %1417 = vmatpush.msra.mxu0 %v1318
    %1418 = vmatpush.msra.mxu0 %v1316
    %1419 = vmatpush.msra.mxu0 %v1314
    %1420 = vmatmul.f32.gmra.mxu0 %v1290
    %v1421 = vpop.f32.mrf.mxu0
    %v1422 = vadd.f32 0.0, %v1421
    %1423 = vdwg.mxu0
    %1424 = vmatpush.msra.mxu0 0.0
    %1425 = vmatpush.msra.mxu0 0.0
    %1426 = vmatpush.msra.mxu0 0.0
    %1427 = vmatpush.msra.mxu0 0.0
    %1428 = vmatpush.msra.mxu0 0.0
    %1429 = vmatpush.msra.mxu0 0.0
    %1430 = vmatpush.msra.mxu0 0.0
    %1431 = vmatpush.msra.mxu0 0.0
    %1432 = vmatpush.msra.mxu0 %v1360
    %1433 = vmatpush.msra.mxu0 %v1358
    %1434 = vmatpush.msra.mxu0 %v1356
    %1435 = vmatpush.msra.mxu0 %v1354
    %1436 = vmatpush.msra.mxu0 %v1352
    %1437 = vmatpush.msra.mxu0 %v1350
    %1438 = vmatpush.msra.mxu0 %v1348
    %1439 = vmatpush.msra.mxu0 %v1346
    %1440 = vmatmul.f32.gmra.mxu0 %v1362
    %v1441 = vpop.f32.mrf.mxu0
    %v1442 = vadd.f32 %v1422, %v1441
    %1443 = vdwg.mxu0
    %v1444 = vadd.f32 %v1077, %v1402
    %v1445 = vadd.f32 %v1078, %v1442
    %s1446 = scalar_lea.vmem [#allocation9], 768
    %v1447 = vld [vmem:[%s1446] sm:$0xff]
    %v1448 = vld [vmem:[%s1446 + $0x8] sm:$0xff]
    %v1449 = vld [vmem:[%s1446 + $0x10] sm:$0xff]
    %v1450 = vld [vmem:[%s1446 + $0x18] sm:$0xff]
    %v1451 = vld [vmem:[%s1446 + $0x20] sm:$0xff]
    %v1452 = vld [vmem:[%s1446 + $0x28] sm:$0xff]
    %v1453 = vld [vmem:[%s1446 + $0x30] sm:$0xff]
    %v1454 = vld [vmem:[%s1446 + $0x38] sm:$0xff]
    %v1455 = vld [vmem:[%s1446 + $0x40] sm:$0xff]
    %v1456 = vld [vmem:[%s1446 + $0x48] sm:$0xff]
    %v1457 = vld [vmem:[%s1446 + $0x50] sm:$0xff]
    %v1458 = vld [vmem:[%s1446 + $0x58] sm:$0xff]
    %v1459 = vld [vmem:[%s1446 + $0x60] sm:$0xff]
    %v1460 = vld [vmem:[%s1446 + $0x68] sm:$0xff]
    %v1461 = vld [vmem:[%s1446 + $0x70] sm:$0xff]
    %v1462 = vld [vmem:[%s1446 + $0x78] sm:$0xff]
    %v1463 = vld [vmem:[%s1446 + $0x80] sm:$0xff]
    %v1464 = vld [vmem:[%s1446 + $0x88] sm:$0xff]
    %v1465 = vld [vmem:[%s1446 + $0x90] sm:$0xff]
    %v1466 = vld [vmem:[%s1446 + $0x98] sm:$0xff]
    %v1467 = vld [vmem:[%s1446 + $0xa0] sm:$0xff]
    %v1468 = vld [vmem:[%s1446 + $0xa8] sm:$0xff]
    %v1469 = vld [vmem:[%s1446 + $0xb0] sm:$0xff]
    %v1470 = vld [vmem:[%s1446 + $0xb8] sm:$0xff]
    %v1471 = vld [vmem:[%s1446 + $0xc0] sm:$0xff]
    %v1472 = vld [vmem:[%s1446 + $0xc8] sm:$0xff]
    %v1473 = vld [vmem:[%s1446 + $0xd0] sm:$0xff]
    %v1474 = vld [vmem:[%s1446 + $0xd8] sm:$0xff]
    %v1475 = vld [vmem:[%s1446 + $0xe0] sm:$0xff]
    %v1476 = vld [vmem:[%s1446 + $0xe8] sm:$0xff]
    %v1477 = vld [vmem:[%s1446 + $0xf0] sm:$0xff]
    %v1478 = vld [vmem:[%s1446 + $0xf8] sm:$0xff]
    %v1479 = vld [vmem:[%s1446 + $0x100] sm:$0xff]
    %v1480 = vld [vmem:[%s1446 + $0x108] sm:$0xff]
    %v1481 = vld [vmem:[%s1446 + $0x110] sm:$0xff]
    %v1482 = vld [vmem:[%s1446 + $0x118] sm:$0xff]
    %v1483 = vld [vmem:[%s1446 + $0x120] sm:$0xff]
    %v1484 = vld [vmem:[%s1446 + $0x128] sm:$0xff]
    %v1485 = vld [vmem:[%s1446 + $0x130] sm:$0xff]
    %v1486 = vld [vmem:[%s1446 + $0x138] sm:$0xff]
    %v1487 = vld [vmem:[%s1446 + $0x140] sm:$0xff]
    %v1488 = vld [vmem:[%s1446 + $0x148] sm:$0xff]
    %v1489 = vld [vmem:[%s1446 + $0x150] sm:$0xff]
    %v1490 = vld [vmem:[%s1446 + $0x158] sm:$0xff]
    %v1491 = vld [vmem:[%s1446 + $0x160] sm:$0xff]
    %v1492 = vld [vmem:[%s1446 + $0x168] sm:$0xff]
    %v1493 = vld [vmem:[%s1446 + $0x170] sm:$0xff]
    %v1494 = vld [vmem:[%s1446 + $0x178] sm:$0xff]
    %s1495 = scalar_lea.vmem [#allocation10], 4
    %v1496 = vld [vmem:[%s1495] sm:$0x3]
    %v1498 = vperm.slane %v1496, 0
    %v1499 = vperm.slane %v1496, 1
    %1502 = vmatpush.msra.mxu0 %v1477
    %1503 = vmatpush.msra.mxu0 %v1475
    %1504 = vmatpush.msra.mxu0 %v1473
    %1505 = vmatpush.msra.mxu0 %v1471
    %1506 = vmatpush.msra.mxu0 %v1469
    %1507 = vmatpush.msra.mxu0 %v1467
    %1508 = vmatpush.msra.mxu0 %v1465
    %1509 = vmatpush.msra.mxu0 %v1463
    %1510 = vmatpush.msra.mxu0 %v1461
    %1511 = vmatpush.msra.mxu0 %v1459
    %1512 = vmatpush.msra.mxu0 %v1457
    %1513 = vmatpush.msra.mxu0 %v1455
    %1514 = vmatpush.msra.mxu0 %v1453
    %1515 = vmatpush.msra.mxu0 %v1451
    %1516 = vmatpush.msra.mxu0 %v1449
    %1517 = vmatpush.msra.mxu0 %v1447
    %1518 = vmatmul.f32.gmra.mxu0 %v264
    %v1519 = vpop.f32.mrf.mxu0
    %v1520 = vadd.f32 %v1498, %v1519
    %1521 = vdwg.mxu0
    %1522 = vmatpush.msra.mxu0 0.0
    %1523 = vmatpush.msra.mxu0 0.0
    %1524 = vmatpush.msra.mxu0 0.0
    %1525 = vmatpush.msra.mxu0 0.0
    %1526 = vmatpush.msra.mxu0 0.0
    %1527 = vmatpush.msra.mxu0 0.0
    %1528 = vmatpush.msra.mxu0 0.0
    %1529 = vmatpush.msra.mxu0 0.0
    %1530 = vmatpush.msra.mxu0 %v1493
    %1531 = vmatpush.msra.mxu0 %v1491
    %1532 = vmatpush.msra.mxu0 %v1489
    %1533 = vmatpush.msra.mxu0 %v1487
    %1534 = vmatpush.msra.mxu0 %v1485
    %1535 = vmatpush.msra.mxu0 %v1483
    %1536 = vmatpush.msra.mxu0 %v1481
    %1537 = vmatpush.msra.mxu0 %v1479
    %1538 = vmatmul.f32.gmra.mxu0 %v766
    %v1539 = vpop.f32.mrf.mxu0
    %v1540 = vadd.f32 %v1520, %v1539
    %1541 = vdwg.mxu0
    %1542 = vmatpush.msra.mxu0 %v1478
    %1543 = vmatpush.msra.mxu0 %v1476
    %1544 = vmatpush.msra.mxu0 %v1474
    %1545 = vmatpush.msra.mxu0 %v1472
    %1546 = vmatpush.msra.mxu0 %v1470
    %1547 = vmatpush.msra.mxu0 %v1468
    %1548 = vmatpush.msra.mxu0 %v1466
    %1549 = vmatpush.msra.mxu0 %v1464
    %1550 = vmatpush.msra.mxu0 %v1462
    %1551 = vmatpush.msra.mxu0 %v1460
    %1552 = vmatpush.msra.mxu0 %v1458
    %1553 = vmatpush.msra.mxu0 %v1456
    %1554 = vmatpush.msra.mxu0 %v1454
    %1555 = vmatpush.msra.mxu0 %v1452
    %1556 = vmatpush.msra.mxu0 %v1450
    %1557 = vmatpush.msra.mxu0 %v1448
    %1558 = vmatmul.f32.gmra.mxu0 %v264
    %v1559 = vpop.f32.mrf.mxu0
    %v1560 = vadd.f32 %v1499, %v1559
    %1561 = vdwg.mxu0
    %1562 = vmatpush.msra.mxu0 0.0
    %1563 = vmatpush.msra.mxu0 0.0
    %1564 = vmatpush.msra.mxu0 0.0
    %1565 = vmatpush.msra.mxu0 0.0
    %1566 = vmatpush.msra.mxu0 0.0
    %1567 = vmatpush.msra.mxu0 0.0
    %1568 = vmatpush.msra.mxu0 0.0
    %1569 = vmatpush.msra.mxu0 0.0
    %1570 = vmatpush.msra.mxu0 %v1494
    %1571 = vmatpush.msra.mxu0 %v1492
    %1572 = vmatpush.msra.mxu0 %v1490
    %1573 = vmatpush.msra.mxu0 %v1488
    %1574 = vmatpush.msra.mxu0 %v1486
    %1575 = vmatpush.msra.mxu0 %v1484
    %1576 = vmatpush.msra.mxu0 %v1482
    %1577 = vmatpush.msra.mxu0 %v1480
    %1578 = vmatmul.f32.gmra.mxu0 %v766
    %v1579 = vpop.f32.mrf.mxu0
    %v1580 = vadd.f32 %v1560, %v1579
    %1581 = vdwg.mxu0
    %v1583 = vsel %vm764, %v1580, 0
    %1585 = vmatpush.xpose.msra.mxu0 0.0
    %1586 = vmatpush.xpose.msra.mxu0 0.0
    %1587 = vmatpush.xpose.msra.mxu0 0.0
    %1588 = vmatpush.xpose.msra.mxu0 0.0
    %1589 = vmatpush.xpose.msra.mxu0 0.0
    %1590 = vmatpush.xpose.msra.mxu0 0.0
    %1591 = vmatpush.xpose.msra.mxu0 0.0
    %1592 = vmatpush.xpose.msra.mxu0 0.0
    %1593 = vmatpush.xpose.msra.mxu0 0.0
    %1594 = vmatpush.xpose.msra.mxu0 0.0
    %1595 = vmatpush.xpose.msra.mxu0 0.0
    %1596 = vmatpush.xpose.msra.mxu0 0.0
    %1597 = vmatpush.xpose.msra.mxu0 0.0
    %1598 = vmatpush.xpose.msra.mxu0 0.0
    %1599 = vmatpush.xpose.msra.mxu0 0.0
    %1600 = vmatpush.xpose.msra.mxu0 %v264
    %1601 = vmatmul.f32.gmra.mxu0 %v1540
    %v1602 = vpop.f32.mrf.mxu0
    %v1603 = vadd.f32 0.0, %v1602
    %1604 = vdwg.mxu0
    %1605 = vmatpush.xpose.msra.mxu0 0.0
    %1606 = vmatpush.xpose.msra.mxu0 0.0
    %1607 = vmatpush.xpose.msra.mxu0 0.0
    %1608 = vmatpush.xpose.msra.mxu0 0.0
    %1609 = vmatpush.xpose.msra.mxu0 0.0
    %1610 = vmatpush.xpose.msra.mxu0 0.0
    %1611 = vmatpush.xpose.msra.mxu0 0.0
    %1612 = vmatpush.xpose.msra.mxu0 0.0
    %1613 = vmatpush.xpose.msra.mxu0 0.0
    %1614 = vmatpush.xpose.msra.mxu0 0.0
    %1615 = vmatpush.xpose.msra.mxu0 0.0
    %1616 = vmatpush.xpose.msra.mxu0 0.0
    %1617 = vmatpush.xpose.msra.mxu0 0.0
    %1618 = vmatpush.xpose.msra.mxu0 0.0
    %1619 = vmatpush.xpose.msra.mxu0 0.0
    %1620 = vmatpush.xpose.msra.mxu0 %v766
    %1621 = vmatmul.f32.gmra.mxu0 %v1583
    %v1622 = vpop.f32.mrf.mxu0
    %v1623 = vadd.f32 %v1603, %v1622
    %1624 = vdwg.mxu0
    %v1625 = vsel %vm891, %v1623, -inf
    %1626 = vmax.xlane.f32.xlu0 %v1625
    %v1627 = vpop.xlane.xlu0 %1626
    %v1628 = vsub.f32 %v1623, %v1627
    %v1629 = vmul.f32 %v1628, 1.442695
    %v1630 = vpow.pop %v1629
    %v1631 = vsel %vm891, %v1630, 0.0
    %1632 = vadd.xlane.f32.xlu0 %v1631
    %v1633 = vpop.xlane.xlu0 %1632
    %v1634 = vrcp.pop %v1633
    %v1635 = vmul.f32 %v1630, %v1634
    %v1637 = vsel %vm891, %v1635, 0
    %1639 = vmatpush.msra.mxu0 0.0
    %1640 = vmatpush.msra.mxu0 0.0
    %1641 = vmatpush.msra.mxu0 0.0
    %1642 = vmatpush.msra.mxu0 0.0
    %1643 = vmatpush.msra.mxu0 0.0
    %1644 = vmatpush.msra.mxu0 0.0
    %1645 = vmatpush.msra.mxu0 0.0
    %1646 = vmatpush.msra.mxu0 0.0
    %1647 = vmatpush.msra.mxu0 0.0
    %1648 = vmatpush.msra.mxu0 0.0
    %1649 = vmatpush.msra.mxu0 0.0
    %1650 = vmatpush.msra.mxu0 0.0
    %1651 = vmatpush.msra.mxu0 0.0
    %1652 = vmatpush.msra.mxu0 0.0
    %1653 = vmatpush.msra.mxu0 0.0
    %1654 = vmatpush.msra.mxu0 %v264
    %1655 = vmatmul.f32.gmra.mxu0 %v1637
    %v1656 = vpop.f32.mrf.mxu0
    %v1657 = vadd.f32 0.0, %v1656
    %1658 = vdwg.mxu0
    %1659 = vmatpush.msra.mxu0 0.0
    %1660 = vmatpush.msra.mxu0 0.0
    %1661 = vmatpush.msra.mxu0 0.0
    %1662 = vmatpush.msra.mxu0 0.0
    %1663 = vmatpush.msra.mxu0 0.0
    %1664 = vmatpush.msra.mxu0 0.0
    %1665 = vmatpush.msra.mxu0 0.0
    %1666 = vmatpush.msra.mxu0 0.0
    %1667 = vmatpush.msra.mxu0 0.0
    %1668 = vmatpush.msra.mxu0 0.0
    %1669 = vmatpush.msra.mxu0 0.0
    %1670 = vmatpush.msra.mxu0 0.0
    %1671 = vmatpush.msra.mxu0 0.0
    %1672 = vmatpush.msra.mxu0 0.0
    %1673 = vmatpush.msra.mxu0 0.0
    %1674 = vmatpush.msra.mxu0 %v265
    %1675 = vmatmul.f32.gmra.mxu0 %v1637
    %v1676 = vpop.f32.mrf.mxu0
    %v1677 = vadd.f32 0.0, %v1676
    %1678 = vdwg.mxu0
    %s1679 = scalar_lea.vmem [#allocation12], 768
    %v1680 = vld [vmem:[%s1679] sm:$0xff]
    %v1681 = vld [vmem:[%s1679 + $0x8] sm:$0xff]
    %v1682 = vld [vmem:[%s1679 + $0x10] sm:$0xff]
    %v1683 = vld [vmem:[%s1679 + $0x18] sm:$0xff]
    %v1684 = vld [vmem:[%s1679 + $0x20] sm:$0xff]
    %v1685 = vld [vmem:[%s1679 + $0x28] sm:$0xff]
    %v1686 = vld [vmem:[%s1679 + $0x30] sm:$0xff]
    %v1687 = vld [vmem:[%s1679 + $0x38] sm:$0xff]
    %v1688 = vld [vmem:[%s1679 + $0x40] sm:$0xff]
    %v1689 = vld [vmem:[%s1679 + $0x48] sm:$0xff]
    %v1690 = vld [vmem:[%s1679 + $0x50] sm:$0xff]
    %v1691 = vld [vmem:[%s1679 + $0x58] sm:$0xff]
    %v1692 = vld [vmem:[%s1679 + $0x60] sm:$0xff]
    %v1693 = vld [vmem:[%s1679 + $0x68] sm:$0xff]
    %v1694 = vld [vmem:[%s1679 + $0x70] sm:$0xff]
    %v1695 = vld [vmem:[%s1679 + $0x78] sm:$0xff]
    %v1696 = vld [vmem:[%s1679 + $0x80] sm:$0xff]
    %v1697 = vld [vmem:[%s1679 + $0x88] sm:$0xff]
    %v1698 = vld [vmem:[%s1679 + $0x90] sm:$0xff]
    %v1699 = vld [vmem:[%s1679 + $0x98] sm:$0xff]
    %v1700 = vld [vmem:[%s1679 + $0xa0] sm:$0xff]
    %v1701 = vld [vmem:[%s1679 + $0xa8] sm:$0xff]
    %v1702 = vld [vmem:[%s1679 + $0xb0] sm:$0xff]
    %v1703 = vld [vmem:[%s1679 + $0xb8] sm:$0xff]
    %v1704 = vld [vmem:[%s1679 + $0xc0] sm:$0xff]
    %v1705 = vld [vmem:[%s1679 + $0xc8] sm:$0xff]
    %v1706 = vld [vmem:[%s1679 + $0xd0] sm:$0xff]
    %v1707 = vld [vmem:[%s1679 + $0xd8] sm:$0xff]
    %v1708 = vld [vmem:[%s1679 + $0xe0] sm:$0xff]
    %v1709 = vld [vmem:[%s1679 + $0xe8] sm:$0xff]
    %v1710 = vld [vmem:[%s1679 + $0xf0] sm:$0xff]
    %v1711 = vld [vmem:[%s1679 + $0xf8] sm:$0xff]
    %v1712 = vld [vmem:[%s1679 + $0x100] sm:$0xff]
    %v1713 = vld [vmem:[%s1679 + $0x108] sm:$0xff]
    %v1714 = vld [vmem:[%s1679 + $0x110] sm:$0xff]
    %v1715 = vld [vmem:[%s1679 + $0x118] sm:$0xff]
    %v1716 = vld [vmem:[%s1679 + $0x120] sm:$0xff]
    %v1717 = vld [vmem:[%s1679 + $0x128] sm:$0xff]
    %v1718 = vld [vmem:[%s1679 + $0x130] sm:$0xff]
    %v1719 = vld [vmem:[%s1679 + $0x138] sm:$0xff]
    %v1720 = vld [vmem:[%s1679 + $0x140] sm:$0xff]
    %v1721 = vld [vmem:[%s1679 + $0x148] sm:$0xff]
    %v1722 = vld [vmem:[%s1679 + $0x150] sm:$0xff]
    %v1723 = vld [vmem:[%s1679 + $0x158] sm:$0xff]
    %v1724 = vld [vmem:[%s1679 + $0x160] sm:$0xff]
    %v1725 = vld [vmem:[%s1679 + $0x168] sm:$0xff]
    %v1726 = vld [vmem:[%s1679 + $0x170] sm:$0xff]
    %v1727 = vld [vmem:[%s1679 + $0x178] sm:$0xff]
    %v1729 = vsel %vm764, %v1677, 0
    %1731 = vmatpush.msra.mxu0 %v1710
    %1732 = vmatpush.msra.mxu0 %v1708
    %1733 = vmatpush.msra.mxu0 %v1706
    %1734 = vmatpush.msra.mxu0 %v1704
    %1735 = vmatpush.msra.mxu0 %v1702
    %1736 = vmatpush.msra.mxu0 %v1700
    %1737 = vmatpush.msra.mxu0 %v1698
    %1738 = vmatpush.msra.mxu0 %v1696
    %1739 = vmatpush.msra.mxu0 %v1694
    %1740 = vmatpush.msra.mxu0 %v1692
    %1741 = vmatpush.msra.mxu0 %v1690
    %1742 = vmatpush.msra.mxu0 %v1688
    %1743 = vmatpush.msra.mxu0 %v1686
    %1744 = vmatpush.msra.mxu0 %v1684
    %1745 = vmatpush.msra.mxu0 %v1682
    %1746 = vmatpush.msra.mxu0 %v1680
    %1747 = vmatmul.f32.gmra.mxu0 %v1657
    %v1748 = vpop.f32.mrf.mxu0
    %v1749 = vadd.f32 0.0, %v1748
    %1750 = vdwg.mxu0
    %1751 = vmatpush.msra.mxu0 0.0
    %1752 = vmatpush.msra.mxu0 0.0
    %1753 = vmatpush.msra.mxu0 0.0
    %1754 = vmatpush.msra.mxu0 0.0
    %1755 = vmatpush.msra.mxu0 0.0
    %1756 = vmatpush.msra.mxu0 0.0
    %1757 = vmatpush.msra.mxu0 0.0
    %1758 = vmatpush.msra.mxu0 0.0
    %1759 = vmatpush.msra.mxu0 %v1726
    %1760 = vmatpush.msra.mxu0 %v1724
    %1761 = vmatpush.msra.mxu0 %v1722
    %1762 = vmatpush.msra.mxu0 %v1720
    %1763 = vmatpush.msra.mxu0 %v1718
    %1764 = vmatpush.msra.mxu0 %v1716
    %1765 = vmatpush.msra.mxu0 %v1714
    %1766 = vmatpush.msra.mxu0 %v1712
    %1767 = vmatmul.f32.gmra.mxu0 %v1729
    %v1768 = vpop.f32.mrf.mxu0
    %v1769 = vadd.f32 %v1749, %v1768
    %1770 = vdwg.mxu0
    %1771 = vmatpush.msra.mxu0 %v1711
    %1772 = vmatpush.msra.mxu0 %v1709
    %1773 = vmatpush.msra.mxu0 %v1707
    %1774 = vmatpush.msra.mxu0 %v1705
    %1775 = vmatpush.msra.mxu0 %v1703
    %1776 = vmatpush.msra.mxu0 %v1701
    %1777 = vmatpush.msra.mxu0 %v1699
    %1778 = vmatpush.msra.mxu0 %v1697
    %1779 = vmatpush.msra.mxu0 %v1695
    %1780 = vmatpush.msra.mxu0 %v1693
    %1781 = vmatpush.msra.mxu0 %v1691
    %1782 = vmatpush.msra.mxu0 %v1689
    %1783 = vmatpush.msra.mxu0 %v1687
    %1784 = vmatpush.msra.mxu0 %v1685
    %1785 = vmatpush.msra.mxu0 %v1683
    %1786 = vmatpush.msra.mxu0 %v1681
    %1787 = vmatmul.f32.gmra.mxu0 %v1657
    %v1788 = vpop.f32.mrf.mxu0
    %v1789 = vadd.f32 0.0, %v1788
    %1790 = vdwg.mxu0
    %1791 = vmatpush.msra.mxu0 0.0
    %1792 = vmatpush.msra.mxu0 0.0
    %1793 = vmatpush.msra.mxu0 0.0
    %1794 = vmatpush.msra.mxu0 0.0
    %1795 = vmatpush.msra.mxu0 0.0
    %1796 = vmatpush.msra.mxu0 0.0
    %1797 = vmatpush.msra.mxu0 0.0
    %1798 = vmatpush.msra.mxu0 0.0
    %1799 = vmatpush.msra.mxu0 %v1727
    %1800 = vmatpush.msra.mxu0 %v1725
    %1801 = vmatpush.msra.mxu0 %v1723
    %1802 = vmatpush.msra.mxu0 %v1721
    %1803 = vmatpush.msra.mxu0 %v1719
    %1804 = vmatpush.msra.mxu0 %v1717
    %1805 = vmatpush.msra.mxu0 %v1715
    %1806 = vmatpush.msra.mxu0 %v1713
    %1807 = vmatmul.f32.gmra.mxu0 %v1729
    %v1808 = vpop.f32.mrf.mxu0
    %v1809 = vadd.f32 %v1789, %v1808
    %1810 = vdwg.mxu0
    %v1811 = vadd.f32 %v1444, %v1769
    %v1812 = vadd.f32 %v1445, %v1809
    %s1813 = scalar_lea.vmem [#allocation9], 1152
    %v1814 = vld [vmem:[%s1813] sm:$0xff]
    %v1815 = vld [vmem:[%s1813 + $0x8] sm:$0xff]
    %v1816 = vld [vmem:[%s1813 + $0x10] sm:$0xff]
    %v1817 = vld [vmem:[%s1813 + $0x18] sm:$0xff]
    %v1818 = vld [vmem:[%s1813 + $0x20] sm:$0xff]
    %v1819 = vld [vmem:[%s1813 + $0x28] sm:$0xff]
    %v1820 = vld [vmem:[%s1813 + $0x30] sm:$0xff]
    %v1821 = vld [vmem:[%s1813 + $0x38] sm:$0xff]
    %v1822 = vld [vmem:[%s1813 + $0x40] sm:$0xff]
    %v1823 = vld [vmem:[%s1813 + $0x48] sm:$0xff]
    %v1824 = vld [vmem:[%s1813 + $0x50] sm:$0xff]
    %v1825 = vld [vmem:[%s1813 + $0x58] sm:$0xff]
    %v1826 = vld [vmem:[%s1813 + $0x60] sm:$0xff]
    %v1827 = vld [vmem:[%s1813 + $0x68] sm:$0xff]
    %v1828 = vld [vmem:[%s1813 + $0x70] sm:$0xff]
    %v1829 = vld [vmem:[%s1813 + $0x78] sm:$0xff]
    %v1830 = vld [vmem:[%s1813 + $0x80] sm:$0xff]
    %v1831 = vld [vmem:[%s1813 + $0x88] sm:$0xff]
    %v1832 = vld [vmem:[%s1813 + $0x90] sm:$0xff]
    %v1833 = vld [vmem:[%s1813 + $0x98] sm:$0xff]
    %v1834 = vld [vmem:[%s1813 + $0xa0] sm:$0xff]
    %v1835 = vld [vmem:[%s1813 + $0xa8] sm:$0xff]
    %v1836 = vld [vmem:[%s1813 + $0xb0] sm:$0xff]
    %v1837 = vld [vmem:[%s1813 + $0xb8] sm:$0xff]
    %v1838 = vld [vmem:[%s1813 + $0xc0] sm:$0xff]
    %v1839 = vld [vmem:[%s1813 + $0xc8] sm:$0xff]
    %v1840 = vld [vmem:[%s1813 + $0xd0] sm:$0xff]
    %v1841 = vld [vmem:[%s1813 + $0xd8] sm:$0xff]
    %v1842 = vld [vmem:[%s1813 + $0xe0] sm:$0xff]
    %v1843 = vld [vmem:[%s1813 + $0xe8] sm:$0xff]
    %v1844 = vld [vmem:[%s1813 + $0xf0] sm:$0xff]
    %v1845 = vld [vmem:[%s1813 + $0xf8] sm:$0xff]
    %v1846 = vld [vmem:[%s1813 + $0x100] sm:$0xff]
    %v1847 = vld [vmem:[%s1813 + $0x108] sm:$0xff]
    %v1848 = vld [vmem:[%s1813 + $0x110] sm:$0xff]
    %v1849 = vld [vmem:[%s1813 + $0x118] sm:$0xff]
    %v1850 = vld [vmem:[%s1813 + $0x120] sm:$0xff]
    %v1851 = vld [vmem:[%s1813 + $0x128] sm:$0xff]
    %v1852 = vld [vmem:[%s1813 + $0x130] sm:$0xff]
    %v1853 = vld [vmem:[%s1813 + $0x138] sm:$0xff]
    %v1854 = vld [vmem:[%s1813 + $0x140] sm:$0xff]
    %v1855 = vld [vmem:[%s1813 + $0x148] sm:$0xff]
    %v1856 = vld [vmem:[%s1813 + $0x150] sm:$0xff]
    %v1857 = vld [vmem:[%s1813 + $0x158] sm:$0xff]
    %v1858 = vld [vmem:[%s1813 + $0x160] sm:$0xff]
    %v1859 = vld [vmem:[%s1813 + $0x168] sm:$0xff]
    %v1860 = vld [vmem:[%s1813 + $0x170] sm:$0xff]
    %v1861 = vld [vmem:[%s1813 + $0x178] sm:$0xff]
    %s1862 = scalar_lea.vmem [#allocation10], 6
    %v1863 = vld [vmem:[%s1862] sm:$0x3]
    %v1865 = vperm.slane %v1863, 0
    %v1866 = vperm.slane %v1863, 1
    %1869 = vmatpush.msra.mxu0 %v1844
    %1870 = vmatpush.msra.mxu0 %v1842
    %1871 = vmatpush.msra.mxu0 %v1840
    %1872 = vmatpush.msra.mxu0 %v1838
    %1873 = vmatpush.msra.mxu0 %v1836
    %1874 = vmatpush.msra.mxu0 %v1834
    %1875 = vmatpush.msra.mxu0 %v1832
    %1876 = vmatpush.msra.mxu0 %v1830
    %1877 = vmatpush.msra.mxu0 %v1828
    %1878 = vmatpush.msra.mxu0 %v1826
    %1879 = vmatpush.msra.mxu0 %v1824
    %1880 = vmatpush.msra.mxu0 %v1822
    %1881 = vmatpush.msra.mxu0 %v1820
    %1882 = vmatpush.msra.mxu0 %v1818
    %1883 = vmatpush.msra.mxu0 %v1816
    %1884 = vmatpush.msra.mxu0 %v1814
    %1885 = vmatmul.f32.gmra.mxu0 %v264
    %v1886 = vpop.f32.mrf.mxu0
    %v1887 = vadd.f32 %v1865, %v1886
    %1888 = vdwg.mxu0
    %1889 = vmatpush.msra.mxu0 0.0
    %1890 = vmatpush.msra.mxu0 0.0
    %1891 = vmatpush.msra.mxu0 0.0
    %1892 = vmatpush.msra.mxu0 0.0
    %1893 = vmatpush.msra.mxu0 0.0
    %1894 = vmatpush.msra.mxu0 0.0
    %1895 = vmatpush.msra.mxu0 0.0
    %1896 = vmatpush.msra.mxu0 0.0
    %1897 = vmatpush.msra.mxu0 %v1860
    %1898 = vmatpush.msra.mxu0 %v1858
    %1899 = vmatpush.msra.mxu0 %v1856
    %1900 = vmatpush.msra.mxu0 %v1854
    %1901 = vmatpush.msra.mxu0 %v1852
    %1902 = vmatpush.msra.mxu0 %v1850
    %1903 = vmatpush.msra.mxu0 %v1848
    %1904 = vmatpush.msra.mxu0 %v1846
    %1905 = vmatmul.f32.gmra.mxu0 %v766
    %v1906 = vpop.f32.mrf.mxu0
    %v1907 = vadd.f32 %v1887, %v1906
    %1908 = vdwg.mxu0
    %1909 = vmatpush.msra.mxu0 %v1845
    %1910 = vmatpush.msra.mxu0 %v1843
    %1911 = vmatpush.msra.mxu0 %v1841
    %1912 = vmatpush.msra.mxu0 %v1839
    %1913 = vmatpush.msra.mxu0 %v1837
    %1914 = vmatpush.msra.mxu0 %v1835
    %1915 = vmatpush.msra.mxu0 %v1833
    %1916 = vmatpush.msra.mxu0 %v1831
    %1917 = vmatpush.msra.mxu0 %v1829
    %1918 = vmatpush.msra.mxu0 %v1827
    %1919 = vmatpush.msra.mxu0 %v1825
    %1920 = vmatpush.msra.mxu0 %v1823
    %1921 = vmatpush.msra.mxu0 %v1821
    %1922 = vmatpush.msra.mxu0 %v1819
    %1923 = vmatpush.msra.mxu0 %v1817
    %1924 = vmatpush.msra.mxu0 %v1815
    %1925 = vmatmul.f32.gmra.mxu0 %v264
    %v1926 = vpop.f32.mrf.mxu0
    %v1927 = vadd.f32 %v1866, %v1926
    %1928 = vdwg.mxu0
    %1929 = vmatpush.msra.mxu0 0.0
    %1930 = vmatpush.msra.mxu0 0.0
    %1931 = vmatpush.msra.mxu0 0.0
    %1932 = vmatpush.msra.mxu0 0.0
    %1933 = vmatpush.msra.mxu0 0.0
    %1934 = vmatpush.msra.mxu0 0.0
    %1935 = vmatpush.msra.mxu0 0.0
    %1936 = vmatpush.msra.mxu0 0.0
    %1937 = vmatpush.msra.mxu0 %v1861
    %1938 = vmatpush.msra.mxu0 %v1859
    %1939 = vmatpush.msra.mxu0 %v1857
    %1940 = vmatpush.msra.mxu0 %v1855
    %1941 = vmatpush.msra.mxu0 %v1853
    %1942 = vmatpush.msra.mxu0 %v1851
    %1943 = vmatpush.msra.mxu0 %v1849
    %1944 = vmatpush.msra.mxu0 %v1847
    %1945 = vmatmul.f32.gmra.mxu0 %v766
    %v1946 = vpop.f32.mrf.mxu0
    %v1947 = vadd.f32 %v1927, %v1946
    %1948 = vdwg.mxu0
    %v1950 = vsel %vm764, %v1947, 0
    %1952 = vmatpush.xpose.msra.mxu0 0.0
    %1953 = vmatpush.xpose.msra.mxu0 0.0
    %1954 = vmatpush.xpose.msra.mxu0 0.0
    %1955 = vmatpush.xpose.msra.mxu0 0.0
    %1956 = vmatpush.xpose.msra.mxu0 0.0
    %1957 = vmatpush.xpose.msra.mxu0 0.0
    %1958 = vmatpush.xpose.msra.mxu0 0.0
    %1959 = vmatpush.xpose.msra.mxu0 0.0
    %1960 = vmatpush.xpose.msra.mxu0 0.0
    %1961 = vmatpush.xpose.msra.mxu0 0.0
    %1962 = vmatpush.xpose.msra.mxu0 0.0
    %1963 = vmatpush.xpose.msra.mxu0 0.0
    %1964 = vmatpush.xpose.msra.mxu0 0.0
    %1965 = vmatpush.xpose.msra.mxu0 0.0
    %1966 = vmatpush.xpose.msra.mxu0 0.0
    %1967 = vmatpush.xpose.msra.mxu0 %v264
    %1968 = vmatmul.f32.gmra.mxu0 %v1907
    %v1969 = vpop.f32.mrf.mxu0
    %v1970 = vadd.f32 0.0, %v1969
    %1971 = vdwg.mxu0
    %1972 = vmatpush.xpose.msra.mxu0 0.0
    %1973 = vmatpush.xpose.msra.mxu0 0.0
    %1974 = vmatpush.xpose.msra.mxu0 0.0
    %1975 = vmatpush.xpose.msra.mxu0 0.0
    %1976 = vmatpush.xpose.msra.mxu0 0.0
    %1977 = vmatpush.xpose.msra.mxu0 0.0
    %1978 = vmatpush.xpose.msra.mxu0 0.0
    %1979 = vmatpush.xpose.msra.mxu0 0.0
    %1980 = vmatpush.xpose.msra.mxu0 0.0
    %1981 = vmatpush.xpose.msra.mxu0 0.0
    %1982 = vmatpush.xpose.msra.mxu0 0.0
    %1983 = vmatpush.xpose.msra.mxu0 0.0
    %1984 = vmatpush.xpose.msra.mxu0 0.0
    %1985 = vmatpush.xpose.msra.mxu0 0.0
    %1986 = vmatpush.xpose.msra.mxu0 0.0
    %1987 = vmatpush.xpose.msra.mxu0 %v766
    %1988 = vmatmul.f32.gmra.mxu0 %v1950
    %v1989 = vpop.f32.mrf.mxu0
    %v1990 = vadd.f32 %v1970, %v1989
    %1991 = vdwg.mxu0
    %v1992 = vsel %vm891, %v1990, -inf
    %1993 = vmax.xlane.f32.xlu0 %v1992
    %v1994 = vpop.xlane.xlu0 %1993
    %v1995 = vsub.f32 %v1990, %v1994
    %v1996 = vmul.f32 %v1995, 1.442695
    %v1997 = vpow.pop %v1996
    %v1998 = vsel %vm891, %v1997, 0.0
    %1999 = vadd.xlane.f32.xlu0 %v1998
    %v2000 = vpop.xlane.xlu0 %1999
    %v2001 = vrcp.pop %v2000
    %v2002 = vmul.f32 %v1997, %v2001
    %v2004 = vsel %vm891, %v2002, 0
    %2006 = vmatpush.msra.mxu0 0.0
    %2007 = vmatpush.msra.mxu0 0.0
    %2008 = vmatpush.msra.mxu0 0.0
    %2009 = vmatpush.msra.mxu0 0.0
    %2010 = vmatpush.msra.mxu0 0.0
    %2011 = vmatpush.msra.mxu0 0.0
    %2012 = vmatpush.msra.mxu0 0.0
    %2013 = vmatpush.msra.mxu0 0.0
    %2014 = vmatpush.msra.mxu0 0.0
    %2015 = vmatpush.msra.mxu0 0.0
    %2016 = vmatpush.msra.mxu0 0.0
    %2017 = vmatpush.msra.mxu0 0.0
    %2018 = vmatpush.msra.mxu0 0.0
    %2019 = vmatpush.msra.mxu0 0.0
    %2020 = vmatpush.msra.mxu0 0.0
    %2021 = vmatpush.msra.mxu0 %v264
    %2022 = vmatmul.f32.gmra.mxu0 %v2004
    %v2023 = vpop.f32.mrf.mxu0
    %v2024 = vadd.f32 0.0, %v2023
    %2025 = vdwg.mxu0
    %2026 = vmatpush.msra.mxu0 0.0
    %2027 = vmatpush.msra.mxu0 0.0
    %2028 = vmatpush.msra.mxu0 0.0
    %2029 = vmatpush.msra.mxu0 0.0
    %2030 = vmatpush.msra.mxu0 0.0
    %2031 = vmatpush.msra.mxu0 0.0
    %2032 = vmatpush.msra.mxu0 0.0
    %2033 = vmatpush.msra.mxu0 0.0
    %2034 = vmatpush.msra.mxu0 0.0
    %2035 = vmatpush.msra.mxu0 0.0
    %2036 = vmatpush.msra.mxu0 0.0
    %2037 = vmatpush.msra.mxu0 0.0
    %2038 = vmatpush.msra.mxu0 0.0
    %2039 = vmatpush.msra.mxu0 0.0
    %2040 = vmatpush.msra.mxu0 0.0
    %2041 = vmatpush.msra.mxu0 %v265
    %2042 = vmatmul.f32.gmra.mxu0 %v2004
    %v2043 = vpop.f32.mrf.mxu0
    %v2044 = vadd.f32 0.0, %v2043
    %2045 = vdwg.mxu0
    %s2046 = scalar_lea.vmem [#allocation12], 1152
    %v2047 = vld [vmem:[%s2046] sm:$0xff]
    %v2048 = vld [vmem:[%s2046 + $0x8] sm:$0xff]
    %v2049 = vld [vmem:[%s2046 + $0x10] sm:$0xff]
    %v2050 = vld [vmem:[%s2046 + $0x18] sm:$0xff]
    %v2051 = vld [vmem:[%s2046 + $0x20] sm:$0xff]
    %v2052 = vld [vmem:[%s2046 + $0x28] sm:$0xff]
    %v2053 = vld [vmem:[%s2046 + $0x30] sm:$0xff]
    %v2054 = vld [vmem:[%s2046 + $0x38] sm:$0xff]
    %v2055 = vld [vmem:[%s2046 + $0x40] sm:$0xff]
    %v2056 = vld [vmem:[%s2046 + $0x48] sm:$0xff]
    %v2057 = vld [vmem:[%s2046 + $0x50] sm:$0xff]
    %v2058 = vld [vmem:[%s2046 + $0x58] sm:$0xff]
    %v2059 = vld [vmem:[%s2046 + $0x60] sm:$0xff]
    %v2060 = vld [vmem:[%s2046 + $0x68] sm:$0xff]
    %v2061 = vld [vmem:[%s2046 + $0x70] sm:$0xff]
    %v2062 = vld [vmem:[%s2046 + $0x78] sm:$0xff]
    %v2063 = vld [vmem:[%s2046 + $0x80] sm:$0xff]
    %v2064 = vld [vmem:[%s2046 + $0x88] sm:$0xff]
    %v2065 = vld [vmem:[%s2046 + $0x90] sm:$0xff]
    %v2066 = vld [vmem:[%s2046 + $0x98] sm:$0xff]
    %v2067 = vld [vmem:[%s2046 + $0xa0] sm:$0xff]
    %v2068 = vld [vmem:[%s2046 + $0xa8] sm:$0xff]
    %v2069 = vld [vmem:[%s2046 + $0xb0] sm:$0xff]
    %v2070 = vld [vmem:[%s2046 + $0xb8] sm:$0xff]
    %v2071 = vld [vmem:[%s2046 + $0xc0] sm:$0xff]
    %v2072 = vld [vmem:[%s2046 + $0xc8] sm:$0xff]
    %v2073 = vld [vmem:[%s2046 + $0xd0] sm:$0xff]
    %v2074 = vld [vmem:[%s2046 + $0xd8] sm:$0xff]
    %v2075 = vld [vmem:[%s2046 + $0xe0] sm:$0xff]
    %v2076 = vld [vmem:[%s2046 + $0xe8] sm:$0xff]
    %v2077 = vld [vmem:[%s2046 + $0xf0] sm:$0xff]
    %v2078 = vld [vmem:[%s2046 + $0xf8] sm:$0xff]
    %v2079 = vld [vmem:[%s2046 + $0x100] sm:$0xff]
    %v2080 = vld [vmem:[%s2046 + $0x108] sm:$0xff]
    %v2081 = vld [vmem:[%s2046 + $0x110] sm:$0xff]
    %v2082 = vld [vmem:[%s2046 + $0x118] sm:$0xff]
    %v2083 = vld [vmem:[%s2046 + $0x120] sm:$0xff]
    %v2084 = vld [vmem:[%s2046 + $0x128] sm:$0xff]
    %v2085 = vld [vmem:[%s2046 + $0x130] sm:$0xff]
    %v2086 = vld [vmem:[%s2046 + $0x138] sm:$0xff]
    %v2087 = vld [vmem:[%s2046 + $0x140] sm:$0xff]
    %v2088 = vld [vmem:[%s2046 + $0x148] sm:$0xff]
    %v2089 = vld [vmem:[%s2046 + $0x150] sm:$0xff]
    %v2090 = vld [vmem:[%s2046 + $0x158] sm:$0xff]
    %v2091 = vld [vmem:[%s2046 + $0x160] sm:$0xff]
    %v2092 = vld [vmem:[%s2046 + $0x168] sm:$0xff]
    %v2093 = vld [vmem:[%s2046 + $0x170] sm:$0xff]
    %v2094 = vld [vmem:[%s2046 + $0x178] sm:$0xff]
    %v2096 = vsel %vm764, %v2044, 0
    %2098 = vmatpush.msra.mxu0 %v2077
    %2099 = vmatpush.msra.mxu0 %v2075
    %2100 = vmatpush.msra.mxu0 %v2073
    %2101 = vmatpush.msra.mxu0 %v2071
    %2102 = vmatpush.msra.mxu0 %v2069
    %2103 = vmatpush.msra.mxu0 %v2067
    %2104 = vmatpush.msra.mxu0 %v2065
    %2105 = vmatpush.msra.mxu0 %v2063
    %2106 = vmatpush.msra.mxu0 %v2061
    %2107 = vmatpush.msra.mxu0 %v2059
    %2108 = vmatpush.msra.mxu0 %v2057
    %2109 = vmatpush.msra.mxu0 %v2055
    %2110 = vmatpush.msra.mxu0 %v2053
    %2111 = vmatpush.msra.mxu0 %v2051
    %2112 = vmatpush.msra.mxu0 %v2049
    %2113 = vmatpush.msra.mxu0 %v2047
    %2114 = vmatmul.f32.gmra.mxu0 %v2024
    %v2115 = vpop.f32.mrf.mxu0
    %v2116 = vadd.f32 0.0, %v2115
    %2117 = vdwg.mxu0
    %2118 = vmatpush.msra.mxu0 0.0
    %2119 = vmatpush.msra.mxu0 0.0
    %2120 = vmatpush.msra.mxu0 0.0
    %2121 = vmatpush.msra.mxu0 0.0
    %2122 = vmatpush.msra.mxu0 0.0
    %2123 = vmatpush.msra.mxu0 0.0
    %2124 = vmatpush.msra.mxu0 0.0
    %2125 = vmatpush.msra.mxu0 0.0
    %2126 = vmatpush.msra.mxu0 %v2093
    %2127 = vmatpush.msra.mxu0 %v2091
    %2128 = vmatpush.msra.mxu0 %v2089
    %2129 = vmatpush.msra.mxu0 %v2087
    %2130 = vmatpush.msra.mxu0 %v2085
    %2131 = vmatpush.msra.mxu0 %v2083
    %2132 = vmatpush.msra.mxu0 %v2081
    %2133 = vmatpush.msra.mxu0 %v2079
    %2134 = vmatmul.f32.gmra.mxu0 %v2096
    %v2135 = vpop.f32.mrf.mxu0
    %v2136 = vadd.f32 %v2116, %v2135
    %2137 = vdwg.mxu0
    %2138 = vmatpush.msra.mxu0 %v2078
    %2139 = vmatpush.msra.mxu0 %v2076
    %2140 = vmatpush.msra.mxu0 %v2074
    %2141 = vmatpush.msra.mxu0 %v2072
    %2142 = vmatpush.msra.mxu0 %v2070
    %2143 = vmatpush.msra.mxu0 %v2068
    %2144 = vmatpush.msra.mxu0 %v2066
    %2145 = vmatpush.msra.mxu0 %v2064
    %2146 = vmatpush.msra.mxu0 %v2062
    %2147 = vmatpush.msra.mxu0 %v2060
    %2148 = vmatpush.msra.mxu0 %v2058
    %2149 = vmatpush.msra.mxu0 %v2056
    %2150 = vmatpush.msra.mxu0 %v2054
    %2151 = vmatpush.msra.mxu0 %v2052
    %2152 = vmatpush.msra.mxu0 %v2050
    %2153 = vmatpush.msra.mxu0 %v2048
    %2154 = vmatmul.f32.gmra.mxu0 %v2024
    %v2155 = vpop.f32.mrf.mxu0
    %v2156 = vadd.f32 0.0, %v2155
    %2157 = vdwg.mxu0
    %2158 = vmatpush.msra.mxu0 0.0
    %2159 = vmatpush.msra.mxu0 0.0
    %2160 = vmatpush.msra.mxu0 0.0
    %2161 = vmatpush.msra.mxu0 0.0
    %2162 = vmatpush.msra.mxu0 0.0
    %2163 = vmatpush.msra.mxu0 0.0
    %2164 = vmatpush.msra.mxu0 0.0
    %2165 = vmatpush.msra.mxu0 0.0
    %2166 = vmatpush.msra.mxu0 %v2094
    %2167 = vmatpush.msra.mxu0 %v2092
    %2168 = vmatpush.msra.mxu0 %v2090
    %2169 = vmatpush.msra.mxu0 %v2088
    %2170 = vmatpush.msra.mxu0 %v2086
    %2171 = vmatpush.msra.mxu0 %v2084
    %2172 = vmatpush.msra.mxu0 %v2082
    %2173 = vmatpush.msra.mxu0 %v2080
    %2174 = vmatmul.f32.gmra.mxu0 %v2096
    %v2175 = vpop.f32.mrf.mxu0
    %v2176 = vadd.f32 %v2156, %v2175
    %2177 = vdwg.mxu0
    %v2178 = vadd.f32 %v1811, %v2136
    %v2179 = vadd.f32 %v1812, %v2176
    %s2180 = scalar_lea.vmem [#allocation9], 1536
    %v2181 = vld [vmem:[%s2180] sm:$0xff]
    %v2182 = vld [vmem:[%s2180 + $0x8] sm:$0xff]
    %v2183 = vld [vmem:[%s2180 + $0x10] sm:$0xff]
    %v2184 = vld [vmem:[%s2180 + $0x18] sm:$0xff]
    %v2185 = vld [vmem:[%s2180 + $0x20] sm:$0xff]
    %v2186 = vld [vmem:[%s2180 + $0x28] sm:$0xff]
    %v2187 = vld [vmem:[%s2180 + $0x30] sm:$0xff]
    %v2188 = vld [vmem:[%s2180 + $0x38] sm:$0xff]
    %v2189 = vld [vmem:[%s2180 + $0x40] sm:$0xff]
    %v2190 = vld [vmem:[%s2180 + $0x48] sm:$0xff]
    %v2191 = vld [vmem:[%s2180 + $0x50] sm:$0xff]
    %v2192 = vld [vmem:[%s2180 + $0x58] sm:$0xff]
    %v2193 = vld [vmem:[%s2180 + $0x60] sm:$0xff]
    %v2194 = vld [vmem:[%s2180 + $0x68] sm:$0xff]
    %v2195 = vld [vmem:[%s2180 + $0x70] sm:$0xff]
    %v2196 = vld [vmem:[%s2180 + $0x78] sm:$0xff]
    %v2197 = vld [vmem:[%s2180 + $0x80] sm:$0xff]
    %v2198 = vld [vmem:[%s2180 + $0x88] sm:$0xff]
    %v2199 = vld [vmem:[%s2180 + $0x90] sm:$0xff]
    %v2200 = vld [vmem:[%s2180 + $0x98] sm:$0xff]
    %v2201 = vld [vmem:[%s2180 + $0xa0] sm:$0xff]
    %v2202 = vld [vmem:[%s2180 + $0xa8] sm:$0xff]
    %v2203 = vld [vmem:[%s2180 + $0xb0] sm:$0xff]
    %v2204 = vld [vmem:[%s2180 + $0xb8] sm:$0xff]
    %v2205 = vld [vmem:[%s2180 + $0xc0] sm:$0xff]
    %v2206 = vld [vmem:[%s2180 + $0xc8] sm:$0xff]
    %v2207 = vld [vmem:[%s2180 + $0xd0] sm:$0xff]
    %v2208 = vld [vmem:[%s2180 + $0xd8] sm:$0xff]
    %v2209 = vld [vmem:[%s2180 + $0xe0] sm:$0xff]
    %v2210 = vld [vmem:[%s2180 + $0xe8] sm:$0xff]
    %v2211 = vld [vmem:[%s2180 + $0xf0] sm:$0xff]
    %v2212 = vld [vmem:[%s2180 + $0xf8] sm:$0xff]
    %v2213 = vld [vmem:[%s2180 + $0x100] sm:$0xff]
    %v2214 = vld [vmem:[%s2180 + $0x108] sm:$0xff]
    %v2215 = vld [vmem:[%s2180 + $0x110] sm:$0xff]
    %v2216 = vld [vmem:[%s2180 + $0x118] sm:$0xff]
    %v2217 = vld [vmem:[%s2180 + $0x120] sm:$0xff]
    %v2218 = vld [vmem:[%s2180 + $0x128] sm:$0xff]
    %v2219 = vld [vmem:[%s2180 + $0x130] sm:$0xff]
    %v2220 = vld [vmem:[%s2180 + $0x138] sm:$0xff]
    %v2221 = vld [vmem:[%s2180 + $0x140] sm:$0xff]
    %v2222 = vld [vmem:[%s2180 + $0x148] sm:$0xff]
    %v2223 = vld [vmem:[%s2180 + $0x150] sm:$0xff]
    %v2224 = vld [vmem:[%s2180 + $0x158] sm:$0xff]
    %v2225 = vld [vmem:[%s2180 + $0x160] sm:$0xff]
    %v2226 = vld [vmem:[%s2180 + $0x168] sm:$0xff]
    %v2227 = vld [vmem:[%s2180 + $0x170] sm:$0xff]
    %v2228 = vld [vmem:[%s2180 + $0x178] sm:$0xff]
    %s2229 = scalar_lea.vmem [#allocation10], 8
    %v2230 = vld [vmem:[%s2229] sm:$0x3]
    %v2232 = vperm.slane %v2230, 0
    %v2233 = vperm.slane %v2230, 1
    %2236 = vmatpush.msra.mxu0 %v2211
    %2237 = vmatpush.msra.mxu0 %v2209
    %2238 = vmatpush.msra.mxu0 %v2207
    %2239 = vmatpush.msra.mxu0 %v2205
    %2240 = vmatpush.msra.mxu0 %v2203
    %2241 = vmatpush.msra.mxu0 %v2201
    %2242 = vmatpush.msra.mxu0 %v2199
    %2243 = vmatpush.msra.mxu0 %v2197
    %2244 = vmatpush.msra.mxu0 %v2195
    %2245 = vmatpush.msra.mxu0 %v2193
    %2246 = vmatpush.msra.mxu0 %v2191
    %2247 = vmatpush.msra.mxu0 %v2189
    %2248 = vmatpush.msra.mxu0 %v2187
    %2249 = vmatpush.msra.mxu0 %v2185
    %2250 = vmatpush.msra.mxu0 %v2183
    %2251 = vmatpush.msra.mxu0 %v2181
    %2252 = vmatmul.f32.gmra.mxu0 %v264
    %v2253 = vpop.f32.mrf.mxu0
    %v2254 = vadd.f32 %v2232, %v2253
    %2255 = vdwg.mxu0
    %2256 = vmatpush.msra.mxu0 0.0
    %2257 = vmatpush.msra.mxu0 0.0
    %2258 = vmatpush.msra.mxu0 0.0
    %2259 = vmatpush.msra.mxu0 0.0
    %2260 = vmatpush.msra.mxu0 0.0
    %2261 = vmatpush.msra.mxu0 0.0
    %2262 = vmatpush.msra.mxu0 0.0
    %2263 = vmatpush.msra.mxu0 0.0
    %2264 = vmatpush.msra.mxu0 %v2227
    %2265 = vmatpush.msra.mxu0 %v2225
    %2266 = vmatpush.msra.mxu0 %v2223
    %2267 = vmatpush.msra.mxu0 %v2221
    %2268 = vmatpush.msra.mxu0 %v2219
    %2269 = vmatpush.msra.mxu0 %v2217
    %2270 = vmatpush.msra.mxu0 %v2215
    %2271 = vmatpush.msra.mxu0 %v2213
    %2272 = vmatmul.f32.gmra.mxu0 %v766
    %v2273 = vpop.f32.mrf.mxu0
    %v2274 = vadd.f32 %v2254, %v2273
    %2275 = vdwg.mxu0
    %2276 = vmatpush.msra.mxu0 %v2212
    %2277 = vmatpush.msra.mxu0 %v2210
    %2278 = vmatpush.msra.mxu0 %v2208
    %2279 = vmatpush.msra.mxu0 %v2206
    %2280 = vmatpush.msra.mxu0 %v2204
    %2281 = vmatpush.msra.mxu0 %v2202
    %2282 = vmatpush.msra.mxu0 %v2200
    %2283 = vmatpush.msra.mxu0 %v2198
    %2284 = vmatpush.msra.mxu0 %v2196
    %2285 = vmatpush.msra.mxu0 %v2194
    %2286 = vmatpush.msra.mxu0 %v2192
    %2287 = vmatpush.msra.mxu0 %v2190
    %2288 = vmatpush.msra.mxu0 %v2188
    %2289 = vmatpush.msra.mxu0 %v2186
    %2290 = vmatpush.msra.mxu0 %v2184
    %2291 = vmatpush.msra.mxu0 %v2182
    %2292 = vmatmul.f32.gmra.mxu0 %v264
    %v2293 = vpop.f32.mrf.mxu0
    %v2294 = vadd.f32 %v2233, %v2293
    %2295 = vdwg.mxu0
    %2296 = vmatpush.msra.mxu0 0.0
    %2297 = vmatpush.msra.mxu0 0.0
    %2298 = vmatpush.msra.mxu0 0.0
    %2299 = vmatpush.msra.mxu0 0.0
    %2300 = vmatpush.msra.mxu0 0.0
    %2301 = vmatpush.msra.mxu0 0.0
    %2302 = vmatpush.msra.mxu0 0.0
    %2303 = vmatpush.msra.mxu0 0.0
    %2304 = vmatpush.msra.mxu0 %v2228
    %2305 = vmatpush.msra.mxu0 %v2226
    %2306 = vmatpush.msra.mxu0 %v2224
    %2307 = vmatpush.msra.mxu0 %v2222
    %2308 = vmatpush.msra.mxu0 %v2220
    %2309 = vmatpush.msra.mxu0 %v2218
    %2310 = vmatpush.msra.mxu0 %v2216
    %2311 = vmatpush.msra.mxu0 %v2214
    %2312 = vmatmul.f32.gmra.mxu0 %v766
    %v2313 = vpop.f32.mrf.mxu0
    %v2314 = vadd.f32 %v2294, %v2313
    %2315 = vdwg.mxu0
    %v2317 = vsel %vm764, %v2314, 0
    %2319 = vmatpush.xpose.msra.mxu0 0.0
    %2320 = vmatpush.xpose.msra.mxu0 0.0
    %2321 = vmatpush.xpose.msra.mxu0 0.0
    %2322 = vmatpush.xpose.msra.mxu0 0.0
    %2323 = vmatpush.xpose.msra.mxu0 0.0
    %2324 = vmatpush.xpose.msra.mxu0 0.0
    %2325 = vmatpush.xpose.msra.mxu0 0.0
    %2326 = vmatpush.xpose.msra.mxu0 0.0
    %2327 = vmatpush.xpose.msra.mxu0 0.0
    %2328 = vmatpush.xpose.msra.mxu0 0.0
    %2329 = vmatpush.xpose.msra.mxu0 0.0
    %2330 = vmatpush.xpose.msra.mxu0 0.0
    %2331 = vmatpush.xpose.msra.mxu0 0.0
    %2332 = vmatpush.xpose.msra.mxu0 0.0
    %2333 = vmatpush.xpose.msra.mxu0 0.0
    %2334 = vmatpush.xpose.msra.mxu0 %v264
    %2335 = vmatmul.f32.gmra.mxu0 %v2274
    %v2336 = vpop.f32.mrf.mxu0
    %v2337 = vadd.f32 0.0, %v2336
    %2338 = vdwg.mxu0
    %2339 = vmatpush.xpose.msra.mxu0 0.0
    %2340 = vmatpush.xpose.msra.mxu0 0.0
    %2341 = vmatpush.xpose.msra.mxu0 0.0
    %2342 = vmatpush.xpose.msra.mxu0 0.0
    %2343 = vmatpush.xpose.msra.mxu0 0.0
    %2344 = vmatpush.xpose.msra.mxu0 0.0
    %2345 = vmatpush.xpose.msra.mxu0 0.0
    %2346 = vmatpush.xpose.msra.mxu0 0.0
    %2347 = vmatpush.xpose.msra.mxu0 0.0
    %2348 = vmatpush.xpose.msra.mxu0 0.0
    %2349 = vmatpush.xpose.msra.mxu0 0.0
    %2350 = vmatpush.xpose.msra.mxu0 0.0
    %2351 = vmatpush.xpose.msra.mxu0 0.0
    %2352 = vmatpush.xpose.msra.mxu0 0.0
    %2353 = vmatpush.xpose.msra.mxu0 0.0
    %2354 = vmatpush.xpose.msra.mxu0 %v766
    %2355 = vmatmul.f32.gmra.mxu0 %v2317
    %v2356 = vpop.f32.mrf.mxu0
    %v2357 = vadd.f32 %v2337, %v2356
    %2358 = vdwg.mxu0
    %v2359 = vsel %vm891, %v2357, -inf
    %2360 = vmax.xlane.f32.xlu0 %v2359
    %v2361 = vpop.xlane.xlu0 %2360
    %v2362 = vsub.f32 %v2357, %v2361
    %v2363 = vmul.f32 %v2362, 1.442695
    %v2364 = vpow.pop %v2363
    %v2365 = vsel %vm891, %v2364, 0.0
    %2366 = vadd.xlane.f32.xlu0 %v2365
    %v2367 = vpop.xlane.xlu0 %2366
    %v2368 = vrcp.pop %v2367
    %v2369 = vmul.f32 %v2364, %v2368
    %v2371 = vsel %vm891, %v2369, 0
    %2373 = vmatpush.msra.mxu0 0.0
    %2374 = vmatpush.msra.mxu0 0.0
    %2375 = vmatpush.msra.mxu0 0.0
    %2376 = vmatpush.msra.mxu0 0.0
    %2377 = vmatpush.msra.mxu0 0.0
    %2378 = vmatpush.msra.mxu0 0.0
    %2379 = vmatpush.msra.mxu0 0.0
    %2380 = vmatpush.msra.mxu0 0.0
    %2381 = vmatpush.msra.mxu0 0.0
    %2382 = vmatpush.msra.mxu0 0.0
    %2383 = vmatpush.msra.mxu0 0.0
    %2384 = vmatpush.msra.mxu0 0.0
    %2385 = vmatpush.msra.mxu0 0.0
    %2386 = vmatpush.msra.mxu0 0.0
    %2387 = vmatpush.msra.mxu0 0.0
    %2388 = vmatpush.msra.mxu0 %v264
    %2389 = vmatmul.f32.gmra.mxu0 %v2371
    %v2390 = vpop.f32.mrf.mxu0
    %v2391 = vadd.f32 0.0, %v2390
    %2392 = vdwg.mxu0
    %2393 = vmatpush.msra.mxu0 0.0
    %2394 = vmatpush.msra.mxu0 0.0
    %2395 = vmatpush.msra.mxu0 0.0
    %2396 = vmatpush.msra.mxu0 0.0
    %2397 = vmatpush.msra.mxu0 0.0
    %2398 = vmatpush.msra.mxu0 0.0
    %2399 = vmatpush.msra.mxu0 0.0
    %2400 = vmatpush.msra.mxu0 0.0
    %2401 = vmatpush.msra.mxu0 0.0
    %2402 = vmatpush.msra.mxu0 0.0
    %2403 = vmatpush.msra.mxu0 0.0
    %2404 = vmatpush.msra.mxu0 0.0
    %2405 = vmatpush.msra.mxu0 0.0
    %2406 = vmatpush.msra.mxu0 0.0
    %2407 = vmatpush.msra.mxu0 0.0
    %2408 = vmatpush.msra.mxu0 %v265
    %2409 = vmatmul.f32.gmra.mxu0 %v2371
    %v2410 = vpop.f32.mrf.mxu0
    %v2411 = vadd.f32 0.0, %v2410
    %2412 = vdwg.mxu0
    %s2413 = scalar_lea.vmem [#allocation12], 1536
    %v2414 = vld [vmem:[%s2413] sm:$0xff]
    %v2415 = vld [vmem:[%s2413 + $0x8] sm:$0xff]
    %v2416 = vld [vmem:[%s2413 + $0x10] sm:$0xff]
    %v2417 = vld [vmem:[%s2413 + $0x18] sm:$0xff]
    %v2418 = vld [vmem:[%s2413 + $0x20] sm:$0xff]
    %v2419 = vld [vmem:[%s2413 + $0x28] sm:$0xff]
    %v2420 = vld [vmem:[%s2413 + $0x30] sm:$0xff]
    %v2421 = vld [vmem:[%s2413 + $0x38] sm:$0xff]
    %v2422 = vld [vmem:[%s2413 + $0x40] sm:$0xff]
    %v2423 = vld [vmem:[%s2413 + $0x48] sm:$0xff]
    %v2424 = vld [vmem:[%s2413 + $0x50] sm:$0xff]
    %v2425 = vld [vmem:[%s2413 + $0x58] sm:$0xff]
    %v2426 = vld [vmem:[%s2413 + $0x60] sm:$0xff]
    %v2427 = vld [vmem:[%s2413 + $0x68] sm:$0xff]
    %v2428 = vld [vmem:[%s2413 + $0x70] sm:$0xff]
    %v2429 = vld [vmem:[%s2413 + $0x78] sm:$0xff]
    %v2430 = vld [vmem:[%s2413 + $0x80] sm:$0xff]
    %v2431 = vld [vmem:[%s2413 + $0x88] sm:$0xff]
    %v2432 = vld [vmem:[%s2413 + $0x90] sm:$0xff]
    %v2433 = vld [vmem:[%s2413 + $0x98] sm:$0xff]
    %v2434 = vld [vmem:[%s2413 + $0xa0] sm:$0xff]
    %v2435 = vld [vmem:[%s2413 + $0xa8] sm:$0xff]
    %v2436 = vld [vmem:[%s2413 + $0xb0] sm:$0xff]
    %v2437 = vld [vmem:[%s2413 + $0xb8] sm:$0xff]
    %v2438 = vld [vmem:[%s2413 + $0xc0] sm:$0xff]
    %v2439 = vld [vmem:[%s2413 + $0xc8] sm:$0xff]
    %v2440 = vld [vmem:[%s2413 + $0xd0] sm:$0xff]
    %v2441 = vld [vmem:[%s2413 + $0xd8] sm:$0xff]
    %v2442 = vld [vmem:[%s2413 + $0xe0] sm:$0xff]
    %v2443 = vld [vmem:[%s2413 + $0xe8] sm:$0xff]
    %v2444 = vld [vmem:[%s2413 + $0xf0] sm:$0xff]
    %v2445 = vld [vmem:[%s2413 + $0xf8] sm:$0xff]
    %v2446 = vld [vmem:[%s2413 + $0x100] sm:$0xff]
    %v2447 = vld [vmem:[%s2413 + $0x108] sm:$0xff]
    %v2448 = vld [vmem:[%s2413 + $0x110] sm:$0xff]
    %v2449 = vld [vmem:[%s2413 + $0x118] sm:$0xff]
    %v2450 = vld [vmem:[%s2413 + $0x120] sm:$0xff]
    %v2451 = vld [vmem:[%s2413 + $0x128] sm:$0xff]
    %v2452 = vld [vmem:[%s2413 + $0x130] sm:$0xff]
    %v2453 = vld [vmem:[%s2413 + $0x138] sm:$0xff]
    %v2454 = vld [vmem:[%s2413 + $0x140] sm:$0xff]
    %v2455 = vld [vmem:[%s2413 + $0x148] sm:$0xff]
    %v2456 = vld [vmem:[%s2413 + $0x150] sm:$0xff]
    %v2457 = vld [vmem:[%s2413 + $0x158] sm:$0xff]
    %v2458 = vld [vmem:[%s2413 + $0x160] sm:$0xff]
    %v2459 = vld [vmem:[%s2413 + $0x168] sm:$0xff]
    %v2460 = vld [vmem:[%s2413 + $0x170] sm:$0xff]
    %v2461 = vld [vmem:[%s2413 + $0x178] sm:$0xff]
    %v2463 = vsel %vm764, %v2411, 0
    %2465 = vmatpush.msra.mxu0 %v2444
    %2466 = vmatpush.msra.mxu0 %v2442
    %2467 = vmatpush.msra.mxu0 %v2440
    %2468 = vmatpush.msra.mxu0 %v2438
    %2469 = vmatpush.msra.mxu0 %v2436
    %2470 = vmatpush.msra.mxu0 %v2434
    %2471 = vmatpush.msra.mxu0 %v2432
    %2472 = vmatpush.msra.mxu0 %v2430
    %2473 = vmatpush.msra.mxu0 %v2428
    %2474 = vmatpush.msra.mxu0 %v2426
    %2475 = vmatpush.msra.mxu0 %v2424
    %2476 = vmatpush.msra.mxu0 %v2422
    %2477 = vmatpush.msra.mxu0 %v2420
    %2478 = vmatpush.msra.mxu0 %v2418
    %2479 = vmatpush.msra.mxu0 %v2416
    %2480 = vmatpush.msra.mxu0 %v2414
    %2481 = vmatmul.f32.gmra.mxu0 %v2391
    %v2482 = vpop.f32.mrf.mxu0
    %v2483 = vadd.f32 0.0, %v2482
    %2484 = vdwg.mxu0
    %2485 = vmatpush.msra.mxu0 0.0
    %2486 = vmatpush.msra.mxu0 0.0
    %2487 = vmatpush.msra.mxu0 0.0
    %2488 = vmatpush.msra.mxu0 0.0
    %2489 = vmatpush.msra.mxu0 0.0
    %2490 = vmatpush.msra.mxu0 0.0
    %2491 = vmatpush.msra.mxu0 0.0
    %2492 = vmatpush.msra.mxu0 0.0
    %2493 = vmatpush.msra.mxu0 %v2460
    %2494 = vmatpush.msra.mxu0 %v2458
    %2495 = vmatpush.msra.mxu0 %v2456
    %2496 = vmatpush.msra.mxu0 %v2454
    %2497 = vmatpush.msra.mxu0 %v2452
    %2498 = vmatpush.msra.mxu0 %v2450
    %2499 = vmatpush.msra.mxu0 %v2448
    %2500 = vmatpush.msra.mxu0 %v2446
    %2501 = vmatmul.f32.gmra.mxu0 %v2463
    %v2502 = vpop.f32.mrf.mxu0
    %v2503 = vadd.f32 %v2483, %v2502
    %2504 = vdwg.mxu0
    %2505 = vmatpush.msra.mxu0 %v2445
    %2506 = vmatpush.msra.mxu0 %v2443
    %2507 = vmatpush.msra.mxu0 %v2441
    %2508 = vmatpush.msra.mxu0 %v2439
    %2509 = vmatpush.msra.mxu0 %v2437
    %2510 = vmatpush.msra.mxu0 %v2435
    %2511 = vmatpush.msra.mxu0 %v2433
    %2512 = vmatpush.msra.mxu0 %v2431
    %2513 = vmatpush.msra.mxu0 %v2429
    %2514 = vmatpush.msra.mxu0 %v2427
    %2515 = vmatpush.msra.mxu0 %v2425
    %2516 = vmatpush.msra.mxu0 %v2423
    %2517 = vmatpush.msra.mxu0 %v2421
    %2518 = vmatpush.msra.mxu0 %v2419
    %2519 = vmatpush.msra.mxu0 %v2417
    %2520 = vmatpush.msra.mxu0 %v2415
    %2521 = vmatmul.f32.gmra.mxu0 %v2391
    %v2522 = vpop.f32.mrf.mxu0
    %v2523 = vadd.f32 0.0, %v2522
    %2524 = vdwg.mxu0
    %2525 = vmatpush.msra.mxu0 0.0
    %2526 = vmatpush.msra.mxu0 0.0
    %2527 = vmatpush.msra.mxu0 0.0
    %2528 = vmatpush.msra.mxu0 0.0
    %2529 = vmatpush.msra.mxu0 0.0
    %2530 = vmatpush.msra.mxu0 0.0
    %2531 = vmatpush.msra.mxu0 0.0
    %2532 = vmatpush.msra.mxu0 0.0
    %2533 = vmatpush.msra.mxu0 %v2461
    %2534 = vmatpush.msra.mxu0 %v2459
    %2535 = vmatpush.msra.mxu0 %v2457
    %2536 = vmatpush.msra.mxu0 %v2455
    %2537 = vmatpush.msra.mxu0 %v2453
    %2538 = vmatpush.msra.mxu0 %v2451
    %2539 = vmatpush.msra.mxu0 %v2449
    %2540 = vmatpush.msra.mxu0 %v2447
    %2541 = vmatmul.f32.gmra.mxu0 %v2463
    %v2542 = vpop.f32.mrf.mxu0
    %v2543 = vadd.f32 %v2523, %v2542
    %2544 = vdwg.mxu0
    %v2545 = vadd.f32 %v2178, %v2503
    %v2546 = vadd.f32 %v2179, %v2543
    %s2547 = scalar_lea.vmem [#allocation9], 1920
    %v2548 = vld [vmem:[%s2547] sm:$0xff]
    %v2549 = vld [vmem:[%s2547 + $0x8] sm:$0xff]
    %v2550 = vld [vmem:[%s2547 + $0x10] sm:$0xff]
    %v2551 = vld [vmem:[%s2547 + $0x18] sm:$0xff]
    %v2552 = vld [vmem:[%s2547 + $0x20] sm:$0xff]
    %v2553 = vld [vmem:[%s2547 + $0x28] sm:$0xff]
    %v2554 = vld [vmem:[%s2547 + $0x30] sm:$0xff]
    %v2555 = vld [vmem:[%s2547 + $0x38] sm:$0xff]
    %v2556 = vld [vmem:[%s2547 + $0x40] sm:$0xff]
    %v2557 = vld [vmem:[%s2547 + $0x48] sm:$0xff]
    %v2558 = vld [vmem:[%s2547 + $0x50] sm:$0xff]
    %v2559 = vld [vmem:[%s2547 + $0x58] sm:$0xff]
    %v2560 = vld [vmem:[%s2547 + $0x60] sm:$0xff]
    %v2561 = vld [vmem:[%s2547 + $0x68] sm:$0xff]
    %v2562 = vld [vmem:[%s2547 + $0x70] sm:$0xff]
    %v2563 = vld [vmem:[%s2547 + $0x78] sm:$0xff]
    %v2564 = vld [vmem:[%s2547 + $0x80] sm:$0xff]
    %v2565 = vld [vmem:[%s2547 + $0x88] sm:$0xff]
    %v2566 = vld [vmem:[%s2547 + $0x90] sm:$0xff]
    %v2567 = vld [vmem:[%s2547 + $0x98] sm:$0xff]
    %v2568 = vld [vmem:[%s2547 + $0xa0] sm:$0xff]
    %v2569 = vld [vmem:[%s2547 + $0xa8] sm:$0xff]
    %v2570 = vld [vmem:[%s2547 + $0xb0] sm:$0xff]
    %v2571 = vld [vmem:[%s2547 + $0xb8] sm:$0xff]
    %v2572 = vld [vmem:[%s2547 + $0xc0] sm:$0xff]
    %v2573 = vld [vmem:[%s2547 + $0xc8] sm:$0xff]
    %v2574 = vld [vmem:[%s2547 + $0xd0] sm:$0xff]
    %v2575 = vld [vmem:[%s2547 + $0xd8] sm:$0xff]
    %v2576 = vld [vmem:[%s2547 + $0xe0] sm:$0xff]
    %v2577 = vld [vmem:[%s2547 + $0xe8] sm:$0xff]
    %v2578 = vld [vmem:[%s2547 + $0xf0] sm:$0xff]
    %v2579 = vld [vmem:[%s2547 + $0xf8] sm:$0xff]
    %v2580 = vld [vmem:[%s2547 + $0x100] sm:$0xff]
    %v2581 = vld [vmem:[%s2547 + $0x108] sm:$0xff]
    %v2582 = vld [vmem:[%s2547 + $0x110] sm:$0xff]
    %v2583 = vld [vmem:[%s2547 + $0x118] sm:$0xff]
    %v2584 = vld [vmem:[%s2547 + $0x120] sm:$0xff]
    %v2585 = vld [vmem:[%s2547 + $0x128] sm:$0xff]
    %v2586 = vld [vmem:[%s2547 + $0x130] sm:$0xff]
    %v2587 = vld [vmem:[%s2547 + $0x138] sm:$0xff]
    %v2588 = vld [vmem:[%s2547 + $0x140] sm:$0xff]
    %v2589 = vld [vmem:[%s2547 + $0x148] sm:$0xff]
    %v2590 = vld [vmem:[%s2547 + $0x150] sm:$0xff]
    %v2591 = vld [vmem:[%s2547 + $0x158] sm:$0xff]
    %v2592 = vld [vmem:[%s2547 + $0x160] sm:$0xff]
    %v2593 = vld [vmem:[%s2547 + $0x168] sm:$0xff]
    %v2594 = vld [vmem:[%s2547 + $0x170] sm:$0xff]
    %v2595 = vld [vmem:[%s2547 + $0x178] sm:$0xff]
    %s2596 = scalar_lea.vmem [#allocation10], 10
    %v2597 = vld [vmem:[%s2596] sm:$0x3]
    %v2599 = vperm.slane %v2597, 0
    %v2600 = vperm.slane %v2597, 1
    %2603 = vmatpush.msra.mxu0 %v2578
    %2604 = vmatpush.msra.mxu0 %v2576
    %2605 = vmatpush.msra.mxu0 %v2574
    %2606 = vmatpush.msra.mxu0 %v2572
    %2607 = vmatpush.msra.mxu0 %v2570
    %2608 = vmatpush.msra.mxu0 %v2568
    %2609 = vmatpush.msra.mxu0 %v2566
    %2610 = vmatpush.msra.mxu0 %v2564
    %2611 = vmatpush.msra.mxu0 %v2562
    %2612 = vmatpush.msra.mxu0 %v2560
    %2613 = vmatpush.msra.mxu0 %v2558
    %2614 = vmatpush.msra.mxu0 %v2556
    %2615 = vmatpush.msra.mxu0 %v2554
    %2616 = vmatpush.msra.mxu0 %v2552
    %2617 = vmatpush.msra.mxu0 %v2550
    %2618 = vmatpush.msra.mxu0 %v2548
    %2619 = vmatmul.f32.gmra.mxu0 %v264
    %v2620 = vpop.f32.mrf.mxu0
    %v2621 = vadd.f32 %v2599, %v2620
    %2622 = vdwg.mxu0
    %2623 = vmatpush.msra.mxu0 0.0
    %2624 = vmatpush.msra.mxu0 0.0
    %2625 = vmatpush.msra.mxu0 0.0
    %2626 = vmatpush.msra.mxu0 0.0
    %2627 = vmatpush.msra.mxu0 0.0
    %2628 = vmatpush.msra.mxu0 0.0
    %2629 = vmatpush.msra.mxu0 0.0
    %2630 = vmatpush.msra.mxu0 0.0
    %2631 = vmatpush.msra.mxu0 %v2594
    %2632 = vmatpush.msra.mxu0 %v2592
    %2633 = vmatpush.msra.mxu0 %v2590
    %2634 = vmatpush.msra.mxu0 %v2588
    %2635 = vmatpush.msra.mxu0 %v2586
    %2636 = vmatpush.msra.mxu0 %v2584
    %2637 = vmatpush.msra.mxu0 %v2582
    %2638 = vmatpush.msra.mxu0 %v2580
    %2639 = vmatmul.f32.gmra.mxu0 %v766
    %v2640 = vpop.f32.mrf.mxu0
    %v2641 = vadd.f32 %v2621, %v2640
    %2642 = vdwg.mxu0
    %2643 = vmatpush.msra.mxu0 %v2579
    %2644 = vmatpush.msra.mxu0 %v2577
    %2645 = vmatpush.msra.mxu0 %v2575
    %2646 = vmatpush.msra.mxu0 %v2573
    %2647 = vmatpush.msra.mxu0 %v2571
    %2648 = vmatpush.msra.mxu0 %v2569
    %2649 = vmatpush.msra.mxu0 %v2567
    %2650 = vmatpush.msra.mxu0 %v2565
    %2651 = vmatpush.msra.mxu0 %v2563
    %2652 = vmatpush.msra.mxu0 %v2561
    %2653 = vmatpush.msra.mxu0 %v2559
    %2654 = vmatpush.msra.mxu0 %v2557
    %2655 = vmatpush.msra.mxu0 %v2555
    %2656 = vmatpush.msra.mxu0 %v2553
    %2657 = vmatpush.msra.mxu0 %v2551
    %2658 = vmatpush.msra.mxu0 %v2549
    %2659 = vmatmul.f32.gmra.mxu0 %v264
    %v2660 = vpop.f32.mrf.mxu0
    %v2661 = vadd.f32 %v2600, %v2660
    %2662 = vdwg.mxu0
    %2663 = vmatpush.msra.mxu0 0.0
    %2664 = vmatpush.msra.mxu0 0.0
    %2665 = vmatpush.msra.mxu0 0.0
    %2666 = vmatpush.msra.mxu0 0.0
    %2667 = vmatpush.msra.mxu0 0.0
    %2668 = vmatpush.msra.mxu0 0.0
    %2669 = vmatpush.msra.mxu0 0.0
    %2670 = vmatpush.msra.mxu0 0.0
    %2671 = vmatpush.msra.mxu0 %v2595
    %2672 = vmatpush.msra.mxu0 %v2593
    %2673 = vmatpush.msra.mxu0 %v2591
    %2674 = vmatpush.msra.mxu0 %v2589
    %2675 = vmatpush.msra.mxu0 %v2587
    %2676 = vmatpush.msra.mxu0 %v2585
    %2677 = vmatpush.msra.mxu0 %v2583
    %2678 = vmatpush.msra.mxu0 %v2581
    %2679 = vmatmul.f32.gmra.mxu0 %v766
    %v2680 = vpop.f32.mrf.mxu0
    %v2681 = vadd.f32 %v2661, %v2680
    %2682 = vdwg.mxu0
    %v2684 = vsel %vm764, %v2681, 0
    %2686 = vmatpush.xpose.msra.mxu0 0.0
    %2687 = vmatpush.xpose.msra.mxu0 0.0
    %2688 = vmatpush.xpose.msra.mxu0 0.0
    %2689 = vmatpush.xpose.msra.mxu0 0.0
    %2690 = vmatpush.xpose.msra.mxu0 0.0
    %2691 = vmatpush.xpose.msra.mxu0 0.0
    %2692 = vmatpush.xpose.msra.mxu0 0.0
    %2693 = vmatpush.xpose.msra.mxu0 0.0
    %2694 = vmatpush.xpose.msra.mxu0 0.0
    %2695 = vmatpush.xpose.msra.mxu0 0.0
    %2696 = vmatpush.xpose.msra.mxu0 0.0
    %2697 = vmatpush.xpose.msra.mxu0 0.0
    %2698 = vmatpush.xpose.msra.mxu0 0.0
    %2699 = vmatpush.xpose.msra.mxu0 0.0
    %2700 = vmatpush.xpose.msra.mxu0 0.0
    %2701 = vmatpush.xpose.msra.mxu0 %v264
    %2702 = vmatmul.f32.gmra.mxu0 %v2641
    %v2703 = vpop.f32.mrf.mxu0
    %v2704 = vadd.f32 0.0, %v2703
    %2705 = vdwg.mxu0
    %2706 = vmatpush.xpose.msra.mxu0 0.0
    %2707 = vmatpush.xpose.msra.mxu0 0.0
    %2708 = vmatpush.xpose.msra.mxu0 0.0
    %2709 = vmatpush.xpose.msra.mxu0 0.0
    %2710 = vmatpush.xpose.msra.mxu0 0.0
    %2711 = vmatpush.xpose.msra.mxu0 0.0
    %2712 = vmatpush.xpose.msra.mxu0 0.0
    %2713 = vmatpush.xpose.msra.mxu0 0.0
    %2714 = vmatpush.xpose.msra.mxu0 0.0
    %2715 = vmatpush.xpose.msra.mxu0 0.0
    %2716 = vmatpush.xpose.msra.mxu0 0.0
    %2717 = vmatpush.xpose.msra.mxu0 0.0
    %2718 = vmatpush.xpose.msra.mxu0 0.0
    %2719 = vmatpush.xpose.msra.mxu0 0.0
    %2720 = vmatpush.xpose.msra.mxu0 0.0
    %2721 = vmatpush.xpose.msra.mxu0 %v766
    %2722 = vmatmul.f32.gmra.mxu0 %v2684
    %v2723 = vpop.f32.mrf.mxu0
    %v2724 = vadd.f32 %v2704, %v2723
    %2725 = vdwg.mxu0
    %v2726 = vsel %vm891, %v2724, -inf
    %2727 = vmax.xlane.f32.xlu0 %v2726
    %v2728 = vpop.xlane.xlu0 %2727
    %v2729 = vsub.f32 %v2724, %v2728
    %v2730 = vmul.f32 %v2729, 1.442695
    %v2731 = vpow.pop %v2730
    %v2732 = vsel %vm891, %v2731, 0.0
    %2733 = vadd.xlane.f32.xlu0 %v2732
    %v2734 = vpop.xlane.xlu0 %2733
    %v2735 = vrcp.pop %v2734
    %v2736 = vmul.f32 %v2731, %v2735
    %v2738 = vsel %vm891, %v2736, 0
    %2740 = vmatpush.msra.mxu0 0.0
    %2741 = vmatpush.msra.mxu0 0.0
    %2742 = vmatpush.msra.mxu0 0.0
    %2743 = vmatpush.msra.mxu0 0.0
    %2744 = vmatpush.msra.mxu0 0.0
    %2745 = vmatpush.msra.mxu0 0.0
    %2746 = vmatpush.msra.mxu0 0.0
    %2747 = vmatpush.msra.mxu0 0.0
    %2748 = vmatpush.msra.mxu0 0.0
    %2749 = vmatpush.msra.mxu0 0.0
    %2750 = vmatpush.msra.mxu0 0.0
    %2751 = vmatpush.msra.mxu0 0.0
    %2752 = vmatpush.msra.mxu0 0.0
    %2753 = vmatpush.msra.mxu0 0.0
    %2754 = vmatpush.msra.mxu0 0.0
    %2755 = vmatpush.msra.mxu0 %v264
    %2756 = vmatmul.f32.gmra.mxu0 %v2738
    %v2757 = vpop.f32.mrf.mxu0
    %v2758 = vadd.f32 0.0, %v2757
    %2759 = vdwg.mxu0
    %2760 = vmatpush.msra.mxu0 0.0
    %2761 = vmatpush.msra.mxu0 0.0
    %2762 = vmatpush.msra.mxu0 0.0
    %2763 = vmatpush.msra.mxu0 0.0
    %2764 = vmatpush.msra.mxu0 0.0
    %2765 = vmatpush.msra.mxu0 0.0
    %2766 = vmatpush.msra.mxu0 0.0
    %2767 = vmatpush.msra.mxu0 0.0
    %2768 = vmatpush.msra.mxu0 0.0
    %2769 = vmatpush.msra.mxu0 0.0
    %2770 = vmatpush.msra.mxu0 0.0
    %2771 = vmatpush.msra.mxu0 0.0
    %2772 = vmatpush.msra.mxu0 0.0
    %2773 = vmatpush.msra.mxu0 0.0
    %2774 = vmatpush.msra.mxu0 0.0
    %2775 = vmatpush.msra.mxu0 %v265
    %2776 = vmatmul.f32.gmra.mxu0 %v2738
    %v2777 = vpop.f32.mrf.mxu0
    %v2778 = vadd.f32 0.0, %v2777
    %2779 = vdwg.mxu0
    %s2780 = scalar_lea.vmem [#allocation12], 1920
    %v2781 = vld [vmem:[%s2780] sm:$0xff]
    %v2782 = vld [vmem:[%s2780 + $0x8] sm:$0xff]
    %v2783 = vld [vmem:[%s2780 + $0x10] sm:$0xff]
    %v2784 = vld [vmem:[%s2780 + $0x18] sm:$0xff]
    %v2785 = vld [vmem:[%s2780 + $0x20] sm:$0xff]
    %v2786 = vld [vmem:[%s2780 + $0x28] sm:$0xff]
    %v2787 = vld [vmem:[%s2780 + $0x30] sm:$0xff]
    %v2788 = vld [vmem:[%s2780 + $0x38] sm:$0xff]
    %v2789 = vld [vmem:[%s2780 + $0x40] sm:$0xff]
    %v2790 = vld [vmem:[%s2780 + $0x48] sm:$0xff]
    %v2791 = vld [vmem:[%s2780 + $0x50] sm:$0xff]
    %v2792 = vld [vmem:[%s2780 + $0x58] sm:$0xff]
    %v2793 = vld [vmem:[%s2780 + $0x60] sm:$0xff]
    %v2794 = vld [vmem:[%s2780 + $0x68] sm:$0xff]
    %v2795 = vld [vmem:[%s2780 + $0x70] sm:$0xff]
    %v2796 = vld [vmem:[%s2780 + $0x78] sm:$0xff]
    %v2797 = vld [vmem:[%s2780 + $0x80] sm:$0xff]
    %v2798 = vld [vmem:[%s2780 + $0x88] sm:$0xff]
    %v2799 = vld [vmem:[%s2780 + $0x90] sm:$0xff]
    %v2800 = vld [vmem:[%s2780 + $0x98] sm:$0xff]
    %v2801 = vld [vmem:[%s2780 + $0xa0] sm:$0xff]
    %v2802 = vld [vmem:[%s2780 + $0xa8] sm:$0xff]
    %v2803 = vld [vmem:[%s2780 + $0xb0] sm:$0xff]
    %v2804 = vld [vmem:[%s2780 + $0xb8] sm:$0xff]
    %v2805 = vld [vmem:[%s2780 + $0xc0] sm:$0xff]
    %v2806 = vld [vmem:[%s2780 + $0xc8] sm:$0xff]
    %v2807 = vld [vmem:[%s2780 + $0xd0] sm:$0xff]
    %v2808 = vld [vmem:[%s2780 + $0xd8] sm:$0xff]
    %v2809 = vld [vmem:[%s2780 + $0xe0] sm:$0xff]
    %v2810 = vld [vmem:[%s2780 + $0xe8] sm:$0xff]
    %v2811 = vld [vmem:[%s2780 + $0xf0] sm:$0xff]
    %v2812 = vld [vmem:[%s2780 + $0xf8] sm:$0xff]
    %v2813 = vld [vmem:[%s2780 + $0x100] sm:$0xff]
    %v2814 = vld [vmem:[%s2780 + $0x108] sm:$0xff]
    %v2815 = vld [vmem:[%s2780 + $0x110] sm:$0xff]
    %v2816 = vld [vmem:[%s2780 + $0x118] sm:$0xff]
    %v2817 = vld [vmem:[%s2780 + $0x120] sm:$0xff]
    %v2818 = vld [vmem:[%s2780 + $0x128] sm:$0xff]
    %v2819 = vld [vmem:[%s2780 + $0x130] sm:$0xff]
    %v2820 = vld [vmem:[%s2780 + $0x138] sm:$0xff]
    %v2821 = vld [vmem:[%s2780 + $0x140] sm:$0xff]
    %v2822 = vld [vmem:[%s2780 + $0x148] sm:$0xff]
    %v2823 = vld [vmem:[%s2780 + $0x150] sm:$0xff]
    %v2824 = vld [vmem:[%s2780 + $0x158] sm:$0xff]
    %v2825 = vld [vmem:[%s2780 + $0x160] sm:$0xff]
    %v2826 = vld [vmem:[%s2780 + $0x168] sm:$0xff]
    %v2827 = vld [vmem:[%s2780 + $0x170] sm:$0xff]
    %v2828 = vld [vmem:[%s2780 + $0x178] sm:$0xff]
    %v2830 = vsel %vm764, %v2778, 0
    %2832 = vmatpush.msra.mxu0 %v2811
    %2833 = vmatpush.msra.mxu0 %v2809
    %2834 = vmatpush.msra.mxu0 %v2807
    %2835 = vmatpush.msra.mxu0 %v2805
    %2836 = vmatpush.msra.mxu0 %v2803
    %2837 = vmatpush.msra.mxu0 %v2801
    %2838 = vmatpush.msra.mxu0 %v2799
    %2839 = vmatpush.msra.mxu0 %v2797
    %2840 = vmatpush.msra.mxu0 %v2795
    %2841 = vmatpush.msra.mxu0 %v2793
    %2842 = vmatpush.msra.mxu0 %v2791
    %2843 = vmatpush.msra.mxu0 %v2789
    %2844 = vmatpush.msra.mxu0 %v2787
    %2845 = vmatpush.msra.mxu0 %v2785
    %2846 = vmatpush.msra.mxu0 %v2783
    %2847 = vmatpush.msra.mxu0 %v2781
    %2848 = vmatmul.f32.gmra.mxu0 %v2758
    %v2849 = vpop.f32.mrf.mxu0
    %v2850 = vadd.f32 0.0, %v2849
    %2851 = vdwg.mxu0
    %2852 = vmatpush.msra.mxu0 0.0
    %2853 = vmatpush.msra.mxu0 0.0
    %2854 = vmatpush.msra.mxu0 0.0
    %2855 = vmatpush.msra.mxu0 0.0
    %2856 = vmatpush.msra.mxu0 0.0
    %2857 = vmatpush.msra.mxu0 0.0
    %2858 = vmatpush.msra.mxu0 0.0
    %2859 = vmatpush.msra.mxu0 0.0
    %2860 = vmatpush.msra.mxu0 %v2827
    %2861 = vmatpush.msra.mxu0 %v2825
    %2862 = vmatpush.msra.mxu0 %v2823
    %2863 = vmatpush.msra.mxu0 %v2821
    %2864 = vmatpush.msra.mxu0 %v2819
    %2865 = vmatpush.msra.mxu0 %v2817
    %2866 = vmatpush.msra.mxu0 %v2815
    %2867 = vmatpush.msra.mxu0 %v2813
    %2868 = vmatmul.f32.gmra.mxu0 %v2830
    %v2869 = vpop.f32.mrf.mxu0
    %v2870 = vadd.f32 %v2850, %v2869
    %2871 = vdwg.mxu0
    %2872 = vmatpush.msra.mxu0 %v2812
    %2873 = vmatpush.msra.mxu0 %v2810
    %2874 = vmatpush.msra.mxu0 %v2808
    %2875 = vmatpush.msra.mxu0 %v2806
    %2876 = vmatpush.msra.mxu0 %v2804
    %2877 = vmatpush.msra.mxu0 %v2802
    %2878 = vmatpush.msra.mxu0 %v2800
    %2879 = vmatpush.msra.mxu0 %v2798
    %2880 = vmatpush.msra.mxu0 %v2796
    %2881 = vmatpush.msra.mxu0 %v2794
    %2882 = vmatpush.msra.mxu0 %v2792
    %2883 = vmatpush.msra.mxu0 %v2790
    %2884 = vmatpush.msra.mxu0 %v2788
    %2885 = vmatpush.msra.mxu0 %v2786
    %2886 = vmatpush.msra.mxu0 %v2784
    %2887 = vmatpush.msra.mxu0 %v2782
    %2888 = vmatmul.f32.gmra.mxu0 %v2758
    %v2889 = vpop.f32.mrf.mxu0
    %v2890 = vadd.f32 0.0, %v2889
    %2891 = vdwg.mxu0
    %2892 = vmatpush.msra.mxu0 0.0
    %2893 = vmatpush.msra.mxu0 0.0
    %2894 = vmatpush.msra.mxu0 0.0
    %2895 = vmatpush.msra.mxu0 0.0
    %2896 = vmatpush.msra.mxu0 0.0
    %2897 = vmatpush.msra.mxu0 0.0
    %2898 = vmatpush.msra.mxu0 0.0
    %2899 = vmatpush.msra.mxu0 0.0
    %2900 = vmatpush.msra.mxu0 %v2828
    %2901 = vmatpush.msra.mxu0 %v2826
    %2902 = vmatpush.msra.mxu0 %v2824
    %2903 = vmatpush.msra.mxu0 %v2822
    %2904 = vmatpush.msra.mxu0 %v2820
    %2905 = vmatpush.msra.mxu0 %v2818
    %2906 = vmatpush.msra.mxu0 %v2816
    %2907 = vmatpush.msra.mxu0 %v2814
    %2908 = vmatmul.f32.gmra.mxu0 %v2830
    %v2909 = vpop.f32.mrf.mxu0
    %v2910 = vadd.f32 %v2890, %v2909
    %2911 = vdwg.mxu0
    %v2912 = vadd.f32 %v2545, %v2870
    %v2913 = vadd.f32 %v2546, %v2910
    %s2914 = scalar_lea.vmem [#allocation9], 2304
    %v2915 = vld [vmem:[%s2914] sm:$0xff]
    %v2916 = vld [vmem:[%s2914 + $0x8] sm:$0xff]
    %v2917 = vld [vmem:[%s2914 + $0x10] sm:$0xff]
    %v2918 = vld [vmem:[%s2914 + $0x18] sm:$0xff]
    %v2919 = vld [vmem:[%s2914 + $0x20] sm:$0xff]
    %v2920 = vld [vmem:[%s2914 + $0x28] sm:$0xff]
    %v2921 = vld [vmem:[%s2914 + $0x30] sm:$0xff]
    %v2922 = vld [vmem:[%s2914 + $0x38] sm:$0xff]
    %v2923 = vld [vmem:[%s2914 + $0x40] sm:$0xff]
    %v2924 = vld [vmem:[%s2914 + $0x48] sm:$0xff]
    %v2925 = vld [vmem:[%s2914 + $0x50] sm:$0xff]
    %v2926 = vld [vmem:[%s2914 + $0x58] sm:$0xff]
    %v2927 = vld [vmem:[%s2914 + $0x60] sm:$0xff]
    %v2928 = vld [vmem:[%s2914 + $0x68] sm:$0xff]
    %v2929 = vld [vmem:[%s2914 + $0x70] sm:$0xff]
    %v2930 = vld [vmem:[%s2914 + $0x78] sm:$0xff]
    %v2931 = vld [vmem:[%s2914 + $0x80] sm:$0xff]
    %v2932 = vld [vmem:[%s2914 + $0x88] sm:$0xff]
    %v2933 = vld [vmem:[%s2914 + $0x90] sm:$0xff]
    %v2934 = vld [vmem:[%s2914 + $0x98] sm:$0xff]
    %v2935 = vld [vmem:[%s2914 + $0xa0] sm:$0xff]
    %v2936 = vld [vmem:[%s2914 + $0xa8] sm:$0xff]
    %v2937 = vld [vmem:[%s2914 + $0xb0] sm:$0xff]
    %v2938 = vld [vmem:[%s2914 + $0xb8] sm:$0xff]
    %v2939 = vld [vmem:[%s2914 + $0xc0] sm:$0xff]
    %v2940 = vld [vmem:[%s2914 + $0xc8] sm:$0xff]
    %v2941 = vld [vmem:[%s2914 + $0xd0] sm:$0xff]
    %v2942 = vld [vmem:[%s2914 + $0xd8] sm:$0xff]
    %v2943 = vld [vmem:[%s2914 + $0xe0] sm:$0xff]
    %v2944 = vld [vmem:[%s2914 + $0xe8] sm:$0xff]
    %v2945 = vld [vmem:[%s2914 + $0xf0] sm:$0xff]
    %v2946 = vld [vmem:[%s2914 + $0xf8] sm:$0xff]
    %v2947 = vld [vmem:[%s2914 + $0x100] sm:$0xff]
    %v2948 = vld [vmem:[%s2914 + $0x108] sm:$0xff]
    %v2949 = vld [vmem:[%s2914 + $0x110] sm:$0xff]
    %v2950 = vld [vmem:[%s2914 + $0x118] sm:$0xff]
    %v2951 = vld [vmem:[%s2914 + $0x120] sm:$0xff]
    %v2952 = vld [vmem:[%s2914 + $0x128] sm:$0xff]
    %v2953 = vld [vmem:[%s2914 + $0x130] sm:$0xff]
    %v2954 = vld [vmem:[%s2914 + $0x138] sm:$0xff]
    %v2955 = vld [vmem:[%s2914 + $0x140] sm:$0xff]
    %v2956 = vld [vmem:[%s2914 + $0x148] sm:$0xff]
    %v2957 = vld [vmem:[%s2914 + $0x150] sm:$0xff]
    %v2958 = vld [vmem:[%s2914 + $0x158] sm:$0xff]
    %v2959 = vld [vmem:[%s2914 + $0x160] sm:$0xff]
    %v2960 = vld [vmem:[%s2914 + $0x168] sm:$0xff]
    %v2961 = vld [vmem:[%s2914 + $0x170] sm:$0xff]
    %v2962 = vld [vmem:[%s2914 + $0x178] sm:$0xff]
    %s2963 = scalar_lea.vmem [#allocation10], 12
    %v2964 = vld [vmem:[%s2963] sm:$0x3]
    %v2966 = vperm.slane %v2964, 0
    %v2967 = vperm.slane %v2964, 1
    %2970 = vmatpush.msra.mxu0 %v2945
    %2971 = vmatpush.msra.mxu0 %v2943
    %2972 = vmatpush.msra.mxu0 %v2941
    %2973 = vmatpush.msra.mxu0 %v2939
    %2974 = vmatpush.msra.mxu0 %v2937
    %2975 = vmatpush.msra.mxu0 %v2935
    %2976 = vmatpush.msra.mxu0 %v2933
    %2977 = vmatpush.msra.mxu0 %v2931
    %2978 = vmatpush.msra.mxu0 %v2929
    %2979 = vmatpush.msra.mxu0 %v2927
    %2980 = vmatpush.msra.mxu0 %v2925
    %2981 = vmatpush.msra.mxu0 %v2923
    %2982 = vmatpush.msra.mxu0 %v2921
    %2983 = vmatpush.msra.mxu0 %v2919
    %2984 = vmatpush.msra.mxu0 %v2917
    %2985 = vmatpush.msra.mxu0 %v2915
    %2986 = vmatmul.f32.gmra.mxu0 %v264
    %v2987 = vpop.f32.mrf.mxu0
    %v2988 = vadd.f32 %v2966, %v2987
    %2989 = vdwg.mxu0
    %2990 = vmatpush.msra.mxu0 0.0
    %2991 = vmatpush.msra.mxu0 0.0
    %2992 = vmatpush.msra.mxu0 0.0
    %2993 = vmatpush.msra.mxu0 0.0
    %2994 = vmatpush.msra.mxu0 0.0
    %2995 = vmatpush.msra.mxu0 0.0
    %2996 = vmatpush.msra.mxu0 0.0
    %2997 = vmatpush.msra.mxu0 0.0
    %2998 = vmatpush.msra.mxu0 %v2961
    %2999 = vmatpush.msra.mxu0 %v2959
    %3000 = vmatpush.msra.mxu0 %v2957
    %3001 = vmatpush.msra.mxu0 %v2955
    %3002 = vmatpush.msra.mxu0 %v2953
    %3003 = vmatpush.msra.mxu0 %v2951
    %3004 = vmatpush.msra.mxu0 %v2949
    %3005 = vmatpush.msra.mxu0 %v2947
    %3006 = vmatmul.f32.gmra.mxu0 %v766
    %v3007 = vpop.f32.mrf.mxu0
    %v3008 = vadd.f32 %v2988, %v3007
    %3009 = vdwg.mxu0
    %3010 = vmatpush.msra.mxu0 %v2946
    %3011 = vmatpush.msra.mxu0 %v2944
    %3012 = vmatpush.msra.mxu0 %v2942
    %3013 = vmatpush.msra.mxu0 %v2940
    %3014 = vmatpush.msra.mxu0 %v2938
    %3015 = vmatpush.msra.mxu0 %v2936
    %3016 = vmatpush.msra.mxu0 %v2934
    %3017 = vmatpush.msra.mxu0 %v2932
    %3018 = vmatpush.msra.mxu0 %v2930
    %3019 = vmatpush.msra.mxu0 %v2928
    %3020 = vmatpush.msra.mxu0 %v2926
    %3021 = vmatpush.msra.mxu0 %v2924
    %3022 = vmatpush.msra.mxu0 %v2922
    %3023 = vmatpush.msra.mxu0 %v2920
    %3024 = vmatpush.msra.mxu0 %v2918
    %3025 = vmatpush.msra.mxu0 %v2916
    %3026 = vmatmul.f32.gmra.mxu0 %v264
    %v3027 = vpop.f32.mrf.mxu0
    %v3028 = vadd.f32 %v2967, %v3027
    %3029 = vdwg.mxu0
    %3030 = vmatpush.msra.mxu0 0.0
    %3031 = vmatpush.msra.mxu0 0.0
    %3032 = vmatpush.msra.mxu0 0.0
    %3033 = vmatpush.msra.mxu0 0.0
    %3034 = vmatpush.msra.mxu0 0.0
    %3035 = vmatpush.msra.mxu0 0.0
    %3036 = vmatpush.msra.mxu0 0.0
    %3037 = vmatpush.msra.mxu0 0.0
    %3038 = vmatpush.msra.mxu0 %v2962
    %3039 = vmatpush.msra.mxu0 %v2960
    %3040 = vmatpush.msra.mxu0 %v2958
    %3041 = vmatpush.msra.mxu0 %v2956
    %3042 = vmatpush.msra.mxu0 %v2954
    %3043 = vmatpush.msra.mxu0 %v2952
    %3044 = vmatpush.msra.mxu0 %v2950
    %3045 = vmatpush.msra.mxu0 %v2948
    %3046 = vmatmul.f32.gmra.mxu0 %v766
    %v3047 = vpop.f32.mrf.mxu0
    %v3048 = vadd.f32 %v3028, %v3047
    %3049 = vdwg.mxu0
    %v3051 = vsel %vm764, %v3048, 0
    %3053 = vmatpush.xpose.msra.mxu0 0.0
    %3054 = vmatpush.xpose.msra.mxu0 0.0
    %3055 = vmatpush.xpose.msra.mxu0 0.0
    %3056 = vmatpush.xpose.msra.mxu0 0.0
    %3057 = vmatpush.xpose.msra.mxu0 0.0
    %3058 = vmatpush.xpose.msra.mxu0 0.0
    %3059 = vmatpush.xpose.msra.mxu0 0.0
    %3060 = vmatpush.xpose.msra.mxu0 0.0
    %3061 = vmatpush.xpose.msra.mxu0 0.0
    %3062 = vmatpush.xpose.msra.mxu0 0.0
    %3063 = vmatpush.xpose.msra.mxu0 0.0
    %3064 = vmatpush.xpose.msra.mxu0 0.0
    %3065 = vmatpush.xpose.msra.mxu0 0.0
    %3066 = vmatpush.xpose.msra.mxu0 0.0
    %3067 = vmatpush.xpose.msra.mxu0 0.0
    %3068 = vmatpush.xpose.msra.mxu0 %v264
    %3069 = vmatmul.f32.gmra.mxu0 %v3008
    %v3070 = vpop.f32.mrf.mxu0
    %v3071 = vadd.f32 0.0, %v3070
    %3072 = vdwg.mxu0
    %3073 = vmatpush.xpose.msra.mxu0 0.0
    %3074 = vmatpush.xpose.msra.mxu0 0.0
    %3075 = vmatpush.xpose.msra.mxu0 0.0
    %3076 = vmatpush.xpose.msra.mxu0 0.0
    %3077 = vmatpush.xpose.msra.mxu0 0.0
    %3078 = vmatpush.xpose.msra.mxu0 0.0
    %3079 = vmatpush.xpose.msra.mxu0 0.0
    %3080 = vmatpush.xpose.msra.mxu0 0.0
    %3081 = vmatpush.xpose.msra.mxu0 0.0
    %3082 = vmatpush.xpose.msra.mxu0 0.0
    %3083 = vmatpush.xpose.msra.mxu0 0.0
    %3084 = vmatpush.xpose.msra.mxu0 0.0
    %3085 = vmatpush.xpose.msra.mxu0 0.0
    %3086 = vmatpush.xpose.msra.mxu0 0.0
    %3087 = vmatpush.xpose.msra.mxu0 0.0
    %3088 = vmatpush.xpose.msra.mxu0 %v766
    %3089 = vmatmul.f32.gmra.mxu0 %v3051
    %v3090 = vpop.f32.mrf.mxu0
    %v3091 = vadd.f32 %v3071, %v3090
    %3092 = vdwg.mxu0
    %v3093 = vsel %vm891, %v3091, -inf
    %3094 = vmax.xlane.f32.xlu0 %v3093
    %v3095 = vpop.xlane.xlu0 %3094
    %v3096 = vsub.f32 %v3091, %v3095
    %v3097 = vmul.f32 %v3096, 1.442695
    %v3098 = vpow.pop %v3097
    %v3099 = vsel %vm891, %v3098, 0.0
    %3100 = vadd.xlane.f32.xlu0 %v3099
    %v3101 = vpop.xlane.xlu0 %3100
    %v3102 = vrcp.pop %v3101
    %v3103 = vmul.f32 %v3098, %v3102
    %v3105 = vsel %vm891, %v3103, 0
    %3107 = vmatpush.msra.mxu0 0.0
    %3108 = vmatpush.msra.mxu0 0.0
    %3109 = vmatpush.msra.mxu0 0.0
    %3110 = vmatpush.msra.mxu0 0.0
    %3111 = vmatpush.msra.mxu0 0.0
    %3112 = vmatpush.msra.mxu0 0.0
    %3113 = vmatpush.msra.mxu0 0.0
    %3114 = vmatpush.msra.mxu0 0.0
    %3115 = vmatpush.msra.mxu0 0.0
    %3116 = vmatpush.msra.mxu0 0.0
    %3117 = vmatpush.msra.mxu0 0.0
    %3118 = vmatpush.msra.mxu0 0.0
    %3119 = vmatpush.msra.mxu0 0.0
    %3120 = vmatpush.msra.mxu0 0.0
    %3121 = vmatpush.msra.mxu0 0.0
    %3122 = vmatpush.msra.mxu0 %v264
    %3123 = vmatmul.f32.gmra.mxu0 %v3105
    %v3124 = vpop.f32.mrf.mxu0
    %v3125 = vadd.f32 0.0, %v3124
    %3126 = vdwg.mxu0
    %3127 = vmatpush.msra.mxu0 0.0
    %3128 = vmatpush.msra.mxu0 0.0
    %3129 = vmatpush.msra.mxu0 0.0
    %3130 = vmatpush.msra.mxu0 0.0
    %3131 = vmatpush.msra.mxu0 0.0
    %3132 = vmatpush.msra.mxu0 0.0
    %3133 = vmatpush.msra.mxu0 0.0
    %3134 = vmatpush.msra.mxu0 0.0
    %3135 = vmatpush.msra.mxu0 0.0
    %3136 = vmatpush.msra.mxu0 0.0
    %3137 = vmatpush.msra.mxu0 0.0
    %3138 = vmatpush.msra.mxu0 0.0
    %3139 = vmatpush.msra.mxu0 0.0
    %3140 = vmatpush.msra.mxu0 0.0
    %3141 = vmatpush.msra.mxu0 0.0
    %3142 = vmatpush.msra.mxu0 %v265
    %3143 = vmatmul.f32.gmra.mxu0 %v3105
    %v3144 = vpop.f32.mrf.mxu0
    %v3145 = vadd.f32 0.0, %v3144
    %3146 = vdwg.mxu0
    %s3147 = scalar_lea.vmem [#allocation12], 2304
    %v3148 = vld [vmem:[%s3147] sm:$0xff]
    %v3149 = vld [vmem:[%s3147 + $0x8] sm:$0xff]
    %v3150 = vld [vmem:[%s3147 + $0x10] sm:$0xff]
    %v3151 = vld [vmem:[%s3147 + $0x18] sm:$0xff]
    %v3152 = vld [vmem:[%s3147 + $0x20] sm:$0xff]
    %v3153 = vld [vmem:[%s3147 + $0x28] sm:$0xff]
    %v3154 = vld [vmem:[%s3147 + $0x30] sm:$0xff]
    %v3155 = vld [vmem:[%s3147 + $0x38] sm:$0xff]
    %v3156 = vld [vmem:[%s3147 + $0x40] sm:$0xff]
    %v3157 = vld [vmem:[%s3147 + $0x48] sm:$0xff]
    %v3158 = vld [vmem:[%s3147 + $0x50] sm:$0xff]
    %v3159 = vld [vmem:[%s3147 + $0x58] sm:$0xff]
    %v3160 = vld [vmem:[%s3147 + $0x60] sm:$0xff]
    %v3161 = vld [vmem:[%s3147 + $0x68] sm:$0xff]
    %v3162 = vld [vmem:[%s3147 + $0x70] sm:$0xff]
    %v3163 = vld [vmem:[%s3147 + $0x78] sm:$0xff]
    %v3164 = vld [vmem:[%s3147 + $0x80] sm:$0xff]
    %v3165 = vld [vmem:[%s3147 + $0x88] sm:$0xff]
    %v3166 = vld [vmem:[%s3147 + $0x90] sm:$0xff]
    %v3167 = vld [vmem:[%s3147 + $0x98] sm:$0xff]
    %v3168 = vld [vmem:[%s3147 + $0xa0] sm:$0xff]
    %v3169 = vld [vmem:[%s3147 + $0xa8] sm:$0xff]
    %v3170 = vld [vmem:[%s3147 + $0xb0] sm:$0xff]
    %v3171 = vld [vmem:[%s3147 + $0xb8] sm:$0xff]
    %v3172 = vld [vmem:[%s3147 + $0xc0] sm:$0xff]
    %v3173 = vld [vmem:[%s3147 + $0xc8] sm:$0xff]
    %v3174 = vld [vmem:[%s3147 + $0xd0] sm:$0xff]
    %v3175 = vld [vmem:[%s3147 + $0xd8] sm:$0xff]
    %v3176 = vld [vmem:[%s3147 + $0xe0] sm:$0xff]
    %v3177 = vld [vmem:[%s3147 + $0xe8] sm:$0xff]
    %v3178 = vld [vmem:[%s3147 + $0xf0] sm:$0xff]
    %v3179 = vld [vmem:[%s3147 + $0xf8] sm:$0xff]
    %v3180 = vld [vmem:[%s3147 + $0x100] sm:$0xff]
    %v3181 = vld [vmem:[%s3147 + $0x108] sm:$0xff]
    %v3182 = vld [vmem:[%s3147 + $0x110] sm:$0xff]
    %v3183 = vld [vmem:[%s3147 + $0x118] sm:$0xff]
    %v3184 = vld [vmem:[%s3147 + $0x120] sm:$0xff]
    %v3185 = vld [vmem:[%s3147 + $0x128] sm:$0xff]
    %v3186 = vld [vmem:[%s3147 + $0x130] sm:$0xff]
    %v3187 = vld [vmem:[%s3147 + $0x138] sm:$0xff]
    %v3188 = vld [vmem:[%s3147 + $0x140] sm:$0xff]
    %v3189 = vld [vmem:[%s3147 + $0x148] sm:$0xff]
    %v3190 = vld [vmem:[%s3147 + $0x150] sm:$0xff]
    %v3191 = vld [vmem:[%s3147 + $0x158] sm:$0xff]
    %v3192 = vld [vmem:[%s3147 + $0x160] sm:$0xff]
    %v3193 = vld [vmem:[%s3147 + $0x168] sm:$0xff]
    %v3194 = vld [vmem:[%s3147 + $0x170] sm:$0xff]
    %v3195 = vld [vmem:[%s3147 + $0x178] sm:$0xff]
    %v3197 = vsel %vm764, %v3145, 0
    %3199 = vmatpush.msra.mxu0 %v3178
    %3200 = vmatpush.msra.mxu0 %v3176
    %3201 = vmatpush.msra.mxu0 %v3174
    %3202 = vmatpush.msra.mxu0 %v3172
    %3203 = vmatpush.msra.mxu0 %v3170
    %3204 = vmatpush.msra.mxu0 %v3168
    %3205 = vmatpush.msra.mxu0 %v3166
    %3206 = vmatpush.msra.mxu0 %v3164
    %3207 = vmatpush.msra.mxu0 %v3162
    %3208 = vmatpush.msra.mxu0 %v3160
    %3209 = vmatpush.msra.mxu0 %v3158
    %3210 = vmatpush.msra.mxu0 %v3156
    %3211 = vmatpush.msra.mxu0 %v3154
    %3212 = vmatpush.msra.mxu0 %v3152
    %3213 = vmatpush.msra.mxu0 %v3150
    %3214 = vmatpush.msra.mxu0 %v3148
    %3215 = vmatmul.f32.gmra.mxu0 %v3125
    %v3216 = vpop.f32.mrf.mxu0
    %v3217 = vadd.f32 0.0, %v3216
    %3218 = vdwg.mxu0
    %3219 = vmatpush.msra.mxu0 0.0
    %3220 = vmatpush.msra.mxu0 0.0
    %3221 = vmatpush.msra.mxu0 0.0
    %3222 = vmatpush.msra.mxu0 0.0
    %3223 = vmatpush.msra.mxu0 0.0
    %3224 = vmatpush.msra.mxu0 0.0
    %3225 = vmatpush.msra.mxu0 0.0
    %3226 = vmatpush.msra.mxu0 0.0
    %3227 = vmatpush.msra.mxu0 %v3194
    %3228 = vmatpush.msra.mxu0 %v3192
    %3229 = vmatpush.msra.mxu0 %v3190
    %3230 = vmatpush.msra.mxu0 %v3188
    %3231 = vmatpush.msra.mxu0 %v3186
    %3232 = vmatpush.msra.mxu0 %v3184
    %3233 = vmatpush.msra.mxu0 %v3182
    %3234 = vmatpush.msra.mxu0 %v3180
    %3235 = vmatmul.f32.gmra.mxu0 %v3197
    %v3236 = vpop.f32.mrf.mxu0
    %v3237 = vadd.f32 %v3217, %v3236
    %3238 = vdwg.mxu0
    %3239 = vmatpush.msra.mxu0 %v3179
    %3240 = vmatpush.msra.mxu0 %v3177
    %3241 = vmatpush.msra.mxu0 %v3175
    %3242 = vmatpush.msra.mxu0 %v3173
    %3243 = vmatpush.msra.mxu0 %v3171
    %3244 = vmatpush.msra.mxu0 %v3169
    %3245 = vmatpush.msra.mxu0 %v3167
    %3246 = vmatpush.msra.mxu0 %v3165
    %3247 = vmatpush.msra.mxu0 %v3163
    %3248 = vmatpush.msra.mxu0 %v3161
    %3249 = vmatpush.msra.mxu0 %v3159
    %3250 = vmatpush.msra.mxu0 %v3157
    %3251 = vmatpush.msra.mxu0 %v3155
    %3252 = vmatpush.msra.mxu0 %v3153
    %3253 = vmatpush.msra.mxu0 %v3151
    %3254 = vmatpush.msra.mxu0 %v3149
    %3255 = vmatmul.f32.gmra.mxu0 %v3125
    %v3256 = vpop.f32.mrf.mxu0
    %v3257 = vadd.f32 0.0, %v3256
    %3258 = vdwg.mxu0
    %3259 = vmatpush.msra.mxu0 0.0
    %3260 = vmatpush.msra.mxu0 0.0
    %3261 = vmatpush.msra.mxu0 0.0
    %3262 = vmatpush.msra.mxu0 0.0
    %3263 = vmatpush.msra.mxu0 0.0
    %3264 = vmatpush.msra.mxu0 0.0
    %3265 = vmatpush.msra.mxu0 0.0
    %3266 = vmatpush.msra.mxu0 0.0
    %3267 = vmatpush.msra.mxu0 %v3195
    %3268 = vmatpush.msra.mxu0 %v3193
    %3269 = vmatpush.msra.mxu0 %v3191
    %3270 = vmatpush.msra.mxu0 %v3189
    %3271 = vmatpush.msra.mxu0 %v3187
    %3272 = vmatpush.msra.mxu0 %v3185
    %3273 = vmatpush.msra.mxu0 %v3183
    %3274 = vmatpush.msra.mxu0 %v3181
    %3275 = vmatmul.f32.gmra.mxu0 %v3197
    %v3276 = vpop.f32.mrf.mxu0
    %v3277 = vadd.f32 %v3257, %v3276
    %3278 = vdwg.mxu0
    %v3279 = vadd.f32 %v2912, %v3237
    %v3280 = vadd.f32 %v2913, %v3277
    %s3281 = scalar_lea.vmem [#allocation9], 2688
    %v3282 = vld [vmem:[%s3281] sm:$0xff]
    %v3283 = vld [vmem:[%s3281 + $0x8] sm:$0xff]
    %v3284 = vld [vmem:[%s3281 + $0x10] sm:$0xff]
    %v3285 = vld [vmem:[%s3281 + $0x18] sm:$0xff]
    %v3286 = vld [vmem:[%s3281 + $0x20] sm:$0xff]
    %v3287 = vld [vmem:[%s3281 + $0x28] sm:$0xff]
    %v3288 = vld [vmem:[%s3281 + $0x30] sm:$0xff]
    %v3289 = vld [vmem:[%s3281 + $0x38] sm:$0xff]
    %v3290 = vld [vmem:[%s3281 + $0x40] sm:$0xff]
    %v3291 = vld [vmem:[%s3281 + $0x48] sm:$0xff]
    %v3292 = vld [vmem:[%s3281 + $0x50] sm:$0xff]
    %v3293 = vld [vmem:[%s3281 + $0x58] sm:$0xff]
    %v3294 = vld [vmem:[%s3281 + $0x60] sm:$0xff]
    %v3295 = vld [vmem:[%s3281 + $0x68] sm:$0xff]
    %v3296 = vld [vmem:[%s3281 + $0x70] sm:$0xff]
    %v3297 = vld [vmem:[%s3281 + $0x78] sm:$0xff]
    %v3298 = vld [vmem:[%s3281 + $0x80] sm:$0xff]
    %v3299 = vld [vmem:[%s3281 + $0x88] sm:$0xff]
    %v3300 = vld [vmem:[%s3281 + $0x90] sm:$0xff]
    %v3301 = vld [vmem:[%s3281 + $0x98] sm:$0xff]
    %v3302 = vld [vmem:[%s3281 + $0xa0] sm:$0xff]
    %v3303 = vld [vmem:[%s3281 + $0xa8] sm:$0xff]
    %v3304 = vld [vmem:[%s3281 + $0xb0] sm:$0xff]
    %v3305 = vld [vmem:[%s3281 + $0xb8] sm:$0xff]
    %v3306 = vld [vmem:[%s3281 + $0xc0] sm:$0xff]
    %v3307 = vld [vmem:[%s3281 + $0xc8] sm:$0xff]
    %v3308 = vld [vmem:[%s3281 + $0xd0] sm:$0xff]
    %v3309 = vld [vmem:[%s3281 + $0xd8] sm:$0xff]
    %v3310 = vld [vmem:[%s3281 + $0xe0] sm:$0xff]
    %v3311 = vld [vmem:[%s3281 + $0xe8] sm:$0xff]
    %v3312 = vld [vmem:[%s3281 + $0xf0] sm:$0xff]
    %v3313 = vld [vmem:[%s3281 + $0xf8] sm:$0xff]
    %v3314 = vld [vmem:[%s3281 + $0x100] sm:$0xff]
    %v3315 = vld [vmem:[%s3281 + $0x108] sm:$0xff]
    %v3316 = vld [vmem:[%s3281 + $0x110] sm:$0xff]
    %v3317 = vld [vmem:[%s3281 + $0x118] sm:$0xff]
    %v3318 = vld [vmem:[%s3281 + $0x120] sm:$0xff]
    %v3319 = vld [vmem:[%s3281 + $0x128] sm:$0xff]
    %v3320 = vld [vmem:[%s3281 + $0x130] sm:$0xff]
    %v3321 = vld [vmem:[%s3281 + $0x138] sm:$0xff]
    %v3322 = vld [vmem:[%s3281 + $0x140] sm:$0xff]
    %v3323 = vld [vmem:[%s3281 + $0x148] sm:$0xff]
    %v3324 = vld [vmem:[%s3281 + $0x150] sm:$0xff]
    %v3325 = vld [vmem:[%s3281 + $0x158] sm:$0xff]
    %v3326 = vld [vmem:[%s3281 + $0x160] sm:$0xff]
    %v3327 = vld [vmem:[%s3281 + $0x168] sm:$0xff]
    %v3328 = vld [vmem:[%s3281 + $0x170] sm:$0xff]
    %v3329 = vld [vmem:[%s3281 + $0x178] sm:$0xff]
    %s3330 = scalar_lea.vmem [#allocation10], 14
    %v3331 = vld [vmem:[%s3330] sm:$0x3]
    %v3333 = vperm.slane %v3331, 0
    %v3334 = vperm.slane %v3331, 1
    %3337 = vmatpush.msra.mxu0 %v3312
    %3338 = vmatpush.msra.mxu0 %v3310
    %3339 = vmatpush.msra.mxu0 %v3308
    %3340 = vmatpush.msra.mxu0 %v3306
    %3341 = vmatpush.msra.mxu0 %v3304
    %3342 = vmatpush.msra.mxu0 %v3302
    %3343 = vmatpush.msra.mxu0 %v3300
    %3344 = vmatpush.msra.mxu0 %v3298
    %3345 = vmatpush.msra.mxu0 %v3296
    %3346 = vmatpush.msra.mxu0 %v3294
    %3347 = vmatpush.msra.mxu0 %v3292
    %3348 = vmatpush.msra.mxu0 %v3290
    %3349 = vmatpush.msra.mxu0 %v3288
    %3350 = vmatpush.msra.mxu0 %v3286
    %3351 = vmatpush.msra.mxu0 %v3284
    %3352 = vmatpush.msra.mxu0 %v3282
    %3353 = vmatmul.f32.gmra.mxu0 %v264
    %v3354 = vpop.f32.mrf.mxu0
    %v3355 = vadd.f32 %v3333, %v3354
    %3356 = vdwg.mxu0
    %3357 = vmatpush.msra.mxu0 0.0
    %3358 = vmatpush.msra.mxu0 0.0
    %3359 = vmatpush.msra.mxu0 0.0
    %3360 = vmatpush.msra.mxu0 0.0
    %3361 = vmatpush.msra.mxu0 0.0
    %3362 = vmatpush.msra.mxu0 0.0
    %3363 = vmatpush.msra.mxu0 0.0
    %3364 = vmatpush.msra.mxu0 0.0
    %3365 = vmatpush.msra.mxu0 %v3328
    %3366 = vmatpush.msra.mxu0 %v3326
    %3367 = vmatpush.msra.mxu0 %v3324
    %3368 = vmatpush.msra.mxu0 %v3322
    %3369 = vmatpush.msra.mxu0 %v3320
    %3370 = vmatpush.msra.mxu0 %v3318
    %3371 = vmatpush.msra.mxu0 %v3316
    %3372 = vmatpush.msra.mxu0 %v3314
    %3373 = vmatmul.f32.gmra.mxu0 %v766
    %v3374 = vpop.f32.mrf.mxu0
    %v3375 = vadd.f32 %v3355, %v3374
    %3376 = vdwg.mxu0
    %3377 = vmatpush.msra.mxu0 %v3313
    %3378 = vmatpush.msra.mxu0 %v3311
    %3379 = vmatpush.msra.mxu0 %v3309
    %3380 = vmatpush.msra.mxu0 %v3307
    %3381 = vmatpush.msra.mxu0 %v3305
    %3382 = vmatpush.msra.mxu0 %v3303
    %3383 = vmatpush.msra.mxu0 %v3301
    %3384 = vmatpush.msra.mxu0 %v3299
    %3385 = vmatpush.msra.mxu0 %v3297
    %3386 = vmatpush.msra.mxu0 %v3295
    %3387 = vmatpush.msra.mxu0 %v3293
    %3388 = vmatpush.msra.mxu0 %v3291
    %3389 = vmatpush.msra.mxu0 %v3289
    %3390 = vmatpush.msra.mxu0 %v3287
    %3391 = vmatpush.msra.mxu0 %v3285
    %3392 = vmatpush.msra.mxu0 %v3283
    %3393 = vmatmul.f32.gmra.mxu0 %v264
    %v3394 = vpop.f32.mrf.mxu0
    %v3395 = vadd.f32 %v3334, %v3394
    %3396 = vdwg.mxu0
    %3397 = vmatpush.msra.mxu0 0.0
    %3398 = vmatpush.msra.mxu0 0.0
    %3399 = vmatpush.msra.mxu0 0.0
    %3400 = vmatpush.msra.mxu0 0.0
    %3401 = vmatpush.msra.mxu0 0.0
    %3402 = vmatpush.msra.mxu0 0.0
    %3403 = vmatpush.msra.mxu0 0.0
    %3404 = vmatpush.msra.mxu0 0.0
    %3405 = vmatpush.msra.mxu0 %v3329
    %3406 = vmatpush.msra.mxu0 %v3327
    %3407 = vmatpush.msra.mxu0 %v3325
    %3408 = vmatpush.msra.mxu0 %v3323
    %3409 = vmatpush.msra.mxu0 %v3321
    %3410 = vmatpush.msra.mxu0 %v3319
    %3411 = vmatpush.msra.mxu0 %v3317
    %3412 = vmatpush.msra.mxu0 %v3315
    %3413 = vmatmul.f32.gmra.mxu0 %v766
    %v3414 = vpop.f32.mrf.mxu0
    %v3415 = vadd.f32 %v3395, %v3414
    %3416 = vdwg.mxu0
    %v3418 = vsel %vm764, %v3415, 0
    %3420 = vmatpush.xpose.msra.mxu0 0.0
    %3421 = vmatpush.xpose.msra.mxu0 0.0
    %3422 = vmatpush.xpose.msra.mxu0 0.0
    %3423 = vmatpush.xpose.msra.mxu0 0.0
    %3424 = vmatpush.xpose.msra.mxu0 0.0
    %3425 = vmatpush.xpose.msra.mxu0 0.0
    %3426 = vmatpush.xpose.msra.mxu0 0.0
    %3427 = vmatpush.xpose.msra.mxu0 0.0
    %3428 = vmatpush.xpose.msra.mxu0 0.0
    %3429 = vmatpush.xpose.msra.mxu0 0.0
    %3430 = vmatpush.xpose.msra.mxu0 0.0
    %3431 = vmatpush.xpose.msra.mxu0 0.0
    %3432 = vmatpush.xpose.msra.mxu0 0.0
    %3433 = vmatpush.xpose.msra.mxu0 0.0
    %3434 = vmatpush.xpose.msra.mxu0 0.0
    %3435 = vmatpush.xpose.msra.mxu0 %v264
    %3436 = vmatmul.f32.gmra.mxu0 %v3375
    %v3437 = vpop.f32.mrf.mxu0
    %v3438 = vadd.f32 0.0, %v3437
    %3439 = vdwg.mxu0
    %3440 = vmatpush.xpose.msra.mxu0 0.0
    %3441 = vmatpush.xpose.msra.mxu0 0.0
    %3442 = vmatpush.xpose.msra.mxu0 0.0
    %3443 = vmatpush.xpose.msra.mxu0 0.0
    %3444 = vmatpush.xpose.msra.mxu0 0.0
    %3445 = vmatpush.xpose.msra.mxu0 0.0
    %3446 = vmatpush.xpose.msra.mxu0 0.0
    %3447 = vmatpush.xpose.msra.mxu0 0.0
    %3448 = vmatpush.xpose.msra.mxu0 0.0
    %3449 = vmatpush.xpose.msra.mxu0 0.0
    %3450 = vmatpush.xpose.msra.mxu0 0.0
    %3451 = vmatpush.xpose.msra.mxu0 0.0
    %3452 = vmatpush.xpose.msra.mxu0 0.0
    %3453 = vmatpush.xpose.msra.mxu0 0.0
    %3454 = vmatpush.xpose.msra.mxu0 0.0
    %3455 = vmatpush.xpose.msra.mxu0 %v766
    %3456 = vmatmul.f32.gmra.mxu0 %v3418
    %v3457 = vpop.f32.mrf.mxu0
    %v3458 = vadd.f32 %v3438, %v3457
    %3459 = vdwg.mxu0
    %v3460 = vsel %vm891, %v3458, -inf
    %3461 = vmax.xlane.f32.xlu0 %v3460
    %v3462 = vpop.xlane.xlu0 %3461
    %v3463 = vsub.f32 %v3458, %v3462
    %v3464 = vmul.f32 %v3463, 1.442695
    %v3465 = vpow.pop %v3464
    %v3466 = vsel %vm891, %v3465, 0.0
    %3467 = vadd.xlane.f32.xlu0 %v3466
    %v3468 = vpop.xlane.xlu0 %3467
    %v3469 = vrcp.pop %v3468
    %v3470 = vmul.f32 %v3465, %v3469
    %v3472 = vsel %vm891, %v3470, 0
    %3474 = vmatpush.msra.mxu0 0.0
    %3475 = vmatpush.msra.mxu0 0.0
    %3476 = vmatpush.msra.mxu0 0.0
    %3477 = vmatpush.msra.mxu0 0.0
    %3478 = vmatpush.msra.mxu0 0.0
    %3479 = vmatpush.msra.mxu0 0.0
    %3480 = vmatpush.msra.mxu0 0.0
    %3481 = vmatpush.msra.mxu0 0.0
    %3482 = vmatpush.msra.mxu0 0.0
    %3483 = vmatpush.msra.mxu0 0.0
    %3484 = vmatpush.msra.mxu0 0.0
    %3485 = vmatpush.msra.mxu0 0.0
    %3486 = vmatpush.msra.mxu0 0.0
    %3487 = vmatpush.msra.mxu0 0.0
    %3488 = vmatpush.msra.mxu0 0.0
    %3489 = vmatpush.msra.mxu0 %v264
    %3490 = vmatmul.f32.gmra.mxu0 %v3472
    %v3491 = vpop.f32.mrf.mxu0
    %v3492 = vadd.f32 0.0, %v3491
    %3493 = vdwg.mxu0
    %3494 = vmatpush.msra.mxu0 0.0
    %3495 = vmatpush.msra.mxu0 0.0
    %3496 = vmatpush.msra.mxu0 0.0
    %3497 = vmatpush.msra.mxu0 0.0
    %3498 = vmatpush.msra.mxu0 0.0
    %3499 = vmatpush.msra.mxu0 0.0
    %3500 = vmatpush.msra.mxu0 0.0
    %3501 = vmatpush.msra.mxu0 0.0
    %3502 = vmatpush.msra.mxu0 0.0
    %3503 = vmatpush.msra.mxu0 0.0
    %3504 = vmatpush.msra.mxu0 0.0
    %3505 = vmatpush.msra.mxu0 0.0
    %3506 = vmatpush.msra.mxu0 0.0
    %3507 = vmatpush.msra.mxu0 0.0
    %3508 = vmatpush.msra.mxu0 0.0
    %3509 = vmatpush.msra.mxu0 %v265
    %3510 = vmatmul.f32.gmra.mxu0 %v3472
    %v3511 = vpop.f32.mrf.mxu0
    %v3512 = vadd.f32 0.0, %v3511
    %3513 = vdwg.mxu0
    %s3514 = scalar_lea.vmem [#allocation12], 2688
    %v3515 = vld [vmem:[%s3514] sm:$0xff]
    %v3516 = vld [vmem:[%s3514 + $0x8] sm:$0xff]
    %v3517 = vld [vmem:[%s3514 + $0x10] sm:$0xff]
    %v3518 = vld [vmem:[%s3514 + $0x18] sm:$0xff]
    %v3519 = vld [vmem:[%s3514 + $0x20] sm:$0xff]
    %v3520 = vld [vmem:[%s3514 + $0x28] sm:$0xff]
    %v3521 = vld [vmem:[%s3514 + $0x30] sm:$0xff]
    %v3522 = vld [vmem:[%s3514 + $0x38] sm:$0xff]
    %v3523 = vld [vmem:[%s3514 + $0x40] sm:$0xff]
    %v3524 = vld [vmem:[%s3514 + $0x48] sm:$0xff]
    %v3525 = vld [vmem:[%s3514 + $0x50] sm:$0xff]
    %v3526 = vld [vmem:[%s3514 + $0x58] sm:$0xff]
    %v3527 = vld [vmem:[%s3514 + $0x60] sm:$0xff]
    %v3528 = vld [vmem:[%s3514 + $0x68] sm:$0xff]
    %v3529 = vld [vmem:[%s3514 + $0x70] sm:$0xff]
    %v3530 = vld [vmem:[%s3514 + $0x78] sm:$0xff]
    %v3531 = vld [vmem:[%s3514 + $0x80] sm:$0xff]
    %v3532 = vld [vmem:[%s3514 + $0x88] sm:$0xff]
    %v3533 = vld [vmem:[%s3514 + $0x90] sm:$0xff]
    %v3534 = vld [vmem:[%s3514 + $0x98] sm:$0xff]
    %v3535 = vld [vmem:[%s3514 + $0xa0] sm:$0xff]
    %v3536 = vld [vmem:[%s3514 + $0xa8] sm:$0xff]
    %v3537 = vld [vmem:[%s3514 + $0xb0] sm:$0xff]
    %v3538 = vld [vmem:[%s3514 + $0xb8] sm:$0xff]
    %v3539 = vld [vmem:[%s3514 + $0xc0] sm:$0xff]
    %v3540 = vld [vmem:[%s3514 + $0xc8] sm:$0xff]
    %v3541 = vld [vmem:[%s3514 + $0xd0] sm:$0xff]
    %v3542 = vld [vmem:[%s3514 + $0xd8] sm:$0xff]
    %v3543 = vld [vmem:[%s3514 + $0xe0] sm:$0xff]
    %v3544 = vld [vmem:[%s3514 + $0xe8] sm:$0xff]
    %v3545 = vld [vmem:[%s3514 + $0xf0] sm:$0xff]
    %v3546 = vld [vmem:[%s3514 + $0xf8] sm:$0xff]
    %v3547 = vld [vmem:[%s3514 + $0x100] sm:$0xff]
    %v3548 = vld [vmem:[%s3514 + $0x108] sm:$0xff]
    %v3549 = vld [vmem:[%s3514 + $0x110] sm:$0xff]
    %v3550 = vld [vmem:[%s3514 + $0x118] sm:$0xff]
    %v3551 = vld [vmem:[%s3514 + $0x120] sm:$0xff]
    %v3552 = vld [vmem:[%s3514 + $0x128] sm:$0xff]
    %v3553 = vld [vmem:[%s3514 + $0x130] sm:$0xff]
    %v3554 = vld [vmem:[%s3514 + $0x138] sm:$0xff]
    %v3555 = vld [vmem:[%s3514 + $0x140] sm:$0xff]
    %v3556 = vld [vmem:[%s3514 + $0x148] sm:$0xff]
    %v3557 = vld [vmem:[%s3514 + $0x150] sm:$0xff]
    %v3558 = vld [vmem:[%s3514 + $0x158] sm:$0xff]
    %v3559 = vld [vmem:[%s3514 + $0x160] sm:$0xff]
    %v3560 = vld [vmem:[%s3514 + $0x168] sm:$0xff]
    %v3561 = vld [vmem:[%s3514 + $0x170] sm:$0xff]
    %v3562 = vld [vmem:[%s3514 + $0x178] sm:$0xff]
    %v3564 = vsel %vm764, %v3512, 0
    %3566 = vmatpush.msra.mxu0 %v3545
    %3567 = vmatpush.msra.mxu0 %v3543
    %3568 = vmatpush.msra.mxu0 %v3541
    %3569 = vmatpush.msra.mxu0 %v3539
    %3570 = vmatpush.msra.mxu0 %v3537
    %3571 = vmatpush.msra.mxu0 %v3535
    %3572 = vmatpush.msra.mxu0 %v3533
    %3573 = vmatpush.msra.mxu0 %v3531
    %3574 = vmatpush.msra.mxu0 %v3529
    %3575 = vmatpush.msra.mxu0 %v3527
    %3576 = vmatpush.msra.mxu0 %v3525
    %3577 = vmatpush.msra.mxu0 %v3523
    %3578 = vmatpush.msra.mxu0 %v3521
    %3579 = vmatpush.msra.mxu0 %v3519
    %3580 = vmatpush.msra.mxu0 %v3517
    %3581 = vmatpush.msra.mxu0 %v3515
    %3582 = vmatmul.f32.gmra.mxu0 %v3492
    %v3583 = vpop.f32.mrf.mxu0
    %v3584 = vadd.f32 0.0, %v3583
    %3585 = vdwg.mxu0
    %3586 = vmatpush.msra.mxu0 0.0
    %3587 = vmatpush.msra.mxu0 0.0
    %3588 = vmatpush.msra.mxu0 0.0
    %3589 = vmatpush.msra.mxu0 0.0
    %3590 = vmatpush.msra.mxu0 0.0
    %3591 = vmatpush.msra.mxu0 0.0
    %3592 = vmatpush.msra.mxu0 0.0
    %3593 = vmatpush.msra.mxu0 0.0
    %3594 = vmatpush.msra.mxu0 %v3561
    %3595 = vmatpush.msra.mxu0 %v3559
    %3596 = vmatpush.msra.mxu0 %v3557
    %3597 = vmatpush.msra.mxu0 %v3555
    %3598 = vmatpush.msra.mxu0 %v3553
    %3599 = vmatpush.msra.mxu0 %v3551
    %3600 = vmatpush.msra.mxu0 %v3549
    %3601 = vmatpush.msra.mxu0 %v3547
    %3602 = vmatmul.f32.gmra.mxu0 %v3564
    %v3603 = vpop.f32.mrf.mxu0
    %v3604 = vadd.f32 %v3584, %v3603
    %3605 = vdwg.mxu0
    %3606 = vmatpush.msra.mxu0 %v3546
    %3607 = vmatpush.msra.mxu0 %v3544
    %3608 = vmatpush.msra.mxu0 %v3542
    %3609 = vmatpush.msra.mxu0 %v3540
    %3610 = vmatpush.msra.mxu0 %v3538
    %3611 = vmatpush.msra.mxu0 %v3536
    %3612 = vmatpush.msra.mxu0 %v3534
    %3613 = vmatpush.msra.mxu0 %v3532
    %3614 = vmatpush.msra.mxu0 %v3530
    %3615 = vmatpush.msra.mxu0 %v3528
    %3616 = vmatpush.msra.mxu0 %v3526
    %3617 = vmatpush.msra.mxu0 %v3524
    %3618 = vmatpush.msra.mxu0 %v3522
    %3619 = vmatpush.msra.mxu0 %v3520
    %3620 = vmatpush.msra.mxu0 %v3518
    %3621 = vmatpush.msra.mxu0 %v3516
    %3622 = vmatmul.f32.gmra.mxu0 %v3492
    %v3623 = vpop.f32.mrf.mxu0
    %v3624 = vadd.f32 0.0, %v3623
    %3625 = vdwg.mxu0
    %3626 = vmatpush.msra.mxu0 0.0
    %3627 = vmatpush.msra.mxu0 0.0
    %3628 = vmatpush.msra.mxu0 0.0
    %3629 = vmatpush.msra.mxu0 0.0
    %3630 = vmatpush.msra.mxu0 0.0
    %3631 = vmatpush.msra.mxu0 0.0
    %3632 = vmatpush.msra.mxu0 0.0
    %3633 = vmatpush.msra.mxu0 0.0
    %3634 = vmatpush.msra.mxu0 %v3562
    %3635 = vmatpush.msra.mxu0 %v3560
    %3636 = vmatpush.msra.mxu0 %v3558
    %3637 = vmatpush.msra.mxu0 %v3556
    %3638 = vmatpush.msra.mxu0 %v3554
    %3639 = vmatpush.msra.mxu0 %v3552
    %3640 = vmatpush.msra.mxu0 %v3550
    %3641 = vmatpush.msra.mxu0 %v3548
    %3642 = vmatmul.f32.gmra.mxu0 %v3564
    %v3643 = vpop.f32.mrf.mxu0
    %v3644 = vadd.f32 %v3624, %v3643
    %3645 = vdwg.mxu0
    %v3646 = vadd.f32 %v3279, %v3604
    %v3647 = vadd.f32 %v3280, %v3644
    %v3648 = vmax.f32 %v3646, 0.0
    %v3649 = vmax.f32 %v3647, 0.0
    %v3650 = vld [vmem:[#allocation16 + $0x5] sm:$0x3]
    %v3651 = vld [vmem:[#allocation16 + $0x7] sm:$0x3]
    %v3652 = vadd.f32 %v3648, %v3649
    %3653 = vadd.xlane.f32.xlu0 %v3652
    %v3654 = vpop.xlane.xlu0 %3653
    %v3655 = vrcp.pop 256.0
    %v3656 = vmul.f32 256.0, %v3655
    %v3657 = vsub.f32 1.0, %v3656
    %v3658 = vmul.f32 %v3655, %v3657
    %v3659 = vadd.f32 %v3655, %v3658
    %vm3660 = vweird.f32 %v3655
    %v3661 = vsel %vm3660, %v3655, %v3659
    %v3662 = vmul.f32 %v3654, %v3661
    %v3663 = vsub.f32 %v3648, %v3662
    %v3664 = vsub.f32 %v3649, %v3662
    %v3665 = vmul.f32 %v3663, %v3663
    %v3666 = vmul.f32 %v3664, %v3664
    %v3667 = vadd.f32 %v3665, %v3666
    %3668 = vadd.xlane.f32.xlu0 %v3667
    %v3669 = vpop.xlane.xlu0 %3668
    %v3670 = vmul.f32 %v3669, %v3661
    %v3671 = vadd.f32 %v3670, 1e-05
    %v3672 = vrsqrt.pop %v3671
    %v3673 = vmul.f32 %v3672, %v3671
    %v3674 = vmul.f32 %v3673, %v3672
    %v3675 = vmul.f32 0.5, %v3674
    %v3676 = vsub.f32 1.5, %v3675
    %v3677 = vmul.f32 %v3672, %v3676
    %vm3678 = vweird.f32 %v3671
    %vm3679 = vweird.f32 %v3672
    %vm3680 = vmor %vm3678, %vm3679
    %v3681 = vsel %vm3680, %v3672, %v3677
    %v3682 = vmul.f32 %v3663, %v3681
    %v3683 = vmul.f32 %v3664, %v3681
    %v3685 = vperm.slane %v3650, 0
    %v3686 = vperm.slane %v3650, 1
    %v3689 = vmul.f32 %v3682, %v3685
    %v3690 = vmul.f32 %v3683, %v3686
    %v3692 = vperm.slane %v3651, 0
    %v3693 = vperm.slane %v3651, 1
    %v3696 = vadd.f32 %v3689, %v3692
    %v3697 = vadd.f32 %v3690, %v3693
    %v3698 = vld [vmem:[#allocation15] sm:$0xff]
    %v3699 = vld [vmem:[#allocation15 + $0x8] sm:$0xff]
    %v3700 = vld [vmem:[#allocation15 + $0x10] sm:$0xff]
    %v3701 = vld [vmem:[#allocation15 + $0x18] sm:$0xff]
    %v3702 = vld [vmem:[#allocation15 + $0x20] sm:$0xff]
    %v3703 = vld [vmem:[#allocation15 + $0x28] sm:$0xff]
    %v3704 = vld [vmem:[#allocation15 + $0x30] sm:$0xff]
    %v3705 = vld [vmem:[#allocation15 + $0x38] sm:$0xff]
    %v3706 = vld [vmem:[#allocation15 + $0x40] sm:$0xff]
    %v3707 = vld [vmem:[#allocation15 + $0x48] sm:$0xff]
    %v3708 = vld [vmem:[#allocation15 + $0x50] sm:$0xff]
    %v3709 = vld [vmem:[#allocation15 + $0x58] sm:$0xff]
    %v3710 = vld [vmem:[#allocation15 + $0x60] sm:$0xff]
    %v3711 = vld [vmem:[#allocation15 + $0x68] sm:$0xff]
    %v3712 = vld [vmem:[#allocation15 + $0x70] sm:$0xff]
    %v3713 = vld [vmem:[#allocation15 + $0x78] sm:$0xff]
    %v3714 = vld [vmem:[#allocation15 + $0x80] sm:$0xff]
    %v3715 = vld [vmem:[#allocation15 + $0x88] sm:$0xff]
    %v3716 = vld [vmem:[#allocation15 + $0x90] sm:$0xff]
    %v3717 = vld [vmem:[#allocation15 + $0x98] sm:$0xff]
    %v3718 = vld [vmem:[#allocation15 + $0xa0] sm:$0xff]
    %v3719 = vld [vmem:[#allocation15 + $0xa8] sm:$0xff]
    %v3720 = vld [vmem:[#allocation15 + $0xb0] sm:$0xff]
    %v3721 = vld [vmem:[#allocation15 + $0xb8] sm:$0xff]
    %v3722 = vld [vmem:[#allocation15 + $0xc0] sm:$0xff]
    %v3723 = vld [vmem:[#allocation15 + $0xc8] sm:$0xff]
    %v3724 = vld [vmem:[#allocation15 + $0xd0] sm:$0xff]
    %v3725 = vld [vmem:[#allocation15 + $0xd8] sm:$0xff]
    %v3726 = vld [vmem:[#allocation15 + $0xe0] sm:$0xff]
    %v3727 = vld [vmem:[#allocation15 + $0xe8] sm:$0xff]
    %v3728 = vld [vmem:[#allocation15 + $0xf0] sm:$0xff]
    %v3729 = vld [vmem:[#allocation15 + $0xf8] sm:$0xff]
    %v3730 = vld [vmem:[#allocation16 + $0x9] sm:$0x1]
    %v3732 = vperm.slane %v3730, 0
    %3734 = vmatpush.msra.mxu0 %v3713
    %3735 = vmatpush.msra.mxu0 %v3712
    %3736 = vmatpush.msra.mxu0 %v3711
    %3737 = vmatpush.msra.mxu0 %v3710
    %3738 = vmatpush.msra.mxu0 %v3709
    %3739 = vmatpush.msra.mxu0 %v3708
    %3740 = vmatpush.msra.mxu0 %v3707
    %3741 = vmatpush.msra.mxu0 %v3706
    %3742 = vmatpush.msra.mxu0 %v3705
    %3743 = vmatpush.msra.mxu0 %v3704
    %3744 = vmatpush.msra.mxu0 %v3703
    %3745 = vmatpush.msra.mxu0 %v3702
    %3746 = vmatpush.msra.mxu0 %v3701
    %3747 = vmatpush.msra.mxu0 %v3700
    %3748 = vmatpush.msra.mxu0 %v3699
    %3749 = vmatpush.msra.mxu0 %v3698
    %3750 = vmatmul.f32.gmra.mxu0 %v3696
    %v3751 = vpop.f32.mrf.mxu0
    %v3752 = vadd.f32 %v3732, %v3751
    %3753 = vdwg.mxu0
    %3754 = vmatpush.msra.mxu0 %v3729
    %3755 = vmatpush.msra.mxu0 %v3728
    %3756 = vmatpush.msra.mxu0 %v3727
    %3757 = vmatpush.msra.mxu0 %v3726
    %3758 = vmatpush.msra.mxu0 %v3725
    %3759 = vmatpush.msra.mxu0 %v3724
    %3760 = vmatpush.msra.mxu0 %v3723
    %3761 = vmatpush.msra.mxu0 %v3722
    %3762 = vmatpush.msra.mxu0 %v3721
    %3763 = vmatpush.msra.mxu0 %v3720
    %3764 = vmatpush.msra.mxu0 %v3719
    %3765 = vmatpush.msra.mxu0 %v3718
    %3766 = vmatpush.msra.mxu0 %v3717
    %3767 = vmatpush.msra.mxu0 %v3716
    %3768 = vmatpush.msra.mxu0 %v3715
    %3769 = vmatpush.msra.mxu0 %v3714
    %3770 = vmatmul.f32.gmra.mxu0 %v3697
    %v3771 = vpop.f32.mrf.mxu0
    %v3772 = vadd.f32 %v3752, %v3771
    %3773 = vdwg.mxu0
    %v3774 = vmax.f32 %v3772, 0.0
    %v3775 = vld [vmem:[%s9] sm:$0xff]
    %v3776 = vld [vmem:[%s9 + $0x8] sm:$0xff]
    %v3777 = vld [vmem:[%s9 + $0x10] sm:$0xff]
    %v3778 = vld [vmem:[%s9 + $0x18] sm:$0xff]
    %v3779 = vld [vmem:[%s9 + $0x20] sm:$0xff]
    %v3780 = vld [vmem:[%s9 + $0x28] sm:$0xff]
    %v3781 = vld [vmem:[%s9 + $0x30] sm:$0xff]
    %v3782 = vld [vmem:[%s9 + $0x38] sm:$0xff]
    %v3783 = vld [vmem:[%s9 + $0x40] sm:$0xff]
    %v3784 = vld [vmem:[%s9 + $0x48] sm:$0xff]
    %v3785 = vld [vmem:[%s9 + $0x50] sm:$0xff]
    %v3786 = vld [vmem:[%s9 + $0x58] sm:$0xff]
    %v3787 = vld [vmem:[%s9 + $0x60] sm:$0xff]
    %v3788 = vld [vmem:[%s9 + $0x68] sm:$0xff]
    %v3789 = vld [vmem:[%s9 + $0x70] sm:$0xff]
    %v3790 = vld [vmem:[%s9 + $0x78] sm:$0xff]
    %v3791 = vld [vmem:[#allocation16 + $0xa] sm:$0x1]
    %v3793 = vperm.slane %v3791, 0
    %3795 = vmatpush.msra.mxu0 %v3790
    %3796 = vmatpush.msra.mxu0 %v3789
    %3797 = vmatpush.msra.mxu0 %v3788
    %3798 = vmatpush.msra.mxu0 %v3787
    %3799 = vmatpush.msra.mxu0 %v3786
    %3800 = vmatpush.msra.mxu0 %v3785
    %3801 = vmatpush.msra.mxu0 %v3784
    %3802 = vmatpush.msra.mxu0 %v3783
    %3803 = vmatpush.msra.mxu0 %v3782
    %3804 = vmatpush.msra.mxu0 %v3781
    %3805 = vmatpush.msra.mxu0 %v3780
    %3806 = vmatpush.msra.mxu0 %v3779
    %3807 = vmatpush.msra.mxu0 %v3778
    %3808 = vmatpush.msra.mxu0 %v3777
    %3809 = vmatpush.msra.mxu0 %v3776
    %3810 = vmatpush.msra.mxu0 %v3775
    %3811 = vmatmul.f32.gmra.mxu0 %v3774
    %v3812 = vpop.f32.mrf.mxu0
    %v3813 = vadd.f32 %v3793, %v3812
    %3814 = vdwg.mxu0
    %v3815 = vmax.f32 %v3813, 0.0
    %v3816 = vld [vmem:[%s10] sm:$0xff]
    %v3817 = vld [vmem:[%s10 + $0x8] sm:$0xff]
    %v3818 = vld [vmem:[%s10 + $0x10] sm:$0xff]
    %v3819 = vld [vmem:[%s10 + $0x18] sm:$0xff]
    %v3820 = vld [vmem:[%s10 + $0x20] sm:$0xff]
    %v3821 = vld [vmem:[%s10 + $0x28] sm:$0xff]
    %v3822 = vld [vmem:[%s10 + $0x30] sm:$0xff]
    %v3823 = vld [vmem:[%s10 + $0x38] sm:$0xff]
    %v3824 = vld [vmem:[#allocation16 + $0xb] sm:$0x1]
    %v3826 = vperm.slane %v3824, 0
    %v3829 = vsel %vm764, %v3815, 0
    %3831 = vmatpush.msra.mxu0 0.0
    %3832 = vmatpush.msra.mxu0 0.0
    %3833 = vmatpush.msra.mxu0 0.0
    %3834 = vmatpush.msra.mxu0 0.0
    %3835 = vmatpush.msra.mxu0 0.0
    %3836 = vmatpush.msra.mxu0 0.0
    %3837 = vmatpush.msra.mxu0 0.0
    %3838 = vmatpush.msra.mxu0 0.0
    %3839 = vmatpush.msra.mxu0 %v3823
    %3840 = vmatpush.msra.mxu0 %v3822
    %3841 = vmatpush.msra.mxu0 %v3821
    %3842 = vmatpush.msra.mxu0 %v3820
    %3843 = vmatpush.msra.mxu0 %v3819
    %3844 = vmatpush.msra.mxu0 %v3818
    %3845 = vmatpush.msra.mxu0 %v3817
    %3846 = vmatpush.msra.mxu0 %v3816
    %3847 = vmatmul.f32.gmra.mxu0 %v3829
    %v3848 = vpop.f32.mrf.mxu0
    %v3849 = vadd.f32 %v3826, %v3848
    %3850 = vdwg.mxu0
    %v3851 = vxor.u32 %v3849, 2147483648
    %v3852 = vmul.f32 %v3851, 1.442695
    %v3853 = vpow.pop %v3852
    %v3854 = vadd.f32 %v3853, 1.0
    %v3855 = vrcp.pop %v3854
    %v3856 = vmul.f32 %v3854, %v3855
    %v3857 = vsub.f32 1.0, %v3856
    %v3858 = vmul.f32 %v3855, %v3857
    %v3859 = vadd.f32 %v3855, %v3858
    %vm3860 = vweird.f32 %v3854
    %vm3861 = vweird.f32 %v3855
    %vm3862 = vmor %vm3860, %vm3861
    %v3863 = vsel %vm3862, %v3855, %v3859
    %v3864 = vand.u32 2147483647, %v3854
    %vm3865 = vcmp.eq.f32.partialorder %v3864, 8.507059e+37
    %v3866 = vand.u32 %v3854, 2147483648
    %v3867 = vor.u32 1.1754944e-38, %v3866
    %v3868 = vsel %vm3865, %v3867, %v3863
    %v3869 = vmul.f32 1.0, %v3868
    %vm3870 = vcmask 7168
    %3871 = vst.msk [vmem:[%s12] sm:$0xff] %vm3870, %v3869
    // Predicated region
    $region90: #{tpu_custom_call.1} parent=1 // pred_check
      _
    $region91: #{tpu_custom_call.1} parent=1 // pred_check_branch
      %3873 = sbr.rel (0) target = $region93
    $region92: #{tpu_custom_call.1} parent=1 // pred_region
      _
    $region93: #{tpu_custom_call.1} parent=1 // pred_fallthru
      _
    // Predicated region
    $region94: #{tpu_custom_call.1} parent=1 // pred_check
      _
    $region95: #{tpu_custom_call.1} parent=1 // pred_check_branch
      %3875 = sbr.rel (0) target = $region97
    $region96: #{tpu_custom_call.1} parent=1 // pred_region
      _
    $region97: #{tpu_custom_call.1} parent=1 // pred_fallthru
      _
    %3876 = vsyncpa [#allocation3], 1
    %3877 = vsyncpa [#allocation5], 1
    %3878 = vsyncpa [#allocation8], 1
    %3879 = vsyncpa [#allocation11], 1
    %3880 = vsyncpa [#allocation14], 1
    %3881 = vsyncpa [#allocation17], 1

</llo_original>
